<compile_context>
chip_gen: v6e
topology: v6e:2x2x1
jax: 0.10.0
libtpu: 0.0.40
codegen_flags: <defaults>
</compile_context>

<pallas_src>
import math
import functools

import numpy as np
import jax
import jax.numpy as jnp
from jax.experimental import pallas as pl
from jax.experimental.pallas import tpu as pltpu

KERNEL_SIZE = 4
STRIDE = 2
PAD = 1
NEG_SLOPE = 0.2
BN_EPS = 1e-5
LANE = 128


# ----------------------------------------------------------------------------
# Small helpers (trace-time / XLA glue)
# ----------------------------------------------------------------------------
def _rup(x, m=LANE):
    return ((x + m - 1) // m) * m


def _pad_axis(a, axis, target):
    cur = a.shape[axis]
    if cur >= target:
        return a
    widths = [(0, 0)] * a.ndim
    widths[axis] = (0, target - cur)
    return jnp.pad(a, widths)


def _im2col_nhwc(x, k, s, p):
    # x: (N, H, W, C) -> (N*OH*OW, K*K*C), rows (n, oh, ow), cols (kh, kw, c)
    n, h, w, c = x.shape
    oh = (h + 2 * p - k) // s + 1
    ow = (w + 2 * p - k) // s + 1
    xp = jnp.pad(x, ((0, 0), (p, p), (p, p), (0, 0)))
    taps = [xp[:, kh:kh + s * oh:s, kw:kw + s * ow:s, :]
            for kh in range(k) for kw in range(k)]
    patches = jnp.stack(taps, axis=3)                     # (n, oh, ow, k*k, c)
    return patches.reshape(n * oh * ow, k * k * c), oh, ow


def _tap_gather_matrices(n, ih, iw, oh, ow, k, s, p):
    # Static 0/1 matrices G[t] (M_out, M_in): row m'=(n,oh,ow) selects the input
    # row at (s*oh + kh - p, s*ow + kw - p) for tap t=(kh,kw), or zero (padding).
    m_in, m_out = n * ih * iw, n * oh * ow
    g = np.zeros((k * k, m_out, m_in), np.float32)
    for kh in range(k):
        for kw in range(k):
            t = kh * k + kw
            for b in range(n):
                for y in range(oh):
                    for x in range(ow):
                        h = s * y + kh - p
                        w = s * x + kw - p
                        if 0 <= h < ih and 0 <= w < iw:
                            g[t, b * oh * ow + y * ow + x,
                              b * ih * iw + h * iw + w] = 1.0
    return g


# ----------------------------------------------------------------------------
# In-kernel building blocks (traced inside the Pallas kernel)
# ----------------------------------------------------------------------------
def _bn_lrelu(y, gamma, beta):
    # Train-mode BatchNorm (biased variance) folded to scale/shift, + LeakyReLU.
    mean = jnp.mean(y, axis=0, keepdims=True)
    var = jnp.mean((y - mean) ** 2, axis=0, keepdims=True)
    scale = gamma * jax.lax.rsqrt(var + BN_EPS)
    shift = beta - mean * scale
    z = y * scale + shift
    return jnp.where(z >= 0.0, z, NEG_SLOPE * z)


def _conv_taps(a, g_ref, w_ref):
    # conv(k=4,s=2,p=1) on the resident activation:  sum_t G_t @ a @ W_t
    a_bf = a.astype(jnp.bfloat16)
    acc = None
    for t in range(g_ref.shape[0]):
        pt = jnp.dot(g_ref[t], a_bf, preferred_element_type=jnp.float32)
        pt = pt.astype(jnp.bfloat16)
        y = jnp.dot(pt, w_ref[t], preferred_element_type=jnp.float32)
        acc = y if acc is None else acc + y
    return acc


def _make_fused_kernel(n_layers, use_sigmoid):
    def kernel(*refs):
        o_ref = refs[-1]
        # layer 1: patches pre-built outside (input layer only), bias folded out
        y = jnp.dot(refs[0][...], refs[1][...], preferred_element_type=jnp.float32)
        a = _bn_lrelu(y, refs[2][...], refs[3][...])
        idx = 4
        # middle hidden layers: tap-gather conv + BN + LeakyReLU, all in VMEM
        for _ in range(n_layers - 2):
            g_ref, w_ref, gm_ref, bt_ref = refs[idx:idx + 4]
            idx += 4
            a = _bn_lrelu(_conv_taps(a, g_ref, w_ref), gm_ref[...], bt_ref[...])
        # final layer: conv + bias (+ sigmoid unless WGAN)
        g_ref, w_ref, b_ref = refs[idx:idx + 3]
        y = _conv_taps(a, g_ref, w_ref) + b_ref[...]
        if use_sigmoid:
            y = jax.nn.sigmoid(y)
        o_ref[...] = y
    return kernel


def _full_spec(shape):
    return pl.BlockSpec(shape, lambda i: (0,) * len(shape))


# ----------------------------------------------------------------------------
# Parameter init (deterministic, mirrors weights_init semantics)
# ----------------------------------------------------------------------------
def init_params(key, channels, ksize):
    params = []
    n_layers = len(channels) - 1
    keys = jax.random.split(key, 3 * n_layers)
    for li, (in_c, out_c) in enumerate(zip(channels[:-1], channels[1:])):
        kw_, kb_, kg_ = keys[3 * li], keys[3 * li + 1], keys[3 * li + 2]
        w = 0.02 * jax.random.normal(kw_, (out_c, in_c, ksize, ksize), jnp.float32)
        fan_in = in_c * ksize * ksize
        bound = 1.0 / math.sqrt(fan_in)   # PyTorch Conv2d default bias init
        b = jax.random.uniform(kb_, (out_c,), jnp.float32, -bound, bound)
        layer = {'w': w, 'b': b}          # hidden-layer b unused (cancelled by BN)
        if li < n_layers - 1:             # hidden layers have BatchNorm
            layer['gamma'] = 1.0 + 0.02 * jax.random.normal(kg_, (out_c,), jnp.float32)
            layer['beta'] = jnp.zeros((out_c,), jnp.float32)
        params.append(layer)
    return params


# ----------------------------------------------------------------------------
# Forward pass (single fused pallas_call)
# ----------------------------------------------------------------------------
def psgan_discriminator_forward(x, params, *, loss='DCGAN'):
    n_layers = len(params)
    assert n_layers >= 2
    n = x.shape[0]
    x_nhwc = jnp.transpose(x, (0, 2, 3, 1))          # one-time NCHW -> NHWC

    # ---- layer 1: channels-last im2col outside; K and out_c padded to 128 ----
    patches, oh, ow = _im2col_nhwc(x_nhwc, KERNEL_SIZE, STRIDE, PAD)
    k1 = patches.shape[1]
    k1p = _rup(k1)
    out_c1 = params[0]['w'].shape[0]
    c1p = _rup(out_c1)
    p1 = _pad_axis(patches, 1, k1p).astype(jnp.bfloat16)
    w1 = params[0]['w'].transpose(2, 3, 1, 0).reshape(k1, out_c1)
    w1 = _pad_axis(_pad_axis(w1, 0, k1p), 1, c1p).astype(jnp.bfloat16)
    gamma1 = _pad_axis(params[0]['gamma'].reshape(1, -1), 1, c1p).astype(jnp.float32)
    beta1 = _pad_axis(params[0]['beta'].reshape(1, -1), 1, c1p).astype(jnp.float32)

    inputs = [p1, w1, gamma1, beta1]

    prev_cp = c1p
    cur_oh, cur_ow = oh, ow
    # ---- layers 2..L: in-kernel conv via static tap-gather matrices ----
    for li in range(1, n_layers):
        layer = params[li]
        out_c, in_c = layer['w'].shape[0], layer['w'].shape[1]
        cp = _rup(out_c)
        noh = (cur_oh + 2 * PAD - KERNEL_SIZE) // STRIDE + 1
        now_ = (cur_ow + 2 * PAD - KERNEL_SIZE) // STRIDE + 1
        g = jnp.asarray(
            _tap_gather_matrices(n, cur_oh, cur_ow, noh, now_,
                                 KERNEL_SIZE, STRIDE, PAD),
            dtype=jnp.bfloat16)
        # per-tap weights: (out_c, in_c, kh, kw) -> (k*k, in_c_pad, out_c_pad)
        wt = layer['w'].transpose(2, 3, 1, 0).reshape(
            KERNEL_SIZE * KERNEL_SIZE, in_c, out_c)
        wt = _pad_axis(_pad_axis(wt, 1, prev_cp), 2, cp).astype(jnp.bfloat16)
        inputs += [g, wt]
        if li < n_layers - 1:
            inputs += [
                _pad_axis(layer['gamma'].reshape(1, -1), 1, cp).astype(jnp.float32),
                _pad_axis(layer['beta'].reshape(1, -1), 1, cp).astype(jnp.float32)]
        else:
            inputs += [_pad_axis(layer['b'].reshape(1, -1), 1, cp).astype(jnp.float32)]
        prev_cp = cp
        cur_oh, cur_ow = noh, now_

    m_out = n * cur_oh * cur_ow
    out_c_last = params[-1]['w'].shape[0]
    cp_last = _rup(out_c_last)

    kernel_fn = _make_fused_kernel(n_layers, use_sigmoid=(loss != 'WGAN'))
    out2d = pl.pallas_call(
        kernel_fn,
        out_shape=jax.ShapeDtypeStruct((m_out, cp_last), jnp.float32),
        grid=(1,),
        in_specs=[_full_spec(a.shape) for a in inputs],
        out_specs=_full_spec((m_out, cp_last)),
        compiler_params=pltpu.CompilerParams(
            dimension_semantics=("arbitrary",)),
    )(*inputs)

    # slice off channel padding, restore NCHW order, then x.view(N, -1)
    y = out2d[:, :out_c_last].reshape(n, cur_oh, cur_ow, out_c_last)
    y = jnp.transpose(y, (0, 3, 1, 2))
    return y.reshape(n, -1)


if __name__ == "__main__":
    # opt-equivalent config (small):
    #   dis_conv_channels = [4, 16, 32, 1], kernel_size = 4, loss = 'DCGAN'
    dis_conv_channels = [4, 16, 32, 1]
    loss = 'DCGAN'

    key = jax.random.PRNGKey(0)
    k_params, k_x = jax.random.split(key)
    params = init_params(k_params, dis_conv_channels, KERNEL_SIZE)

    x = jax.random.normal(k_x, (2, 4, 16, 16), jnp.float32)   # NCHW input

    fwd = jax.jit(functools.partial(psgan_discriminator_forward, loss=loss))
    out = fwd(x, params)
    out = jax.block_until_ready(out)

    assert out.shape == (2, 4), out.shape        # 16 -> 8 -> 4 -> 2 spatial, 1 ch
    assert bool(jnp.all(jnp.isfinite(out)))
    print("KERNEL_OK")
</pallas_src>

<mosaic_0001>
module attributes {stable_mosaic.version = 11 : i64} {
  func.func @kernel(%arg0: i32, %arg1: memref<128x128xbf16, #tpu.memory_space<vmem>>, %arg2: memref<128x128xbf16, #tpu.memory_space<vmem>>, %arg3: memref<1x128xf32, #tpu.memory_space<vmem>>, %arg4: memref<1x128xf32, #tpu.memory_space<vmem>>, %arg5: memref<16x32x128xbf16, #tpu.memory_space<vmem>>, %arg6: memref<16x128x128xbf16, #tpu.memory_space<vmem>>, %arg7: memref<1x128xf32, #tpu.memory_space<vmem>>, %arg8: memref<1x128xf32, #tpu.memory_space<vmem>>, %arg9: memref<16x8x32xbf16, #tpu.memory_space<vmem>>, %arg10: memref<16x128x128xbf16, #tpu.memory_space<vmem>>, %arg11: memref<1x128xf32, #tpu.memory_space<vmem>>, %arg12: memref<8x128xf32, #tpu.memory_space<vmem>>) attributes {dimension_semantics = [#tpu.dimension_semantics<arbitrary>], iteration_bounds = array<i64: 1>, scalar_prefetch = 0 : i64, scratch_operands = 0 : i64, tpu.core_type = #tpu.core_type<tc>, window_params = [{pipeline_mode = #tpu.pipeline_mode<synchronous>, transform_indices = @transform_0, window_bounds = array<i64: 128, 128>}, {pipeline_mode = #tpu.pipeline_mode<synchronous>, transform_indices = @transform_1, window_bounds = array<i64: 128, 128>}, {pipeline_mode = #tpu.pipeline_mode<synchronous>, transform_indices = @transform_2, window_bounds = array<i64: 1, 128>}, {pipeline_mode = #tpu.pipeline_mode<synchronous>, transform_indices = @transform_3, window_bounds = array<i64: 1, 128>}, {pipeline_mode = #tpu.pipeline_mode<synchronous>, transform_indices = @transform_4, window_bounds = array<i64: 16, 32, 128>}, {pipeline_mode = #tpu.pipeline_mode<synchronous>, transform_indices = @transform_5, window_bounds = array<i64: 16, 128, 128>}, {pipeline_mode = #tpu.pipeline_mode<synchronous>, transform_indices = @transform_6, window_bounds = array<i64: 1, 128>}, {pipeline_mode = #tpu.pipeline_mode<synchronous>, transform_indices = @transform_7, window_bounds = array<i64: 1, 128>}, {pipeline_mode = #tpu.pipeline_mode<synchronous>, transform_indices = @transform_8, window_bounds = array<i64: 16, 8, 32>}, {pipeline_mode = #tpu.pipeline_mode<synchronous>, transform_indices = @transform_9, window_bounds = array<i64: 16, 128, 128>}, {pipeline_mode = #tpu.pipeline_mode<synchronous>, transform_indices = @transform_10, window_bounds = array<i64: 1, 128>}, {pipeline_mode = #tpu.pipeline_mode<synchronous>, transform_indices = @transform_11, window_bounds = array<i64: 8, 128>}]} {
    %c0 = arith.constant 0 : index
    %c0_0 = arith.constant 0 : index
    %0 = vector.load %arg1[%c0, %c0_0] : memref<128x128xbf16, #tpu.memory_space<vmem>>, vector<128x128xbf16>
    %c0_1 = arith.constant 0 : index
    %c0_2 = arith.constant 0 : index
    %1 = vector.load %arg2[%c0_1, %c0_2] : memref<128x128xbf16, #tpu.memory_space<vmem>>, vector<128x128xbf16>
    %cst = arith.constant dense<0.000000e+00> : vector<128x128xf32>
    %2 = tpu.matmul %0, %1, %cst {dimension_numbers = #tpu.dot_dimension_numbers<[1], [0], [0], [1], [0, 0, 1, 1], [], []>} : vector<128x128xbf16>, vector<128x128xbf16>, vector<128x128xf32> -> vector<128x128xf32>
    %c0_3 = arith.constant 0 : index
    %c0_4 = arith.constant 0 : index
    %3 = vector.load %arg3[%c0_3, %c0_4] : memref<1x128xf32, #tpu.memory_space<vmem>>, vector<1x128xf32>
    %c0_5 = arith.constant 0 : index
    %c0_6 = arith.constant 0 : index
    %4 = vector.load %arg4[%c0_5, %c0_6] : memref<1x128xf32, #tpu.memory_space<vmem>>, vector<1x128xf32>
    %cst_7 = arith.constant dense<0.000000e+00> : vector<128xf32>
    %5 = vector.multi_reduction <add>, %2, %cst_7 [0] : vector<128x128xf32> to vector<128xf32>
    %6 = vector.shape_cast %5 : vector<128xf32> to vector<1x128xf32>
    %cst_8 = arith.constant 1.280000e+02 : f32
    %7 = vector.broadcast %cst_8 : f32 to vector<1x128xf32>
    %8 = arith.divf %6, %7 : vector<1x128xf32>
    %9 = vector.broadcast %8 : vector<1x128xf32> to vector<128x128xf32>
    %10 = arith.subf %2, %9 : vector<128x128xf32>
    %11 = arith.mulf %10, %10 : vector<128x128xf32>
    %cst_9 = arith.constant dense<0.000000e+00> : vector<128xf32>
    %12 = vector.multi_reduction <add>, %11, %cst_9 [0] : vector<128x128xf32> to vector<128xf32>
    %13 = vector.shape_cast %12 : vector<128xf32> to vector<1x128xf32>
    %cst_10 = arith.constant 1.280000e+02 : f32
    %14 = vector.broadcast %cst_10 : f32 to vector<1x128xf32>
    %15 = arith.divf %13, %14 : vector<1x128xf32>
    %cst_11 = arith.constant 9.99999974E-6 : f32
    %16 = vector.broadcast %cst_11 : f32 to vector<1x128xf32>
    %17 = arith.addf %15, %16 : vector<1x128xf32>
    %18 = math.rsqrt %17 : vector<1x128xf32>
    %19 = arith.mulf %3, %18 : vector<1x128xf32>
    %20 = arith.mulf %8, %19 : vector<1x128xf32>
    %21 = arith.subf %4, %20 : vector<1x128xf32>
    %22 = vector.broadcast %19 : vector<1x128xf32> to vector<128x128xf32>
    %23 = arith.mulf %2, %22 : vector<128x128xf32>
    %24 = vector.broadcast %21 : vector<1x128xf32> to vector<128x128xf32>
    %25 = arith.addf %23, %24 : vector<128x128xf32>
    %cst_12 = arith.constant 0.000000e+00 : f32
    %26 = vector.broadcast %cst_12 : f32 to vector<128x128xf32>
    %27 = arith.cmpf oge, %25, %26 : vector<128x128xf32>
    %cst_13 = arith.constant 2.000000e-01 : f32
    %28 = vector.broadcast %cst_13 : f32 to vector<128x128xf32>
    %29 = arith.mulf %28, %25 : vector<128x128xf32>
    %30 = arith.select %27, %25, %29 : vector<128x128xi1>, vector<128x128xf32>
    %31 = arith.truncf %30 : vector<128x128xf32> to vector<128x128xbf16>
    %c0_14 = arith.constant 0 : index
    %c0_15 = arith.constant 0 : index
    %c0_16 = arith.constant 0 : index
    %32 = vector.load %arg5[%c0_14, %c0_15, %c0_16] : memref<16x32x128xbf16, #tpu.memory_space<vmem>>, vector<1x32x128xbf16>
    %33 = vector.shape_cast %32 : vector<1x32x128xbf16> to vector<32x128xbf16>
    %cst_17 = arith.constant dense<0.000000e+00> : vector<32x128xf32>
    %34 = tpu.matmul %33, %31, %cst_17 {dimension_numbers = #tpu.dot_dimension_numbers<[1], [0], [0], [1], [0, 0, 1, 1], [], []>} : vector<32x128xbf16>, vector<128x128xbf16>, vector<32x128xf32> -> vector<32x128xf32>
    %35 = arith.truncf %34 : vector<32x128xf32> to vector<32x128xbf16>
    %c0_18 = arith.constant 0 : index
    %c0_19 = arith.constant 0 : index
    %c0_20 = arith.constant 0 : index
    %36 = vector.load %arg6[%c0_18, %c0_19, %c0_20] : memref<16x128x128xbf16, #tpu.memory_space<vmem>>, vector<1x128x128xbf16>
    %37 = vector.shape_cast %36 : vector<1x128x128xbf16> to vector<128x128xbf16>
    %cst_21 = arith.constant dense<0.000000e+00> : vector<32x128xf32>
    %38 = tpu.matmul %35, %37, %cst_21 {dimension_numbers = #tpu.dot_dimension_numbers<[1], [0], [0], [1], [0, 0, 1, 1], [], []>} : vector<32x128xbf16>, vector<128x128xbf16>, vector<32x128xf32> -> vector<32x128xf32>
    %c1 = arith.constant 1 : index
    %c0_22 = arith.constant 0 : index
    %c0_23 = arith.constant 0 : index
    %39 = vector.load %arg5[%c1, %c0_22, %c0_23] : memref<16x32x128xbf16, #tpu.memory_space<vmem>>, vector<1x32x128xbf16>
    %40 = vector.shape_cast %39 : vector<1x32x128xbf16> to vector<32x128xbf16>
    %cst_24 = arith.constant dense<0.000000e+00> : vector<32x128xf32>
    %41 = tpu.matmul %40, %31, %cst_24 {dimension_numbers = #tpu.dot_dimension_numbers<[1], [0], [0], [1], [0, 0, 1, 1], [], []>} : vector<32x128xbf16>, vector<128x128xbf16>, vector<32x128xf32> -> vector<32x128xf32>
    %42 = arith.truncf %41 : vector<32x128xf32> to vector<32x128xbf16>
    %c1_25 = arith.constant 1 : index
    %c0_26 = arith.constant 0 : index
    %c0_27 = arith.constant 0 : index
    %43 = vector.load %arg6[%c1_25, %c0_26, %c0_27] : memref<16x128x128xbf16, #tpu.memory_space<vmem>>, vector<1x128x128xbf16>
    %44 = vector.shape_cast %43 : vector<1x128x128xbf16> to vector<128x128xbf16>
    %cst_28 = arith.constant dense<0.000000e+00> : vector<32x128xf32>
    %45 = tpu.matmul %42, %44, %cst_28 {dimension_numbers = #tpu.dot_dimension_numbers<[1], [0], [0], [1], [0, 0, 1, 1], [], []>} : vector<32x128xbf16>, vector<128x128xbf16>, vector<32x128xf32> -> vector<32x128xf32>
    %46 = arith.addf %38, %45 : vector<32x128xf32>
    %c2 = arith.constant 2 : index
    %c0_29 = arith.constant 0 : index
    %c0_30 = arith.constant 0 : index
    %47 = vector.load %arg5[%c2, %c0_29, %c0_30] : memref<16x32x128xbf16, #tpu.memory_space<vmem>>, vector<1x32x128xbf16>
    %48 = vector.shape_cast %47 : vector<1x32x128xbf16> to vector<32x128xbf16>
    %cst_31 = arith.constant dense<0.000000e+00> : vector<32x128xf32>
    %49 = tpu.matmul %48, %31, %cst_31 {dimension_numbers = #tpu.dot_dimension_numbers<[1], [0], [0], [1], [0, 0, 1, 1], [], []>} : vector<32x128xbf16>, vector<128x128xbf16>, vector<32x128xf32> -> vector<32x128xf32>
    %50 = arith.truncf %49 : vector<32x128xf32> to vector<32x128xbf16>
    %c2_32 = arith.constant 2 : index
    %c0_33 = arith.constant 0 : index
    %c0_34 = arith.constant 0 : index
    %51 = vector.load %arg6[%c2_32, %c0_33, %c0_34] : memref<16x128x128xbf16, #tpu.memory_space<vmem>>, vector<1x128x128xbf16>
    %52 = vector.shape_cast %51 : vector<1x128x128xbf16> to vector<128x128xbf16>
    %cst_35 = arith.constant dense<0.000000e+00> : vector<32x128xf32>
    %53 = tpu.matmul %50, %52, %cst_35 {dimension_numbers = #tpu.dot_dimension_numbers<[1], [0], [0], [1], [0, 0, 1, 1], [], []>} : vector<32x128xbf16>, vector<128x128xbf16>, vector<32x128xf32> -> vector<32x128xf32>
    %54 = arith.addf %46, %53 : vector<32x128xf32>
    %c3 = arith.constant 3 : index
    %c0_36 = arith.constant 0 : index
    %c0_37 = arith.constant 0 : index
    %55 = vector.load %arg5[%c3, %c0_36, %c0_37] : memref<16x32x128xbf16, #tpu.memory_space<vmem>>, vector<1x32x128xbf16>
    %56 = vector.shape_cast %55 : vector<1x32x128xbf16> to vector<32x128xbf16>
    %cst_38 = arith.constant dense<0.000000e+00> : vector<32x128xf32>
    %57 = tpu.matmul %56, %31, %cst_38 {dimension_numbers = #tpu.dot_dimension_numbers<[1], [0], [0], [1], [0, 0, 1, 1], [], []>} : vector<32x128xbf16>, vector<128x128xbf16>, vector<32x128xf32> -> vector<32x128xf32>
    %58 = arith.truncf %57 : vector<32x128xf32> to vector<32x128xbf16>
    %c3_39 = arith.constant 3 : index
    %c0_40 = arith.constant 0 : index
    %c0_41 = arith.constant 0 : index
    %59 = vector.load %arg6[%c3_39, %c0_40, %c0_41] : memref<16x128x128xbf16, #tpu.memory_space<vmem>>, vector<1x128x128xbf16>
    %60 = vector.shape_cast %59 : vector<1x128x128xbf16> to vector<128x128xbf16>
    %cst_42 = arith.constant dense<0.000000e+00> : vector<32x128xf32>
    %61 = tpu.matmul %58, %60, %cst_42 {dimension_numbers = #tpu.dot_dimension_numbers<[1], [0], [0], [1], [0, 0, 1, 1], [], []>} : vector<32x128xbf16>, vector<128x128xbf16>, vector<32x128xf32> -> vector<32x128xf32>
    %62 = arith.addf %54, %61 : vector<32x128xf32>
    %c4 = arith.constant 4 : index
    %c0_43 = arith.constant 0 : index
    %c0_44 = arith.constant 0 : index
    %63 = vector.load %arg5[%c4, %c0_43, %c0_44] : memref<16x32x128xbf16, #tpu.memory_space<vmem>>, vector<1x32x128xbf16>
    %64 = vector.shape_cast %63 : vector<1x32x128xbf16> to vector<32x128xbf16>
    %cst_45 = arith.constant dense<0.000000e+00> : vector<32x128xf32>
    %65 = tpu.matmul %64, %31, %cst_45 {dimension_numbers = #tpu.dot_dimension_numbers<[1], [0], [0], [1], [0, 0, 1, 1], [], []>} : vector<32x128xbf16>, vector<128x128xbf16>, vector<32x128xf32> -> vector<32x128xf32>
    %66 = arith.truncf %65 : vector<32x128xf32> to vector<32x128xbf16>
    %c4_46 = arith.constant 4 : index
    %c0_47 = arith.constant 0 : index
    %c0_48 = arith.constant 0 : index
    %67 = vector.load %arg6[%c4_46, %c0_47, %c0_48] : memref<16x128x128xbf16, #tpu.memory_space<vmem>>, vector<1x128x128xbf16>
    %68 = vector.shape_cast %67 : vector<1x128x128xbf16> to vector<128x128xbf16>
    %cst_49 = arith.constant dense<0.000000e+00> : vector<32x128xf32>
    %69 = tpu.matmul %66, %68, %cst_49 {dimension_numbers = #tpu.dot_dimension_numbers<[1], [0], [0], [1], [0, 0, 1, 1], [], []>} : vector<32x128xbf16>, vector<128x128xbf16>, vector<32x128xf32> -> vector<32x128xf32>
    %70 = arith.addf %62, %69 : vector<32x128xf32>
    %c5 = arith.constant 5 : index
    %c0_50 = arith.constant 0 : index
    %c0_51 = arith.constant 0 : index
    %71 = vector.load %arg5[%c5, %c0_50, %c0_51] : memref<16x32x128xbf16, #tpu.memory_space<vmem>>, vector<1x32x128xbf16>
    %72 = vector.shape_cast %71 : vector<1x32x128xbf16> to vector<32x128xbf16>
    %cst_52 = arith.constant dense<0.000000e+00> : vector<32x128xf32>
    %73 = tpu.matmul %72, %31, %cst_52 {dimension_numbers = #tpu.dot_dimension_numbers<[1], [0], [0], [1], [0, 0, 1, 1], [], []>} : vector<32x128xbf16>, vector<128x128xbf16>, vector<32x128xf32> -> vector<32x128xf32>
    %74 = arith.truncf %73 : vector<32x128xf32> to vector<32x128xbf16>
    %c5_53 = arith.constant 5 : index
    %c0_54 = arith.constant 0 : index
    %c0_55 = arith.constant 0 : index
    %75 = vector.load %arg6[%c5_53, %c0_54, %c0_55] : memref<16x128x128xbf16, #tpu.memory_space<vmem>>, vector<1x128x128xbf16>
    %76 = vector.shape_cast %75 : vector<1x128x128xbf16> to vector<128x128xbf16>
    %cst_56 = arith.constant dense<0.000000e+00> : vector<32x128xf32>
    %77 = tpu.matmul %74, %76, %cst_56 {dimension_numbers = #tpu.dot_dimension_numbers<[1], [0], [0], [1], [0, 0, 1, 1], [], []>} : vector<32x128xbf16>, vector<128x128xbf16>, vector<32x128xf32> -> vector<32x128xf32>
    %78 = arith.addf %70, %77 : vector<32x128xf32>
    %c6 = arith.constant 6 : index
    %c0_57 = arith.constant 0 : index
    %c0_58 = arith.constant 0 : index
    %79 = vector.load %arg5[%c6, %c0_57, %c0_58] : memref<16x32x128xbf16, #tpu.memory_space<vmem>>, vector<1x32x128xbf16>
    %80 = vector.shape_cast %79 : vector<1x32x128xbf16> to vector<32x128xbf16>
    %cst_59 = arith.constant dense<0.000000e+00> : vector<32x128xf32>
    %81 = tpu.matmul %80, %31, %cst_59 {dimension_numbers = #tpu.dot_dimension_numbers<[1], [0], [0], [1], [0, 0, 1, 1], [], []>} : vector<32x128xbf16>, vector<128x128xbf16>, vector<32x128xf32> -> vector<32x128xf32>
    %82 = arith.truncf %81 : vector<32x128xf32> to vector<32x128xbf16>
    %c6_60 = arith.constant 6 : index
    %c0_61 = arith.constant 0 : index
    %c0_62 = arith.constant 0 : index
    %83 = vector.load %arg6[%c6_60, %c0_61, %c0_62] : memref<16x128x128xbf16, #tpu.memory_space<vmem>>, vector<1x128x128xbf16>
    %84 = vector.shape_cast %83 : vector<1x128x128xbf16> to vector<128x128xbf16>
    %cst_63 = arith.constant dense<0.000000e+00> : vector<32x128xf32>
    %85 = tpu.matmul %82, %84, %cst_63 {dimension_numbers = #tpu.dot_dimension_numbers<[1], [0], [0], [1], [0, 0, 1, 1], [], []>} : vector<32x128xbf16>, vector<128x128xbf16>, vector<32x128xf32> -> vector<32x128xf32>
    %86 = arith.addf %78, %85 : vector<32x128xf32>
    %c7 = arith.constant 7 : index
    %c0_64 = arith.constant 0 : index
    %c0_65 = arith.constant 0 : index
    %87 = vector.load %arg5[%c7, %c0_64, %c0_65] : memref<16x32x128xbf16, #tpu.memory_space<vmem>>, vector<1x32x128xbf16>
    %88 = vector.shape_cast %87 : vector<1x32x128xbf16> to vector<32x128xbf16>
    %cst_66 = arith.constant dense<0.000000e+00> : vector<32x128xf32>
    %89 = tpu.matmul %88, %31, %cst_66 {dimension_numbers = #tpu.dot_dimension_numbers<[1], [0], [0], [1], [0, 0, 1, 1], [], []>} : vector<32x128xbf16>, vector<128x128xbf16>, vector<32x128xf32> -> vector<32x128xf32>
    %90 = arith.truncf %89 : vector<32x128xf32> to vector<32x128xbf16>
    %c7_67 = arith.constant 7 : index
    %c0_68 = arith.constant 0 : index
    %c0_69 = arith.constant 0 : index
    %91 = vector.load %arg6[%c7_67, %c0_68, %c0_69] : memref<16x128x128xbf16, #tpu.memory_space<vmem>>, vector<1x128x128xbf16>
    %92 = vector.shape_cast %91 : vector<1x128x128xbf16> to vector<128x128xbf16>
    %cst_70 = arith.constant dense<0.000000e+00> : vector<32x128xf32>
    %93 = tpu.matmul %90, %92, %cst_70 {dimension_numbers = #tpu.dot_dimension_numbers<[1], [0], [0], [1], [0, 0, 1, 1], [], []>} : vector<32x128xbf16>, vector<128x128xbf16>, vector<32x128xf32> -> vector<32x128xf32>
    %94 = arith.addf %86, %93 : vector<32x128xf32>
    %c8 = arith.constant 8 : index
    %c0_71 = arith.constant 0 : index
    %c0_72 = arith.constant 0 : index
    %95 = vector.load %arg5[%c8, %c0_71, %c0_72] : memref<16x32x128xbf16, #tpu.memory_space<vmem>>, vector<1x32x128xbf16>
    %96 = vector.shape_cast %95 : vector<1x32x128xbf16> to vector<32x128xbf16>
    %cst_73 = arith.constant dense<0.000000e+00> : vector<32x128xf32>
    %97 = tpu.matmul %96, %31, %cst_73 {dimension_numbers = #tpu.dot_dimension_numbers<[1], [0], [0], [1], [0, 0, 1, 1], [], []>} : vector<32x128xbf16>, vector<128x128xbf16>, vector<32x128xf32> -> vector<32x128xf32>
    %98 = arith.truncf %97 : vector<32x128xf32> to vector<32x128xbf16>
    %c8_74 = arith.constant 8 : index
    %c0_75 = arith.constant 0 : index
    %c0_76 = arith.constant 0 : index
    %99 = vector.load %arg6[%c8_74, %c0_75, %c0_76] : memref<16x128x128xbf16, #tpu.memory_space<vmem>>, vector<1x128x128xbf16>
    %100 = vector.shape_cast %99 : vector<1x128x128xbf16> to vector<128x128xbf16>
    %cst_77 = arith.constant dense<0.000000e+00> : vector<32x128xf32>
    %101 = tpu.matmul %98, %100, %cst_77 {dimension_numbers = #tpu.dot_dimension_numbers<[1], [0], [0], [1], [0, 0, 1, 1], [], []>} : vector<32x128xbf16>, vector<128x128xbf16>, vector<32x128xf32> -> vector<32x128xf32>
    %102 = arith.addf %94, %101 : vector<32x128xf32>
    %c9 = arith.constant 9 : index
    %c0_78 = arith.constant 0 : index
    %c0_79 = arith.constant 0 : index
    %103 = vector.load %arg5[%c9, %c0_78, %c0_79] : memref<16x32x128xbf16, #tpu.memory_space<vmem>>, vector<1x32x128xbf16>
    %104 = vector.shape_cast %103 : vector<1x32x128xbf16> to vector<32x128xbf16>
    %cst_80 = arith.constant dense<0.000000e+00> : vector<32x128xf32>
    %105 = tpu.matmul %104, %31, %cst_80 {dimension_numbers = #tpu.dot_dimension_numbers<[1], [0], [0], [1], [0, 0, 1, 1], [], []>} : vector<32x128xbf16>, vector<128x128xbf16>, vector<32x128xf32> -> vector<32x128xf32>
    %106 = arith.truncf %105 : vector<32x128xf32> to vector<32x128xbf16>
    %c9_81 = arith.constant 9 : index
    %c0_82 = arith.constant 0 : index
    %c0_83 = arith.constant 0 : index
    %107 = vector.load %arg6[%c9_81, %c0_82, %c0_83] : memref<16x128x128xbf16, #tpu.memory_space<vmem>>, vector<1x128x128xbf16>
    %108 = vector.shape_cast %107 : vector<1x128x128xbf16> to vector<128x128xbf16>
    %cst_84 = arith.constant dense<0.000000e+00> : vector<32x128xf32>
    %109 = tpu.matmul %106, %108, %cst_84 {dimension_numbers = #tpu.dot_dimension_numbers<[1], [0], [0], [1], [0, 0, 1, 1], [], []>} : vector<32x128xbf16>, vector<128x128xbf16>, vector<32x128xf32> -> vector<32x128xf32>
    %110 = arith.addf %102, %109 : vector<32x128xf32>
    %c10 = arith.constant 10 : index
    %c0_85 = arith.constant 0 : index
    %c0_86 = arith.constant 0 : index
    %111 = vector.load %arg5[%c10, %c0_85, %c0_86] : memref<16x32x128xbf16, #tpu.memory_space<vmem>>, vector<1x32x128xbf16>
    %112 = vector.shape_cast %111 : vector<1x32x128xbf16> to vector<32x128xbf16>
    %cst_87 = arith.constant dense<0.000000e+00> : vector<32x128xf32>
    %113 = tpu.matmul %112, %31, %cst_87 {dimension_numbers = #tpu.dot_dimension_numbers<[1], [0], [0], [1], [0, 0, 1, 1], [], []>} : vector<32x128xbf16>, vector<128x128xbf16>, vector<32x128xf32> -> vector<32x128xf32>
    %114 = arith.truncf %113 : vector<32x128xf32> to vector<32x128xbf16>
    %c10_88 = arith.constant 10 : index
    %c0_89 = arith.constant 0 : index
    %c0_90 = arith.constant 0 : index
    %115 = vector.load %arg6[%c10_88, %c0_89, %c0_90] : memref<16x128x128xbf16, #tpu.memory_space<vmem>>, vector<1x128x128xbf16>
    %116 = vector.shape_cast %115 : vector<1x128x128xbf16> to vector<128x128xbf16>
    %cst_91 = arith.constant dense<0.000000e+00> : vector<32x128xf32>
    %117 = tpu.matmul %114, %116, %cst_91 {dimension_numbers = #tpu.dot_dimension_numbers<[1], [0], [0], [1], [0, 0, 1, 1], [], []>} : vector<32x128xbf16>, vector<128x128xbf16>, vector<32x128xf32> -> vector<32x128xf32>
    %118 = arith.addf %110, %117 : vector<32x128xf32>
    %c11 = arith.constant 11 : index
    %c0_92 = arith.constant 0 : index
    %c0_93 = arith.constant 0 : index
    %119 = vector.load %arg5[%c11, %c0_92, %c0_93] : memref<16x32x128xbf16, #tpu.memory_space<vmem>>, vector<1x32x128xbf16>
    %120 = vector.shape_cast %119 : vector<1x32x128xbf16> to vector<32x128xbf16>
    %cst_94 = arith.constant dense<0.000000e+00> : vector<32x128xf32>
    %121 = tpu.matmul %120, %31, %cst_94 {dimension_numbers = #tpu.dot_dimension_numbers<[1], [0], [0], [1], [0, 0, 1, 1], [], []>} : vector<32x128xbf16>, vector<128x128xbf16>, vector<32x128xf32> -> vector<32x128xf32>
    %122 = arith.truncf %121 : vector<32x128xf32> to vector<32x128xbf16>
    %c11_95 = arith.constant 11 : index
    %c0_96 = arith.constant 0 : index
    %c0_97 = arith.constant 0 : index
    %123 = vector.load %arg6[%c11_95, %c0_96, %c0_97] : memref<16x128x128xbf16, #tpu.memory_space<vmem>>, vector<1x128x128xbf16>
    %124 = vector.shape_cast %123 : vector<1x128x128xbf16> to vector<128x128xbf16>
    %cst_98 = arith.constant dense<0.000000e+00> : vector<32x128xf32>
    %125 = tpu.matmul %122, %124, %cst_98 {dimension_numbers = #tpu.dot_dimension_numbers<[1], [0], [0], [1], [0, 0, 1, 1], [], []>} : vector<32x128xbf16>, vector<128x128xbf16>, vector<32x128xf32> -> vector<32x128xf32>
    %126 = arith.addf %118, %125 : vector<32x128xf32>
    %c12 = arith.constant 12 : index
    %c0_99 = arith.constant 0 : index
    %c0_100 = arith.constant 0 : index
    %127 = vector.load %arg5[%c12, %c0_99, %c0_100] : memref<16x32x128xbf16, #tpu.memory_space<vmem>>, vector<1x32x128xbf16>
    %128 = vector.shape_cast %127 : vector<1x32x128xbf16> to vector<32x128xbf16>
    %cst_101 = arith.constant dense<0.000000e+00> : vector<32x128xf32>
    %129 = tpu.matmul %128, %31, %cst_101 {dimension_numbers = #tpu.dot_dimension_numbers<[1], [0], [0], [1], [0, 0, 1, 1], [], []>} : vector<32x128xbf16>, vector<128x128xbf16>, vector<32x128xf32> -> vector<32x128xf32>
    %130 = arith.truncf %129 : vector<32x128xf32> to vector<32x128xbf16>
    %c12_102 = arith.constant 12 : index
    %c0_103 = arith.constant 0 : index
    %c0_104 = arith.constant 0 : index
    %131 = vector.load %arg6[%c12_102, %c0_103, %c0_104] : memref<16x128x128xbf16, #tpu.memory_space<vmem>>, vector<1x128x128xbf16>
    %132 = vector.shape_cast %131 : vector<1x128x128xbf16> to vector<128x128xbf16>
    %cst_105 = arith.constant dense<0.000000e+00> : vector<32x128xf32>
    %133 = tpu.matmul %130, %132, %cst_105 {dimension_numbers = #tpu.dot_dimension_numbers<[1], [0], [0], [1], [0, 0, 1, 1], [], []>} : vector<32x128xbf16>, vector<128x128xbf16>, vector<32x128xf32> -> vector<32x128xf32>
    %134 = arith.addf %126, %133 : vector<32x128xf32>
    %c13 = arith.constant 13 : index
    %c0_106 = arith.constant 0 : index
    %c0_107 = arith.constant 0 : index
    %135 = vector.load %arg5[%c13, %c0_106, %c0_107] : memref<16x32x128xbf16, #tpu.memory_space<vmem>>, vector<1x32x128xbf16>
    %136 = vector.shape_cast %135 : vector<1x32x128xbf16> to vector<32x128xbf16>
    %cst_108 = arith.constant dense<0.000000e+00> : vector<32x128xf32>
    %137 = tpu.matmul %136, %31, %cst_108 {dimension_numbers = #tpu.dot_dimension_numbers<[1], [0], [0], [1], [0, 0, 1, 1], [], []>} : vector<32x128xbf16>, vector<128x128xbf16>, vector<32x128xf32> -> vector<32x128xf32>
    %138 = arith.truncf %137 : vector<32x128xf32> to vector<32x128xbf16>
    %c13_109 = arith.constant 13 : index
    %c0_110 = arith.constant 0 : index
    %c0_111 = arith.constant 0 : index
    %139 = vector.load %arg6[%c13_109, %c0_110, %c0_111] : memref<16x128x128xbf16, #tpu.memory_space<vmem>>, vector<1x128x128xbf16>
    %140 = vector.shape_cast %139 : vector<1x128x128xbf16> to vector<128x128xbf16>
    %cst_112 = arith.constant dense<0.000000e+00> : vector<32x128xf32>
    %141 = tpu.matmul %138, %140, %cst_112 {dimension_numbers = #tpu.dot_dimension_numbers<[1], [0], [0], [1], [0, 0, 1, 1], [], []>} : vector<32x128xbf16>, vector<128x128xbf16>, vector<32x128xf32> -> vector<32x128xf32>
    %142 = arith.addf %134, %141 : vector<32x128xf32>
    %c14 = arith.constant 14 : index
    %c0_113 = arith.constant 0 : index
    %c0_114 = arith.constant 0 : index
    %143 = vector.load %arg5[%c14, %c0_113, %c0_114] : memref<16x32x128xbf16, #tpu.memory_space<vmem>>, vector<1x32x128xbf16>
    %144 = vector.shape_cast %143 : vector<1x32x128xbf16> to vector<32x128xbf16>
    %cst_115 = arith.constant dense<0.000000e+00> : vector<32x128xf32>
    %145 = tpu.matmul %144, %31, %cst_115 {dimension_numbers = #tpu.dot_dimension_numbers<[1], [0], [0], [1], [0, 0, 1, 1], [], []>} : vector<32x128xbf16>, vector<128x128xbf16>, vector<32x128xf32> -> vector<32x128xf32>
    %146 = arith.truncf %145 : vector<32x128xf32> to vector<32x128xbf16>
    %c14_116 = arith.constant 14 : index
    %c0_117 = arith.constant 0 : index
    %c0_118 = arith.constant 0 : index
    %147 = vector.load %arg6[%c14_116, %c0_117, %c0_118] : memref<16x128x128xbf16, #tpu.memory_space<vmem>>, vector<1x128x128xbf16>
    %148 = vector.shape_cast %147 : vector<1x128x128xbf16> to vector<128x128xbf16>
    %cst_119 = arith.constant dense<0.000000e+00> : vector<32x128xf32>
    %149 = tpu.matmul %146, %148, %cst_119 {dimension_numbers = #tpu.dot_dimension_numbers<[1], [0], [0], [1], [0, 0, 1, 1], [], []>} : vector<32x128xbf16>, vector<128x128xbf16>, vector<32x128xf32> -> vector<32x128xf32>
    %150 = arith.addf %142, %149 : vector<32x128xf32>
    %c15 = arith.constant 15 : index
    %c0_120 = arith.constant 0 : index
    %c0_121 = arith.constant 0 : index
    %151 = vector.load %arg5[%c15, %c0_120, %c0_121] : memref<16x32x128xbf16, #tpu.memory_space<vmem>>, vector<1x32x128xbf16>
    %152 = vector.shape_cast %151 : vector<1x32x128xbf16> to vector<32x128xbf16>
    %cst_122 = arith.constant dense<0.000000e+00> : vector<32x128xf32>
    %153 = tpu.matmul %152, %31, %cst_122 {dimension_numbers = #tpu.dot_dimension_numbers<[1], [0], [0], [1], [0, 0, 1, 1], [], []>} : vector<32x128xbf16>, vector<128x128xbf16>, vector<32x128xf32> -> vector<32x128xf32>
    %154 = arith.truncf %153 : vector<32x128xf32> to vector<32x128xbf16>
    %c15_123 = arith.constant 15 : index
    %c0_124 = arith.constant 0 : index
    %c0_125 = arith.constant 0 : index
    %155 = vector.load %arg6[%c15_123, %c0_124, %c0_125] : memref<16x128x128xbf16, #tpu.memory_space<vmem>>, vector<1x128x128xbf16>
    %156 = vector.shape_cast %155 : vector<1x128x128xbf16> to vector<128x128xbf16>
    %cst_126 = arith.constant dense<0.000000e+00> : vector<32x128xf32>
    %157 = tpu.matmul %154, %156, %cst_126 {dimension_numbers = #tpu.dot_dimension_numbers<[1], [0], [0], [1], [0, 0, 1, 1], [], []>} : vector<32x128xbf16>, vector<128x128xbf16>, vector<32x128xf32> -> vector<32x128xf32>
    %158 = arith.addf %150, %157 : vector<32x128xf32>
    %c0_127 = arith.constant 0 : index
    %c0_128 = arith.constant 0 : index
    %159 = vector.load %arg7[%c0_127, %c0_128] : memref<1x128xf32, #tpu.memory_space<vmem>>, vector<1x128xf32>
    %c0_129 = arith.constant 0 : index
    %c0_130 = arith.constant 0 : index
    %160 = vector.load %arg8[%c0_129, %c0_130] : memref<1x128xf32, #tpu.memory_space<vmem>>, vector<1x128xf32>
    %cst_131 = arith.constant dense<0.000000e+00> : vector<128xf32>
    %161 = vector.multi_reduction <add>, %158, %cst_131 [0] : vector<32x128xf32> to vector<128xf32>
    %162 = vector.shape_cast %161 : vector<128xf32> to vector<1x128xf32>
    %cst_132 = arith.constant 3.200000e+01 : f32
    %163 = vector.broadcast %cst_132 : f32 to vector<1x128xf32>
    %164 = arith.divf %162, %163 : vector<1x128xf32>
    %165 = vector.broadcast %164 : vector<1x128xf32> to vector<32x128xf32>
    %166 = arith.subf %158, %165 : vector<32x128xf32>
    %167 = arith.mulf %166, %166 : vector<32x128xf32>
    %cst_133 = arith.constant dense<0.000000e+00> : vector<128xf32>
    %168 = vector.multi_reduction <add>, %167, %cst_133 [0] : vector<32x128xf32> to vector<128xf32>
    %169 = vector.shape_cast %168 : vector<128xf32> to vector<1x128xf32>
    %cst_134 = arith.constant 3.200000e+01 : f32
    %170 = vector.broadcast %cst_134 : f32 to vector<1x128xf32>
    %171 = arith.divf %169, %170 : vector<1x128xf32>
    %cst_135 = arith.constant 9.99999974E-6 : f32
    %172 = vector.broadcast %cst_135 : f32 to vector<1x128xf32>
    %173 = arith.addf %171, %172 : vector<1x128xf32>
    %174 = math.rsqrt %173 : vector<1x128xf32>
    %175 = arith.mulf %159, %174 : vector<1x128xf32>
    %176 = arith.mulf %164, %175 : vector<1x128xf32>
    %177 = arith.subf %160, %176 : vector<1x128xf32>
    %178 = vector.broadcast %175 : vector<1x128xf32> to vector<32x128xf32>
    %179 = arith.mulf %158, %178 : vector<32x128xf32>
    %180 = vector.broadcast %177 : vector<1x128xf32> to vector<32x128xf32>
    %181 = arith.addf %179, %180 : vector<32x128xf32>
    %cst_136 = arith.constant 0.000000e+00 : f32
    %182 = vector.broadcast %cst_136 : f32 to vector<32x128xf32>
    %183 = arith.cmpf oge, %181, %182 : vector<32x128xf32>
    %cst_137 = arith.constant 2.000000e-01 : f32
    %184 = vector.broadcast %cst_137 : f32 to vector<32x128xf32>
    %185 = arith.mulf %184, %181 : vector<32x128xf32>
    %186 = arith.select %183, %181, %185 : vector<32x128xi1>, vector<32x128xf32>
    %187 = arith.truncf %186 : vector<32x128xf32> to vector<32x128xbf16>
    %c0_138 = arith.constant 0 : index
    %c0_139 = arith.constant 0 : index
    %c0_140 = arith.constant 0 : index
    %188 = vector.load %arg9[%c0_138, %c0_139, %c0_140] : memref<16x8x32xbf16, #tpu.memory_space<vmem>>, vector<1x8x32xbf16>
    %189 = vector.shape_cast %188 : vector<1x8x32xbf16> to vector<8x32xbf16>
    %cst_141 = arith.constant dense<0.000000e+00> : vector<8x128xf32>
    %190 = tpu.matmul %189, %187, %cst_141 {dimension_numbers = #tpu.dot_dimension_numbers<[1], [0], [0], [1], [0, 0, 1, 1], [], []>} : vector<8x32xbf16>, vector<32x128xbf16>, vector<8x128xf32> -> vector<8x128xf32>
    %191 = arith.truncf %190 : vector<8x128xf32> to vector<8x128xbf16>
    %c0_142 = arith.constant 0 : index
    %c0_143 = arith.constant 0 : index
    %c0_144 = arith.constant 0 : index
    %192 = vector.load %arg10[%c0_142, %c0_143, %c0_144] : memref<16x128x128xbf16, #tpu.memory_space<vmem>>, vector<1x128x128xbf16>
    %193 = vector.shape_cast %192 : vector<1x128x128xbf16> to vector<128x128xbf16>
    %cst_145 = arith.constant dense<0.000000e+00> : vector<8x128xf32>
    %194 = tpu.matmul %191, %193, %cst_145 {dimension_numbers = #tpu.dot_dimension_numbers<[1], [0], [0], [1], [0, 0, 1, 1], [], []>} : vector<8x128xbf16>, vector<128x128xbf16>, vector<8x128xf32> -> vector<8x128xf32>
    %c1_146 = arith.constant 1 : index
    %c0_147 = arith.constant 0 : index
    %c0_148 = arith.constant 0 : index
    %195 = vector.load %arg9[%c1_146, %c0_147, %c0_148] : memref<16x8x32xbf16, #tpu.memory_space<vmem>>, vector<1x8x32xbf16>
    %196 = vector.shape_cast %195 : vector<1x8x32xbf16> to vector<8x32xbf16>
    %cst_149 = arith.constant dense<0.000000e+00> : vector<8x128xf32>
    %197 = tpu.matmul %196, %187, %cst_149 {dimension_numbers = #tpu.dot_dimension_numbers<[1], [0], [0], [1], [0, 0, 1, 1], [], []>} : vector<8x32xbf16>, vector<32x128xbf16>, vector<8x128xf32> -> vector<8x128xf32>
    %198 = arith.truncf %197 : vector<8x128xf32> to vector<8x128xbf16>
    %c1_150 = arith.constant 1 : index
    %c0_151 = arith.constant 0 : index
    %c0_152 = arith.constant 0 : index
    %199 = vector.load %arg10[%c1_150, %c0_151, %c0_152] : memref<16x128x128xbf16, #tpu.memory_space<vmem>>, vector<1x128x128xbf16>
    %200 = vector.shape_cast %199 : vector<1x128x128xbf16> to vector<128x128xbf16>
    %cst_153 = arith.constant dense<0.000000e+00> : vector<8x128xf32>
    %201 = tpu.matmul %198, %200, %cst_153 {dimension_numbers = #tpu.dot_dimension_numbers<[1], [0], [0], [1], [0, 0, 1, 1], [], []>} : vector<8x128xbf16>, vector<128x128xbf16>, vector<8x128xf32> -> vector<8x128xf32>
    %202 = arith.addf %194, %201 : vector<8x128xf32>
    %c2_154 = arith.constant 2 : index
    %c0_155 = arith.constant 0 : index
    %c0_156 = arith.constant 0 : index
    %203 = vector.load %arg9[%c2_154, %c0_155, %c0_156] : memref<16x8x32xbf16, #tpu.memory_space<vmem>>, vector<1x8x32xbf16>
    %204 = vector.shape_cast %203 : vector<1x8x32xbf16> to vector<8x32xbf16>
    %cst_157 = arith.constant dense<0.000000e+00> : vector<8x128xf32>
    %205 = tpu.matmul %204, %187, %cst_157 {dimension_numbers = #tpu.dot_dimension_numbers<[1], [0], [0], [1], [0, 0, 1, 1], [], []>} : vector<8x32xbf16>, vector<32x128xbf16>, vector<8x128xf32> -> vector<8x128xf32>
    %206 = arith.truncf %205 : vector<8x128xf32> to vector<8x128xbf16>
    %c2_158 = arith.constant 2 : index
    %c0_159 = arith.constant 0 : index
    %c0_160 = arith.constant 0 : index
    %207 = vector.load %arg10[%c2_158, %c0_159, %c0_160] : memref<16x128x128xbf16, #tpu.memory_space<vmem>>, vector<1x128x128xbf16>
    %208 = vector.shape_cast %207 : vector<1x128x128xbf16> to vector<128x128xbf16>
    %cst_161 = arith.constant dense<0.000000e+00> : vector<8x128xf32>
    %209 = tpu.matmul %206, %208, %cst_161 {dimension_numbers = #tpu.dot_dimension_numbers<[1], [0], [0], [1], [0, 0, 1, 1], [], []>} : vector<8x128xbf16>, vector<128x128xbf16>, vector<8x128xf32> -> vector<8x128xf32>
    %210 = arith.addf %202, %209 : vector<8x128xf32>
    %c3_162 = arith.constant 3 : index
    %c0_163 = arith.constant 0 : index
    %c0_164 = arith.constant 0 : index
    %211 = vector.load %arg9[%c3_162, %c0_163, %c0_164] : memref<16x8x32xbf16, #tpu.memory_space<vmem>>, vector<1x8x32xbf16>
    %212 = vector.shape_cast %211 : vector<1x8x32xbf16> to vector<8x32xbf16>
    %cst_165 = arith.constant dense<0.000000e+00> : vector<8x128xf32>
    %213 = tpu.matmul %212, %187, %cst_165 {dimension_numbers = #tpu.dot_dimension_numbers<[1], [0], [0], [1], [0, 0, 1, 1], [], []>} : vector<8x32xbf16>, vector<32x128xbf16>, vector<8x128xf32> -> vector<8x128xf32>
    %214 = arith.truncf %213 : vector<8x128xf32> to vector<8x128xbf16>
    %c3_166 = arith.constant 3 : index
    %c0_167 = arith.constant 0 : index
    %c0_168 = arith.constant 0 : index
    %215 = vector.load %arg10[%c3_166, %c0_167, %c0_168] : memref<16x128x128xbf16, #tpu.memory_space<vmem>>, vector<1x128x128xbf16>
    %216 = vector.shape_cast %215 : vector<1x128x128xbf16> to vector<128x128xbf16>
    %cst_169 = arith.constant dense<0.000000e+00> : vector<8x128xf32>
    %217 = tpu.matmul %214, %216, %cst_169 {dimension_numbers = #tpu.dot_dimension_numbers<[1], [0], [0], [1], [0, 0, 1, 1], [], []>} : vector<8x128xbf16>, vector<128x128xbf16>, vector<8x128xf32> -> vector<8x128xf32>
    %218 = arith.addf %210, %217 : vector<8x128xf32>
    %c4_170 = arith.constant 4 : index
    %c0_171 = arith.constant 0 : index
    %c0_172 = arith.constant 0 : index
    %219 = vector.load %arg9[%c4_170, %c0_171, %c0_172] : memref<16x8x32xbf16, #tpu.memory_space<vmem>>, vector<1x8x32xbf16>
    %220 = vector.shape_cast %219 : vector<1x8x32xbf16> to vector<8x32xbf16>
    %cst_173 = arith.constant dense<0.000000e+00> : vector<8x128xf32>
    %221 = tpu.matmul %220, %187, %cst_173 {dimension_numbers = #tpu.dot_dimension_numbers<[1], [0], [0], [1], [0, 0, 1, 1], [], []>} : vector<8x32xbf16>, vector<32x128xbf16>, vector<8x128xf32> -> vector<8x128xf32>
    %222 = arith.truncf %221 : vector<8x128xf32> to vector<8x128xbf16>
    %c4_174 = arith.constant 4 : index
    %c0_175 = arith.constant 0 : index
    %c0_176 = arith.constant 0 : index
    %223 = vector.load %arg10[%c4_174, %c0_175, %c0_176] : memref<16x128x128xbf16, #tpu.memory_space<vmem>>, vector<1x128x128xbf16>
    %224 = vector.shape_cast %223 : vector<1x128x128xbf16> to vector<128x128xbf16>
    %cst_177 = arith.constant dense<0.000000e+00> : vector<8x128xf32>
    %225 = tpu.matmul %222, %224, %cst_177 {dimension_numbers = #tpu.dot_dimension_numbers<[1], [0], [0], [1], [0, 0, 1, 1], [], []>} : vector<8x128xbf16>, vector<128x128xbf16>, vector<8x128xf32> -> vector<8x128xf32>
    %226 = arith.addf %218, %225 : vector<8x128xf32>
    %c5_178 = arith.constant 5 : index
    %c0_179 = arith.constant 0 : index
    %c0_180 = arith.constant 0 : index
    %227 = vector.load %arg9[%c5_178, %c0_179, %c0_180] : memref<16x8x32xbf16, #tpu.memory_space<vmem>>, vector<1x8x32xbf16>
    %228 = vector.shape_cast %227 : vector<1x8x32xbf16> to vector<8x32xbf16>
    %cst_181 = arith.constant dense<0.000000e+00> : vector<8x128xf32>
    %229 = tpu.matmul %228, %187, %cst_181 {dimension_numbers = #tpu.dot_dimension_numbers<[1], [0], [0], [1], [0, 0, 1, 1], [], []>} : vector<8x32xbf16>, vector<32x128xbf16>, vector<8x128xf32> -> vector<8x128xf32>
    %230 = arith.truncf %229 : vector<8x128xf32> to vector<8x128xbf16>
    %c5_182 = arith.constant 5 : index
    %c0_183 = arith.constant 0 : index
    %c0_184 = arith.constant 0 : index
    %231 = vector.load %arg10[%c5_182, %c0_183, %c0_184] : memref<16x128x128xbf16, #tpu.memory_space<vmem>>, vector<1x128x128xbf16>
    %232 = vector.shape_cast %231 : vector<1x128x128xbf16> to vector<128x128xbf16>
    %cst_185 = arith.constant dense<0.000000e+00> : vector<8x128xf32>
    %233 = tpu.matmul %230, %232, %cst_185 {dimension_numbers = #tpu.dot_dimension_numbers<[1], [0], [0], [1], [0, 0, 1, 1], [], []>} : vector<8x128xbf16>, vector<128x128xbf16>, vector<8x128xf32> -> vector<8x128xf32>
    %234 = arith.addf %226, %233 : vector<8x128xf32>
    %c6_186 = arith.constant 6 : index
    %c0_187 = arith.constant 0 : index
    %c0_188 = arith.constant 0 : index
    %235 = vector.load %arg9[%c6_186, %c0_187, %c0_188] : memref<16x8x32xbf16, #tpu.memory_space<vmem>>, vector<1x8x32xbf16>
    %236 = vector.shape_cast %235 : vector<1x8x32xbf16> to vector<8x32xbf16>
    %cst_189 = arith.constant dense<0.000000e+00> : vector<8x128xf32>
    %237 = tpu.matmul %236, %187, %cst_189 {dimension_numbers = #tpu.dot_dimension_numbers<[1], [0], [0], [1], [0, 0, 1, 1], [], []>} : vector<8x32xbf16>, vector<32x128xbf16>, vector<8x128xf32> -> vector<8x128xf32>
    %238 = arith.truncf %237 : vector<8x128xf32> to vector<8x128xbf16>
    %c6_190 = arith.constant 6 : index
    %c0_191 = arith.constant 0 : index
    %c0_192 = arith.constant 0 : index
    %239 = vector.load %arg10[%c6_190, %c0_191, %c0_192] : memref<16x128x128xbf16, #tpu.memory_space<vmem>>, vector<1x128x128xbf16>
    %240 = vector.shape_cast %239 : vector<1x128x128xbf16> to vector<128x128xbf16>
    %cst_193 = arith.constant dense<0.000000e+00> : vector<8x128xf32>
    %241 = tpu.matmul %238, %240, %cst_193 {dimension_numbers = #tpu.dot_dimension_numbers<[1], [0], [0], [1], [0, 0, 1, 1], [], []>} : vector<8x128xbf16>, vector<128x128xbf16>, vector<8x128xf32> -> vector<8x128xf32>
    %242 = arith.addf %234, %241 : vector<8x128xf32>
    %c7_194 = arith.constant 7 : index
    %c0_195 = arith.constant 0 : index
    %c0_196 = arith.constant 0 : index
    %243 = vector.load %arg9[%c7_194, %c0_195, %c0_196] : memref<16x8x32xbf16, #tpu.memory_space<vmem>>, vector<1x8x32xbf16>
    %244 = vector.shape_cast %243 : vector<1x8x32xbf16> to vector<8x32xbf16>
    %cst_197 = arith.constant dense<0.000000e+00> : vector<8x128xf32>
    %245 = tpu.matmul %244, %187, %cst_197 {dimension_numbers = #tpu.dot_dimension_numbers<[1], [0], [0], [1], [0, 0, 1, 1], [], []>} : vector<8x32xbf16>, vector<32x128xbf16>, vector<8x128xf32> -> vector<8x128xf32>
    %246 = arith.truncf %245 : vector<8x128xf32> to vector<8x128xbf16>
    %c7_198 = arith.constant 7 : index
    %c0_199 = arith.constant 0 : index
    %c0_200 = arith.constant 0 : index
    %247 = vector.load %arg10[%c7_198, %c0_199, %c0_200] : memref<16x128x128xbf16, #tpu.memory_space<vmem>>, vector<1x128x128xbf16>
    %248 = vector.shape_cast %247 : vector<1x128x128xbf16> to vector<128x128xbf16>
    %cst_201 = arith.constant dense<0.000000e+00> : vector<8x128xf32>
    %249 = tpu.matmul %246, %248, %cst_201 {dimension_numbers = #tpu.dot_dimension_numbers<[1], [0], [0], [1], [0, 0, 1, 1], [], []>} : vector<8x128xbf16>, vector<128x128xbf16>, vector<8x128xf32> -> vector<8x128xf32>
    %250 = arith.addf %242, %249 : vector<8x128xf32>
    %c8_202 = arith.constant 8 : index
    %c0_203 = arith.constant 0 : index
    %c0_204 = arith.constant 0 : index
    %251 = vector.load %arg9[%c8_202, %c0_203, %c0_204] : memref<16x8x32xbf16, #tpu.memory_space<vmem>>, vector<1x8x32xbf16>
    %252 = vector.shape_cast %251 : vector<1x8x32xbf16> to vector<8x32xbf16>
    %cst_205 = arith.constant dense<0.000000e+00> : vector<8x128xf32>
    %253 = tpu.matmul %252, %187, %cst_205 {dimension_numbers = #tpu.dot_dimension_numbers<[1], [0], [0], [1], [0, 0, 1, 1], [], []>} : vector<8x32xbf16>, vector<32x128xbf16>, vector<8x128xf32> -> vector<8x128xf32>
    %254 = arith.truncf %253 : vector<8x128xf32> to vector<8x128xbf16>
    %c8_206 = arith.constant 8 : index
    %c0_207 = arith.constant 0 : index
    %c0_208 = arith.constant 0 : index
    %255 = vector.load %arg10[%c8_206, %c0_207, %c0_208] : memref<16x128x128xbf16, #tpu.memory_space<vmem>>, vector<1x128x128xbf16>
    %256 = vector.shape_cast %255 : vector<1x128x128xbf16> to vector<128x128xbf16>
    %cst_209 = arith.constant dense<0.000000e+00> : vector<8x128xf32>
    %257 = tpu.matmul %254, %256, %cst_209 {dimension_numbers = #tpu.dot_dimension_numbers<[1], [0], [0], [1], [0, 0, 1, 1], [], []>} : vector<8x128xbf16>, vector<128x128xbf16>, vector<8x128xf32> -> vector<8x128xf32>
    %258 = arith.addf %250, %257 : vector<8x128xf32>
    %c9_210 = arith.constant 9 : index
    %c0_211 = arith.constant 0 : index
    %c0_212 = arith.constant 0 : index
    %259 = vector.load %arg9[%c9_210, %c0_211, %c0_212] : memref<16x8x32xbf16, #tpu.memory_space<vmem>>, vector<1x8x32xbf16>
    %260 = vector.shape_cast %259 : vector<1x8x32xbf16> to vector<8x32xbf16>
    %cst_213 = arith.constant dense<0.000000e+00> : vector<8x128xf32>
    %261 = tpu.matmul %260, %187, %cst_213 {dimension_numbers = #tpu.dot_dimension_numbers<[1], [0], [0], [1], [0, 0, 1, 1], [], []>} : vector<8x32xbf16>, vector<32x128xbf16>, vector<8x128xf32> -> vector<8x128xf32>
    %262 = arith.truncf %261 : vector<8x128xf32> to vector<8x128xbf16>
    %c9_214 = arith.constant 9 : index
    %c0_215 = arith.constant 0 : index
    %c0_216 = arith.constant 0 : index
    %263 = vector.load %arg10[%c9_214, %c0_215, %c0_216] : memref<16x128x128xbf16, #tpu.memory_space<vmem>>, vector<1x128x128xbf16>
    %264 = vector.shape_cast %263 : vector<1x128x128xbf16> to vector<128x128xbf16>
    %cst_217 = arith.constant dense<0.000000e+00> : vector<8x128xf32>
    %265 = tpu.matmul %262, %264, %cst_217 {dimension_numbers = #tpu.dot_dimension_numbers<[1], [0], [0], [1], [0, 0, 1, 1], [], []>} : vector<8x128xbf16>, vector<128x128xbf16>, vector<8x128xf32> -> vector<8x128xf32>
    %266 = arith.addf %258, %265 : vector<8x128xf32>
    %c10_218 = arith.constant 10 : index
    %c0_219 = arith.constant 0 : index
    %c0_220 = arith.constant 0 : index
    %267 = vector.load %arg9[%c10_218, %c0_219, %c0_220] : memref<16x8x32xbf16, #tpu.memory_space<vmem>>, vector<1x8x32xbf16>
    %268 = vector.shape_cast %267 : vector<1x8x32xbf16> to vector<8x32xbf16>
    %cst_221 = arith.constant dense<0.000000e+00> : vector<8x128xf32>
    %269 = tpu.matmul %268, %187, %cst_221 {dimension_numbers = #tpu.dot_dimension_numbers<[1], [0], [0], [1], [0, 0, 1, 1], [], []>} : vector<8x32xbf16>, vector<32x128xbf16>, vector<8x128xf32> -> vector<8x128xf32>
    %270 = arith.truncf %269 : vector<8x128xf32> to vector<8x128xbf16>
    %c10_222 = arith.constant 10 : index
    %c0_223 = arith.constant 0 : index
    %c0_224 = arith.constant 0 : index
    %271 = vector.load %arg10[%c10_222, %c0_223, %c0_224] : memref<16x128x128xbf16, #tpu.memory_space<vmem>>, vector<1x128x128xbf16>
    %272 = vector.shape_cast %271 : vector<1x128x128xbf16> to vector<128x128xbf16>
    %cst_225 = arith.constant dense<0.000000e+00> : vector<8x128xf32>
    %273 = tpu.matmul %270, %272, %cst_225 {dimension_numbers = #tpu.dot_dimension_numbers<[1], [0], [0], [1], [0, 0, 1, 1], [], []>} : vector<8x128xbf16>, vector<128x128xbf16>, vector<8x128xf32> -> vector<8x128xf32>
    %274 = arith.addf %266, %273 : vector<8x128xf32>
    %c11_226 = arith.constant 11 : index
    %c0_227 = arith.constant 0 : index
    %c0_228 = arith.constant 0 : index
    %275 = vector.load %arg9[%c11_226, %c0_227, %c0_228] : memref<16x8x32xbf16, #tpu.memory_space<vmem>>, vector<1x8x32xbf16>
    %276 = vector.shape_cast %275 : vector<1x8x32xbf16> to vector<8x32xbf16>
    %cst_229 = arith.constant dense<0.000000e+00> : vector<8x128xf32>
    %277 = tpu.matmul %276, %187, %cst_229 {dimension_numbers = #tpu.dot_dimension_numbers<[1], [0], [0], [1], [0, 0, 1, 1], [], []>} : vector<8x32xbf16>, vector<32x128xbf16>, vector<8x128xf32> -> vector<8x128xf32>
    %278 = arith.truncf %277 : vector<8x128xf32> to vector<8x128xbf16>
    %c11_230 = arith.constant 11 : index
    %c0_231 = arith.constant 0 : index
    %c0_232 = arith.constant 0 : index
    %279 = vector.load %arg10[%c11_230, %c0_231, %c0_232] : memref<16x128x128xbf16, #tpu.memory_space<vmem>>, vector<1x128x128xbf16>
    %280 = vector.shape_cast %279 : vector<1x128x128xbf16> to vector<128x128xbf16>
    %cst_233 = arith.constant dense<0.000000e+00> : vector<8x128xf32>
    %281 = tpu.matmul %278, %280, %cst_233 {dimension_numbers = #tpu.dot_dimension_numbers<[1], [0], [0], [1], [0, 0, 1, 1], [], []>} : vector<8x128xbf16>, vector<128x128xbf16>, vector<8x128xf32> -> vector<8x128xf32>
    %282 = arith.addf %274, %281 : vector<8x128xf32>
    %c12_234 = arith.constant 12 : index
    %c0_235 = arith.constant 0 : index
    %c0_236 = arith.constant 0 : index
    %283 = vector.load %arg9[%c12_234, %c0_235, %c0_236] : memref<16x8x32xbf16, #tpu.memory_space<vmem>>, vector<1x8x32xbf16>
    %284 = vector.shape_cast %283 : vector<1x8x32xbf16> to vector<8x32xbf16>
    %cst_237 = arith.constant dense<0.000000e+00> : vector<8x128xf32>
    %285 = tpu.matmul %284, %187, %cst_237 {dimension_numbers = #tpu.dot_dimension_numbers<[1], [0], [0], [1], [0, 0, 1, 1], [], []>} : vector<8x32xbf16>, vector<32x128xbf16>, vector<8x128xf32> -> vector<8x128xf32>
    %286 = arith.truncf %285 : vector<8x128xf32> to vector<8x128xbf16>
    %c12_238 = arith.constant 12 : index
    %c0_239 = arith.constant 0 : index
    %c0_240 = arith.constant 0 : index
    %287 = vector.load %arg10[%c12_238, %c0_239, %c0_240] : memref<16x128x128xbf16, #tpu.memory_space<vmem>>, vector<1x128x128xbf16>
    %288 = vector.shape_cast %287 : vector<1x128x128xbf16> to vector<128x128xbf16>
    %cst_241 = arith.constant dense<0.000000e+00> : vector<8x128xf32>
    %289 = tpu.matmul %286, %288, %cst_241 {dimension_numbers = #tpu.dot_dimension_numbers<[1], [0], [0], [1], [0, 0, 1, 1], [], []>} : vector<8x128xbf16>, vector<128x128xbf16>, vector<8x128xf32> -> vector<8x128xf32>
    %290 = arith.addf %282, %289 : vector<8x128xf32>
    %c13_242 = arith.constant 13 : index
    %c0_243 = arith.constant 0 : index
    %c0_244 = arith.constant 0 : index
    %291 = vector.load %arg9[%c13_242, %c0_243, %c0_244] : memref<16x8x32xbf16, #tpu.memory_space<vmem>>, vector<1x8x32xbf16>
    %292 = vector.shape_cast %291 : vector<1x8x32xbf16> to vector<8x32xbf16>
    %cst_245 = arith.constant dense<0.000000e+00> : vector<8x128xf32>
    %293 = tpu.matmul %292, %187, %cst_245 {dimension_numbers = #tpu.dot_dimension_numbers<[1], [0], [0], [1], [0, 0, 1, 1], [], []>} : vector<8x32xbf16>, vector<32x128xbf16>, vector<8x128xf32> -> vector<8x128xf32>
    %294 = arith.truncf %293 : vector<8x128xf32> to vector<8x128xbf16>
    %c13_246 = arith.constant 13 : index
    %c0_247 = arith.constant 0 : index
    %c0_248 = arith.constant 0 : index
    %295 = vector.load %arg10[%c13_246, %c0_247, %c0_248] : memref<16x128x128xbf16, #tpu.memory_space<vmem>>, vector<1x128x128xbf16>
    %296 = vector.shape_cast %295 : vector<1x128x128xbf16> to vector<128x128xbf16>
    %cst_249 = arith.constant dense<0.000000e+00> : vector<8x128xf32>
    %297 = tpu.matmul %294, %296, %cst_249 {dimension_numbers = #tpu.dot_dimension_numbers<[1], [0], [0], [1], [0, 0, 1, 1], [], []>} : vector<8x128xbf16>, vector<128x128xbf16>, vector<8x128xf32> -> vector<8x128xf32>
    %298 = arith.addf %290, %297 : vector<8x128xf32>
    %c14_250 = arith.constant 14 : index
    %c0_251 = arith.constant 0 : index
    %c0_252 = arith.constant 0 : index
    %299 = vector.load %arg9[%c14_250, %c0_251, %c0_252] : memref<16x8x32xbf16, #tpu.memory_space<vmem>>, vector<1x8x32xbf16>
    %300 = vector.shape_cast %299 : vector<1x8x32xbf16> to vector<8x32xbf16>
    %cst_253 = arith.constant dense<0.000000e+00> : vector<8x128xf32>
    %301 = tpu.matmul %300, %187, %cst_253 {dimension_numbers = #tpu.dot_dimension_numbers<[1], [0], [0], [1], [0, 0, 1, 1], [], []>} : vector<8x32xbf16>, vector<32x128xbf16>, vector<8x128xf32> -> vector<8x128xf32>
    %302 = arith.truncf %301 : vector<8x128xf32> to vector<8x128xbf16>
    %c14_254 = arith.constant 14 : index
    %c0_255 = arith.constant 0 : index
    %c0_256 = arith.constant 0 : index
    %303 = vector.load %arg10[%c14_254, %c0_255, %c0_256] : memref<16x128x128xbf16, #tpu.memory_space<vmem>>, vector<1x128x128xbf16>
    %304 = vector.shape_cast %303 : vector<1x128x128xbf16> to vector<128x128xbf16>
    %cst_257 = arith.constant dense<0.000000e+00> : vector<8x128xf32>
    %305 = tpu.matmul %302, %304, %cst_257 {dimension_numbers = #tpu.dot_dimension_numbers<[1], [0], [0], [1], [0, 0, 1, 1], [], []>} : vector<8x128xbf16>, vector<128x128xbf16>, vector<8x128xf32> -> vector<8x128xf32>
    %306 = arith.addf %298, %305 : vector<8x128xf32>
    %c15_258 = arith.constant 15 : index
    %c0_259 = arith.constant 0 : index
    %c0_260 = arith.constant 0 : index
    %307 = vector.load %arg9[%c15_258, %c0_259, %c0_260] : memref<16x8x32xbf16, #tpu.memory_space<vmem>>, vector<1x8x32xbf16>
    %308 = vector.shape_cast %307 : vector<1x8x32xbf16> to vector<8x32xbf16>
    %cst_261 = arith.constant dense<0.000000e+00> : vector<8x128xf32>
    %309 = tpu.matmul %308, %187, %cst_261 {dimension_numbers = #tpu.dot_dimension_numbers<[1], [0], [0], [1], [0, 0, 1, 1], [], []>} : vector<8x32xbf16>, vector<32x128xbf16>, vector<8x128xf32> -> vector<8x128xf32>
    %310 = arith.truncf %309 : vector<8x128xf32> to vector<8x128xbf16>
    %c15_262 = arith.constant 15 : index
    %c0_263 = arith.constant 0 : index
    %c0_264 = arith.constant 0 : index
    %311 = vector.load %arg10[%c15_262, %c0_263, %c0_264] : memref<16x128x128xbf16, #tpu.memory_space<vmem>>, vector<1x128x128xbf16>
    %312 = vector.shape_cast %311 : vector<1x128x128xbf16> to vector<128x128xbf16>
    %cst_265 = arith.constant dense<0.000000e+00> : vector<8x128xf32>
    %313 = tpu.matmul %310, %312, %cst_265 {dimension_numbers = #tpu.dot_dimension_numbers<[1], [0], [0], [1], [0, 0, 1, 1], [], []>} : vector<8x128xbf16>, vector<128x128xbf16>, vector<8x128xf32> -> vector<8x128xf32>
    %314 = arith.addf %306, %313 : vector<8x128xf32>
    %c0_266 = arith.constant 0 : index
    %c0_267 = arith.constant 0 : index
    %315 = vector.load %arg11[%c0_266, %c0_267] : memref<1x128xf32, #tpu.memory_space<vmem>>, vector<1x128xf32>
    %316 = vector.broadcast %315 : vector<1x128xf32> to vector<8x128xf32>
    %317 = arith.addf %314, %316 : vector<8x128xf32>
    %318 = arith.negf %317 : vector<8x128xf32>
    %319 = math.exp %318 : vector<8x128xf32>
    %cst_268 = arith.constant 1.000000e+00 : f32
    %320 = vector.broadcast %cst_268 : f32 to vector<8x128xf32>
    %321 = arith.addf %320, %319 : vector<8x128xf32>
    %322 = arith.divf %320, %321 : vector<8x128xf32>
    %c0_269 = arith.constant 0 : index
    %c0_270 = arith.constant 0 : index
    %323 = vector.load %arg12[%c0_269, %c0_270] : memref<8x128xf32, #tpu.memory_space<vmem>>, vector<8x128xf32>
    tpu.vector_store %arg12[%c0_269, %c0_270], %322 {strides = array<i32>} : memref<8x128xf32, #tpu.memory_space<vmem>>, vector<8x128xf32>,
    return
  }
  func.func @transform_0(%arg0: i32) -> (i32, i32) {
    %c0_i32 = arith.constant 0 : i32
    %c0_i32_0 = arith.constant 0 : i32
    %c0_i32_1 = arith.constant 0 : i32
    return %c0_i32, %c0_i32_0 : i32, i32
  }
  func.func @transform_1(%arg0: i32) -> (i32, i32) {
    %c0_i32 = arith.constant 0 : i32
    %c0_i32_0 = arith.constant 0 : i32
    %c0_i32_1 = arith.constant 0 : i32
    return %c0_i32, %c0_i32_0 : i32, i32
  }
  func.func @transform_2(%arg0: i32) -> (i32, i32) {
    %c0_i32 = arith.constant 0 : i32
    %c0_i32_0 = arith.constant 0 : i32
    %c0_i32_1 = arith.constant 0 : i32
    return %c0_i32, %c0_i32_0 : i32, i32
  }
  func.func @transform_3(%arg0: i32) -> (i32, i32) {
    %c0_i32 = arith.constant 0 : i32
    %c0_i32_0 = arith.constant 0 : i32
    %c0_i32_1 = arith.constant 0 : i32
    return %c0_i32, %c0_i32_0 : i32, i32
  }
  func.func @transform_4(%arg0: i32) -> (i32, i32, i32) {
    %c0_i32 = arith.constant 0 : i32
    %c0_i32_0 = arith.constant 0 : i32
    %c0_i32_1 = arith.constant 0 : i32
    %c0_i32_2 = arith.constant 0 : i32
    return %c0_i32, %c0_i32_0, %c0_i32_1 : i32, i32, i32
  }
  func.func @transform_5(%arg0: i32) -> (i32, i32, i32) {
    %c0_i32 = arith.constant 0 : i32
    %c0_i32_0 = arith.constant 0 : i32
    %c0_i32_1 = arith.constant 0 : i32
    %c0_i32_2 = arith.constant 0 : i32
    return %c0_i32, %c0_i32_0, %c0_i32_1 : i32, i32, i32
  }
  func.func @transform_6(%arg0: i32) -> (i32, i32) {
    %c0_i32 = arith.constant 0 : i32
    %c0_i32_0 = arith.constant 0 : i32
    %c0_i32_1 = arith.constant 0 : i32
    return %c0_i32, %c0_i32_0 : i32, i32
  }
  func.func @transform_7(%arg0: i32) -> (i32, i32) {
    %c0_i32 = arith.constant 0 : i32
    %c0_i32_0 = arith.constant 0 : i32
    %c0_i32_1 = arith.constant 0 : i32
    return %c0_i32, %c0_i32_0 : i32, i32
  }
  func.func @transform_8(%arg0: i32) -> (i32, i32, i32) {
    %c0_i32 = arith.constant 0 : i32
    %c0_i32_0 = arith.constant 0 : i32
    %c0_i32_1 = arith.constant 0 : i32
    %c0_i32_2 = arith.constant 0 : i32
    return %c0_i32, %c0_i32_0, %c0_i32_1 : i32, i32, i32
  }
  func.func @transform_9(%arg0: i32) -> (i32, i32, i32) {
    %c0_i32 = arith.constant 0 : i32
    %c0_i32_0 = arith.constant 0 : i32
    %c0_i32_1 = arith.constant 0 : i32
    %c0_i32_2 = arith.constant 0 : i32
    return %c0_i32, %c0_i32_0, %c0_i32_1 : i32, i32, i32
  }
  func.func @transform_10(%arg0: i32) -> (i32, i32) {
    %c0_i32 = arith.constant 0 : i32
    %c0_i32_0 = arith.constant 0 : i32
    %c0_i32_1 = arith.constant 0 : i32
    return %c0_i32, %c0_i32_0 : i32, i32
  }
  func.func @transform_11(%arg0: i32) -> (i32, i32) {
    %c0_i32 = arith.constant 0 : i32
    %c0_i32_0 = arith.constant 0 : i32
    %c0_i32_1 = arith.constant 0 : i32
    return %c0_i32, %c0_i32_0 : i32, i32
  }
}

</mosaic_0001>

<llo_original>
// kernel: psgan_discriminator_forward.1
$region0: #{psgan_discriminator_forward.1}
  #allocation0 [shape = 'u32[]', space=smem, size = 0x4, offset = 0x4, fixed_abs, tag = 'smem constant byte address 0x4 - core index']
  #allocation1 [shape = 'u32[144,128]{1,0:T(1,128)}', space=vmem, size = 0x12000, scoped, tag = 'internal scratch']
  %s0 = inlined_call_operand.vmem [shape: bf16[128,128], index: 0, kind: input, shape index: {}]
  %s1 = inlined_call_operand.vmem [shape: bf16[128,128], index: 1, kind: input, shape index: {}]
  %s2 = inlined_call_operand.vmem [shape: f32[1,128], index: 2, kind: input, shape index: {}]
  %s3 = inlined_call_operand.vmem [shape: f32[1,128], index: 3, kind: input, shape index: {}]
  %s4 = inlined_call_operand.vmem [shape: bf16[16,32,128], index: 4, kind: input, shape index: {}]
  %s5 = inlined_call_operand.vmem [shape: bf16[16,128,128], index: 5, kind: input, shape index: {}]
  %s6 = inlined_call_operand.vmem [shape: f32[1,128], index: 6, kind: input, shape index: {}]
  %s7 = inlined_call_operand.vmem [shape: f32[1,128], index: 7, kind: input, shape index: {}]
  %s8 = inlined_call_operand.vmem [shape: bf16[16,8,32], index: 8, kind: input, shape index: {}]
  %s9 = inlined_call_operand.vmem [shape: bf16[16,128,128], index: 9, kind: input, shape index: {}]
  %s10 = inlined_call_operand.vmem [shape: f32[1,128], index: 10, kind: input, shape index: {}]
  %s11 = inlined_call_operand.vmem [shape: f32[8,128], index: 11, kind: output, shape index: {}]
  %s12 = sld [smem:[#allocation0]]
  $region54: #{psgan_discriminator_forward.1} parent=0
    _
  %s14 = ssub.s32 1, %s12
  %s15 = scalar_select 0, %s14, %s12
  // Predicated region
  $region2: #{psgan_discriminator_forward.1} parent=0 // pred_check
    _
  $region3: #{psgan_discriminator_forward.1} parent=0 // pred_check_branch
    %17 = sbr.rel (0) target = $region5
  $region4: #{psgan_discriminator_forward.1} parent=0 // pred_region
    _
  $region5: #{psgan_discriminator_forward.1} parent=0 // pred_fallthru
    _
  // Predicated region
  $region6: #{psgan_discriminator_forward.1} parent=0 // pred_check
    _
  $region7: #{psgan_discriminator_forward.1} parent=0 // pred_check_branch
    %19 = sbr.rel (0) target = $region9
  $region8: #{psgan_discriminator_forward.1} parent=0 // pred_region
    _
  $region9: #{psgan_discriminator_forward.1} parent=0 // pred_fallthru
    _
  // Predicated region
  $region10: #{psgan_discriminator_forward.1} parent=0 // pred_check
    _
  $region11: #{psgan_discriminator_forward.1} parent=0 // pred_check_branch
    %21 = sbr.rel (0) target = $region13
  $region12: #{psgan_discriminator_forward.1} parent=0 // pred_region
    _
  $region13: #{psgan_discriminator_forward.1} parent=0 // pred_fallthru
    _
  // Predicated region
  $region14: #{psgan_discriminator_forward.1} parent=0 // pred_check
    _
  $region15: #{psgan_discriminator_forward.1} parent=0 // pred_check_branch
    %23 = sbr.rel (0) target = $region17
  $region16: #{psgan_discriminator_forward.1} parent=0 // pred_region
    _
  $region17: #{psgan_discriminator_forward.1} parent=0 // pred_fallthru
    _
  // Predicated region
  $region18: #{psgan_discriminator_forward.1} parent=0 // pred_check
    _
  $region19: #{psgan_discriminator_forward.1} parent=0 // pred_check_branch
    %25 = sbr.rel (0) target = $region21
  $region20: #{psgan_discriminator_forward.1} parent=0 // pred_region
    _
  $region21: #{psgan_discriminator_forward.1} parent=0 // pred_fallthru
    _
  // Predicated region
  $region22: #{psgan_discriminator_forward.1} parent=0 // pred_check
    _
  $region23: #{psgan_discriminator_forward.1} parent=0 // pred_check_branch
    %27 = sbr.rel (0) target = $region25
  $region24: #{psgan_discriminator_forward.1} parent=0 // pred_region
    _
  $region25: #{psgan_discriminator_forward.1} parent=0 // pred_fallthru
    _
  // Predicated region
  $region26: #{psgan_discriminator_forward.1} parent=0 // pred_check
    _
  $region27: #{psgan_discriminator_forward.1} parent=0 // pred_check_branch
    %29 = sbr.rel (0) target = $region29
  $region28: #{psgan_discriminator_forward.1} parent=0 // pred_region
    _
  $region29: #{psgan_discriminator_forward.1} parent=0 // pred_fallthru
    _
  // Predicated region
  $region30: #{psgan_discriminator_forward.1} parent=0 // pred_check
    _
  $region31: #{psgan_discriminator_forward.1} parent=0 // pred_check_branch
    %31 = sbr.rel (0) target = $region33
  $region32: #{psgan_discriminator_forward.1} parent=0 // pred_region
    _
  $region33: #{psgan_discriminator_forward.1} parent=0 // pred_fallthru
    _
  // Predicated region
  $region34: #{psgan_discriminator_forward.1} parent=0 // pred_check
    _
  $region35: #{psgan_discriminator_forward.1} parent=0 // pred_check_branch
    %33 = sbr.rel (0) target = $region37
  $region36: #{psgan_discriminator_forward.1} parent=0 // pred_region
    _
  $region37: #{psgan_discriminator_forward.1} parent=0 // pred_fallthru
    _
  // Predicated region
  $region38: #{psgan_discriminator_forward.1} parent=0 // pred_check
    _
  $region39: #{psgan_discriminator_forward.1} parent=0 // pred_check_branch
    %35 = sbr.rel (0) target = $region41
  $region40: #{psgan_discriminator_forward.1} parent=0 // pred_region
    _
  $region41: #{psgan_discriminator_forward.1} parent=0 // pred_fallthru
    _
  // Predicated region
  $region42: #{psgan_discriminator_forward.1} parent=0 // pred_check
    _
  $region43: #{psgan_discriminator_forward.1} parent=0 // pred_check_branch
    %37 = sbr.rel (0) target = $region45
  $region44: #{psgan_discriminator_forward.1} parent=0 // pred_region
    _
  $region45: #{psgan_discriminator_forward.1} parent=0 // pred_fallthru
    _
  %v39 = vld [vmem:[%s0] sm:$0xf]
  %v40 = vld [vmem:[%s0 + $0x4] sm:$0xf]
  %v41 = vld [vmem:[%s0 + $0x8] sm:$0xf]
  %v42 = vld [vmem:[%s0 + $0xc] sm:$0xf]
  %v43 = vld [vmem:[%s0 + $0x10] sm:$0xf]
  %v44 = vld [vmem:[%s0 + $0x14] sm:$0xf]
  %v45 = vld [vmem:[%s0 + $0x18] sm:$0xf]
  %v46 = vld [vmem:[%s0 + $0x1c] sm:$0xf]
  %v47 = vld [vmem:[%s0 + $0x20] sm:$0xf]
  %v48 = vld [vmem:[%s0 + $0x24] sm:$0xf]
  %v49 = vld [vmem:[%s0 + $0x28] sm:$0xf]
  %v50 = vld [vmem:[%s0 + $0x2c] sm:$0xf]
  %v51 = vld [vmem:[%s0 + $0x30] sm:$0xf]
  %v52 = vld [vmem:[%s0 + $0x34] sm:$0xf]
  %v53 = vld [vmem:[%s0 + $0x38] sm:$0xf]
  %v54 = vld [vmem:[%s0 + $0x3c] sm:$0xf]
  %v55 = vld [vmem:[%s1] sm:$0xf]
  %v56 = vld [vmem:[%s1 + $0x4] sm:$0xf]
  %v57 = vld [vmem:[%s1 + $0x8] sm:$0xf]
  %v58 = vld [vmem:[%s1 + $0xc] sm:$0xf]
  %v59 = vld [vmem:[%s1 + $0x10] sm:$0xf]
  %v60 = vld [vmem:[%s1 + $0x14] sm:$0xf]
  %v61 = vld [vmem:[%s1 + $0x18] sm:$0xf]
  %v62 = vld [vmem:[%s1 + $0x1c] sm:$0xf]
  %v63 = vld [vmem:[%s1 + $0x20] sm:$0xf]
  %v64 = vld [vmem:[%s1 + $0x24] sm:$0xf]
  %v65 = vld [vmem:[%s1 + $0x28] sm:$0xf]
  %v66 = vld [vmem:[%s1 + $0x2c] sm:$0xf]
  %v67 = vld [vmem:[%s1 + $0x30] sm:$0xf]
  %v68 = vld [vmem:[%s1 + $0x34] sm:$0xf]
  %v69 = vld [vmem:[%s1 + $0x38] sm:$0xf]
  %v70 = vld [vmem:[%s1 + $0x3c] sm:$0xf]
  %v87 = vunpack.c.l.b16 %v39
  %v88 = vunpack.c.l.b16 %v40
  %v89 = vunpack.c.l.b16 %v41
  %v90 = vunpack.c.l.b16 %v42
  %v91 = vunpack.c.l.b16 %v43
  %v92 = vunpack.c.l.b16 %v44
  %v93 = vunpack.c.l.b16 %v45
  %v94 = vunpack.c.l.b16 %v46
  %v95 = vunpack.c.l.b16 %v47
  %v96 = vunpack.c.l.b16 %v48
  %v97 = vunpack.c.l.b16 %v49
  %v98 = vunpack.c.l.b16 %v50
  %v99 = vunpack.c.l.b16 %v51
  %v100 = vunpack.c.l.b16 %v52
  %v101 = vunpack.c.l.b16 %v53
  %v102 = vunpack.c.l.b16 %v54
  %v103 = vpack.c.b16 %v88, %v87
  %v104 = vpack.c.b16 %v90, %v89
  %v105 = vpack.c.b16 %v92, %v91
  %v106 = vpack.c.b16 %v94, %v93
  %v107 = vpack.c.b16 %v96, %v95
  %v108 = vpack.c.b16 %v98, %v97
  %v109 = vpack.c.b16 %v100, %v99
  %v110 = vpack.c.b16 %v102, %v101
  %v135 = vunpack.c.l.b16 %v55
  %v136 = vunpack.c.l.b16 %v56
  %v137 = vunpack.c.l.b16 %v57
  %v138 = vunpack.c.l.b16 %v58
  %v139 = vunpack.c.l.b16 %v59
  %v140 = vunpack.c.l.b16 %v60
  %v141 = vunpack.c.l.b16 %v61
  %v142 = vunpack.c.l.b16 %v62
  %v143 = vunpack.c.l.b16 %v63
  %v144 = vunpack.c.l.b16 %v64
  %v145 = vunpack.c.l.b16 %v65
  %v146 = vunpack.c.l.b16 %v66
  %v147 = vunpack.c.l.b16 %v67
  %v148 = vunpack.c.l.b16 %v68
  %v149 = vunpack.c.l.b16 %v69
  %v150 = vunpack.c.l.b16 %v70
  %v151 = vpack.c.b16 %v136, %v135
  %v152 = vpack.c.b16 %v138, %v137
  %v153 = vpack.c.b16 %v140, %v139
  %v154 = vpack.c.b16 %v142, %v141
  %v155 = vpack.c.b16 %v144, %v143
  %v156 = vpack.c.b16 %v146, %v145
  %v157 = vpack.c.b16 %v148, %v147
  %v158 = vpack.c.b16 %v150, %v149
  %167 = vmatprep.subr.bf16.mxu0 0
  %168 = vmatpush1.bf16.msra.mxu0 %v158
  %169 = vmatprep.subr.bf16.mxu0 0
  %170 = vmatpush1.bf16.msra.mxu0 %v157
  %171 = vmatprep.subr.bf16.mxu0 0
  %172 = vmatpush1.bf16.msra.mxu0 %v156
  %173 = vmatprep.subr.bf16.mxu0 0
  %174 = vmatpush1.bf16.msra.mxu0 %v155
  %175 = vmatprep.subr.bf16.mxu0 0
  %176 = vmatpush1.bf16.msra.mxu0 %v154
  %177 = vmatprep.subr.bf16.mxu0 0
  %178 = vmatpush1.bf16.msra.mxu0 %v153
  %179 = vmatprep.subr.bf16.mxu0 0
  %180 = vmatpush1.bf16.msra.mxu0 %v152
  %181 = vmatprep.subr.bf16.mxu0 0
  %182 = vmatpush1.bf16.msra.mxu0 %v151
  %183 = vmatprep.subr.bf16.mxu0 0
  %184 = vmatpush2.bf16.msra.mxu0 0
  %185 = vmatprep.subr.bf16.mxu0 0
  %186 = vmatpush2.bf16.msra.mxu0 0
  %187 = vmatprep.subr.bf16.mxu0 0
  %188 = vmatpush2.bf16.msra.mxu0 0
  %189 = vmatprep.subr.bf16.mxu0 0
  %190 = vmatpush2.bf16.msra.mxu0 0
  %191 = vmatprep.subr.bf16.mxu0 0
  %192 = vmatpush2.bf16.msra.mxu0 0
  %193 = vmatprep.subr.bf16.mxu0 0
  %194 = vmatpush2.bf16.msra.mxu0 0
  %195 = vmatprep.subr.bf16.mxu0 0
  %196 = vmatpush2.bf16.msra.mxu0 0
  %197 = vmatprep.subr.bf16.mxu0 0
  %198 = vmatpush2.bf16.msra.mxu0 0
  %199 = vmatprep.mubr.bf16.mxu0 0
  %200 = vmatmul.mubr.bf16.gmra.mxu0 %v103
  %v201 = vpop.f32.mrf.mxu0
  %v202 = vadd.f32 0.0, %v201
  %v203 = vpop.f32.mrf.mxu0
  %v204 = vpop.f32.mrf.mxu0
  %v205 = vadd.f32 0.0, %v204
  %v206 = vpop.f32.mrf.mxu0
  %207 = vmatprep.mubr.bf16.mxu0 0
  %208 = vmatmul.mubr.bf16.gmra.mxu0 %v104
  %v209 = vpop.f32.mrf.mxu0
  %v210 = vadd.f32 0.0, %v209
  %v211 = vpop.f32.mrf.mxu0
  %v212 = vpop.f32.mrf.mxu0
  %v213 = vadd.f32 0.0, %v212
  %v214 = vpop.f32.mrf.mxu0
  %215 = vmatprep.mubr.bf16.mxu0 0
  %216 = vmatmul.mubr.bf16.gmra.mxu0 %v105
  %v217 = vpop.f32.mrf.mxu0
  %v218 = vadd.f32 0.0, %v217
  %v219 = vpop.f32.mrf.mxu0
  %v220 = vpop.f32.mrf.mxu0
  %v221 = vadd.f32 0.0, %v220
  %v222 = vpop.f32.mrf.mxu0
  %223 = vmatprep.mubr.bf16.mxu0 0
  %224 = vmatmul.mubr.bf16.gmra.mxu0 %v106
  %v225 = vpop.f32.mrf.mxu0
  %v226 = vadd.f32 0.0, %v225
  %v227 = vpop.f32.mrf.mxu0
  %v228 = vpop.f32.mrf.mxu0
  %v229 = vadd.f32 0.0, %v228
  %v230 = vpop.f32.mrf.mxu0
  %231 = vmatprep.mubr.bf16.mxu0 0
  %232 = vmatmul.mubr.bf16.gmra.mxu0 %v107
  %v233 = vpop.f32.mrf.mxu0
  %v234 = vadd.f32 0.0, %v233
  %v235 = vpop.f32.mrf.mxu0
  %v236 = vpop.f32.mrf.mxu0
  %v237 = vadd.f32 0.0, %v236
  %v238 = vpop.f32.mrf.mxu0
  %239 = vmatprep.mubr.bf16.mxu0 0
  %240 = vmatmul.mubr.bf16.gmra.mxu0 %v108
  %v241 = vpop.f32.mrf.mxu0
  %v242 = vadd.f32 0.0, %v241
  %v243 = vpop.f32.mrf.mxu0
  %v244 = vpop.f32.mrf.mxu0
  %v245 = vadd.f32 0.0, %v244
  %v246 = vpop.f32.mrf.mxu0
  %247 = vmatprep.mubr.bf16.mxu0 0
  %248 = vmatmul.mubr.bf16.gmra.mxu0 %v109
  %v249 = vpop.f32.mrf.mxu0
  %v250 = vadd.f32 0.0, %v249
  %v251 = vpop.f32.mrf.mxu0
  %v252 = vpop.f32.mrf.mxu0
  %v253 = vadd.f32 0.0, %v252
  %v254 = vpop.f32.mrf.mxu0
  %255 = vmatprep.mubr.bf16.mxu0 0
  %256 = vmatmul.mubr.bf16.gmra.mxu0 %v110
  %v257 = vpop.f32.mrf.mxu0
  %v258 = vadd.f32 0.0, %v257
  %v259 = vpop.f32.mrf.mxu0
  %v260 = vpop.f32.mrf.mxu0
  %v261 = vadd.f32 0.0, %v260
  %v262 = vpop.f32.mrf.mxu0
  %263 = vdwg.mxu0
  %v264 = vld [vmem:[%s2] sm:$0x1]
  %v265 = vld [vmem:[%s3] sm:$0x1]
  %v266 = vadd.f32 %v202, %v205
  %v267 = vadd.f32 %v266, %v210
  %v268 = vadd.f32 %v267, %v213
  %v269 = vadd.f32 %v268, %v218
  %v270 = vadd.f32 %v269, %v221
  %v271 = vadd.f32 %v270, %v226
  %v272 = vadd.f32 %v271, %v229
  %v273 = vadd.f32 %v272, %v234
  %v274 = vadd.f32 %v273, %v237
  %v275 = vadd.f32 %v274, %v242
  %v276 = vadd.f32 %v275, %v245
  %v277 = vadd.f32 %v276, %v250
  %v278 = vadd.f32 %v277, %v253
  %v279 = vadd.f32 %v278, %v258
  %v280 = vadd.f32 %v279, %v261
  %v281 = vrot.slane %v280, 4
  %v282 = vadd.f32 %v280, %v281
  %v283 = vrot.slane %v282, 2
  %v284 = vadd.f32 %v282, %v283
  %v285 = vrot.slane %v284, 1
  %v286 = vadd.f32 %v284, %v285
  %v287 = vrcp.pop 128.0
  %v288 = vmul.f32 %v286, %v287
  %v289 = vsub.f32 %v202, %v288
  %v290 = vsub.f32 %v205, %v288
  %v291 = vsub.f32 %v210, %v288
  %v292 = vsub.f32 %v213, %v288
  %v293 = vsub.f32 %v218, %v288
  %v294 = vsub.f32 %v221, %v288
  %v295 = vsub.f32 %v226, %v288
  %v296 = vsub.f32 %v229, %v288
  %v297 = vsub.f32 %v234, %v288
  %v298 = vsub.f32 %v237, %v288
  %v299 = vsub.f32 %v242, %v288
  %v300 = vsub.f32 %v245, %v288
  %v301 = vsub.f32 %v250, %v288
  %v302 = vsub.f32 %v253, %v288
  %v303 = vsub.f32 %v258, %v288
  %v304 = vsub.f32 %v261, %v288
  %v305 = vmul.f32 %v289, %v289
  %v306 = vmul.f32 %v290, %v290
  %v307 = vmul.f32 %v291, %v291
  %v308 = vmul.f32 %v292, %v292
  %v309 = vmul.f32 %v293, %v293
  %v310 = vmul.f32 %v294, %v294
  %v311 = vmul.f32 %v295, %v295
  %v312 = vmul.f32 %v296, %v296
  %v313 = vmul.f32 %v297, %v297
  %v314 = vmul.f32 %v298, %v298
  %v315 = vmul.f32 %v299, %v299
  %v316 = vmul.f32 %v300, %v300
  %v317 = vmul.f32 %v301, %v301
  %v318 = vmul.f32 %v302, %v302
  %v319 = vmul.f32 %v303, %v303
  %v320 = vmul.f32 %v304, %v304
  %v321 = vadd.f32 %v305, %v306
  %v322 = vadd.f32 %v321, %v307
  %v323 = vadd.f32 %v322, %v308
  %v324 = vadd.f32 %v323, %v309
  %v325 = vadd.f32 %v324, %v310
  %v326 = vadd.f32 %v325, %v311
  %v327 = vadd.f32 %v326, %v312
  %v328 = vadd.f32 %v327, %v313
  %v329 = vadd.f32 %v328, %v314
  %v330 = vadd.f32 %v329, %v315
  %v331 = vadd.f32 %v330, %v316
  %v332 = vadd.f32 %v331, %v317
  %v333 = vadd.f32 %v332, %v318
  %v334 = vadd.f32 %v333, %v319
  %v335 = vadd.f32 %v334, %v320
  %v336 = vrot.slane %v335, 4
  %v337 = vadd.f32 %v335, %v336
  %v338 = vrot.slane %v337, 2
  %v339 = vadd.f32 %v337, %v338
  %v340 = vrot.slane %v339, 1
  %v341 = vadd.f32 %v339, %v340
  %v342 = vmul.f32 %v341, %v287
  %v343 = vadd.f32 %v342, 1e-05
  %v344 = vrsqrt.pop %v343
  %v345 = vmul.f32 %v264, %v344
  %v346 = vmul.f32 %v288, %v345
  %v347 = vsub.f32 %v265, %v346
  %v349 = vlaneseq
  %v350 = vshrl.u32 %v349, 7
  %v351 = vsub.s32 0, %v350
  %v352 = vrot.slane %v345, %v351
  %v354 = vmul.f32 %v202, %v352
  %v355 = vmul.f32 %v205, %v352
  %v356 = vmul.f32 %v210, %v352
  %v357 = vmul.f32 %v213, %v352
  %v358 = vmul.f32 %v218, %v352
  %v359 = vmul.f32 %v221, %v352
  %v360 = vmul.f32 %v226, %v352
  %v361 = vmul.f32 %v229, %v352
  %v362 = vmul.f32 %v234, %v352
  %v363 = vmul.f32 %v237, %v352
  %v364 = vmul.f32 %v242, %v352
  %v365 = vmul.f32 %v245, %v352
  %v366 = vmul.f32 %v250, %v352
  %v367 = vmul.f32 %v253, %v352
  %v368 = vmul.f32 %v258, %v352
  %v369 = vmul.f32 %v261, %v352
  %v371 = vlaneseq
  %v372 = vshrl.u32 %v371, 7
  %v373 = vsub.s32 0, %v372
  %v374 = vrot.slane %v347, %v373
  %v376 = vadd.f32 %v354, %v374
  %v377 = vadd.f32 %v355, %v374
  %v378 = vadd.f32 %v356, %v374
  %v379 = vadd.f32 %v357, %v374
  %v380 = vadd.f32 %v358, %v374
  %v381 = vadd.f32 %v359, %v374
  %v382 = vadd.f32 %v360, %v374
  %v383 = vadd.f32 %v361, %v374
  %v384 = vadd.f32 %v362, %v374
  %v385 = vadd.f32 %v363, %v374
  %v386 = vadd.f32 %v364, %v374
  %v387 = vadd.f32 %v365, %v374
  %v388 = vadd.f32 %v366, %v374
  %v389 = vadd.f32 %v367, %v374
  %v390 = vadd.f32 %v368, %v374
  %v391 = vadd.f32 %v369, %v374
  %vm392 = vcmp.ge.f32.partialorder %v376, 0.0
  %vm393 = vcmp.ge.f32.partialorder %v377, 0.0
  %vm394 = vcmp.ge.f32.partialorder %v378, 0.0
  %vm395 = vcmp.ge.f32.partialorder %v379, 0.0
  %vm396 = vcmp.ge.f32.partialorder %v380, 0.0
  %vm397 = vcmp.ge.f32.partialorder %v381, 0.0
  %vm398 = vcmp.ge.f32.partialorder %v382, 0.0
  %vm399 = vcmp.ge.f32.partialorder %v383, 0.0
  %vm400 = vcmp.ge.f32.partialorder %v384, 0.0
  %vm401 = vcmp.ge.f32.partialorder %v385, 0.0
  %vm402 = vcmp.ge.f32.partialorder %v386, 0.0
  %vm403 = vcmp.ge.f32.partialorder %v387, 0.0
  %vm404 = vcmp.ge.f32.partialorder %v388, 0.0
  %vm405 = vcmp.ge.f32.partialorder %v389, 0.0
  %vm406 = vcmp.ge.f32.partialorder %v390, 0.0
  %vm407 = vcmp.ge.f32.partialorder %v391, 0.0
  %v408 = vmul.f32 %v376, 0.2
  %v409 = vmul.f32 %v377, 0.2
  %v410 = vmul.f32 %v378, 0.2
  %v411 = vmul.f32 %v379, 0.2
  %v412 = vmul.f32 %v380, 0.2
  %v413 = vmul.f32 %v381, 0.2
  %v414 = vmul.f32 %v382, 0.2
  %v415 = vmul.f32 %v383, 0.2
  %v416 = vmul.f32 %v384, 0.2
  %v417 = vmul.f32 %v385, 0.2
  %v418 = vmul.f32 %v386, 0.2
  %v419 = vmul.f32 %v387, 0.2
  %v420 = vmul.f32 %v388, 0.2
  %v421 = vmul.f32 %v389, 0.2
  %v422 = vmul.f32 %v390, 0.2
  %v423 = vmul.f32 %v391, 0.2
  %v424 = vsel %vm392, %v376, %v408
  %v425 = vsel %vm393, %v377, %v409
  %v426 = vsel %vm394, %v378, %v410
  %v427 = vsel %vm395, %v379, %v411
  %v428 = vsel %vm396, %v380, %v412
  %v429 = vsel %vm397, %v381, %v413
  %v430 = vsel %vm398, %v382, %v414
  %v431 = vsel %vm399, %v383, %v415
  %v432 = vsel %vm400, %v384, %v416
  %v433 = vsel %vm401, %v385, %v417
  %v434 = vsel %vm402, %v386, %v418
  %v435 = vsel %vm403, %v387, %v419
  %v436 = vsel %vm404, %v388, %v420
  %v437 = vsel %vm405, %v389, %v421
  %v438 = vsel %vm406, %v390, %v422
  %v439 = vsel %vm407, %v391, %v423
  %v440 = vpack.c.bf16 %v425, %v424
  %v441 = vpack.c.bf16 %v427, %v426
  %v442 = vpack.c.bf16 %v429, %v428
  %v443 = vpack.c.bf16 %v431, %v430
  %v444 = vpack.c.bf16 %v433, %v432
  %v445 = vpack.c.bf16 %v435, %v434
  %v446 = vpack.c.bf16 %v437, %v436
  %v447 = vpack.c.bf16 %v439, %v438
  %v448 = vld [vmem:[%s4] sm:$0xf]
  %v449 = vld [vmem:[%s4 + $0x4] sm:$0xf]
  %v450 = vld [vmem:[%s4 + $0x8] sm:$0xf]
  %v451 = vld [vmem:[%s4 + $0xc] sm:$0xf]
  %v456 = vunpack.c.l.b16 %v448
  %v457 = vunpack.c.l.b16 %v449
  %v458 = vunpack.c.l.b16 %v450
  %v459 = vunpack.c.l.b16 %v451
  %v460 = vpack.c.b16 %v457, %v456
  %v461 = vpack.c.b16 %v459, %v458
  %464 = vmatprep.subr.bf16.mxu0 0
  %465 = vmatpush1.bf16.msra.mxu0 %v447
  %466 = vmatprep.subr.bf16.mxu0 0
  %467 = vmatpush1.bf16.msra.mxu0 %v446
  %468 = vmatprep.subr.bf16.mxu0 0
  %469 = vmatpush1.bf16.msra.mxu0 %v445
  %470 = vmatprep.subr.bf16.mxu0 0
  %471 = vmatpush1.bf16.msra.mxu0 %v444
  %472 = vmatprep.subr.bf16.mxu0 0
  %473 = vmatpush1.bf16.msra.mxu0 %v443
  %474 = vmatprep.subr.bf16.mxu0 0
  %475 = vmatpush1.bf16.msra.mxu0 %v442
  %476 = vmatprep.subr.bf16.mxu0 0
  %477 = vmatpush1.bf16.msra.mxu0 %v441
  %478 = vmatprep.subr.bf16.mxu0 0
  %479 = vmatpush1.bf16.msra.mxu0 %v440
  %480 = vmatprep.subr.bf16.mxu0 0
  %481 = vmatpush2.bf16.msra.mxu0 0
  %482 = vmatprep.subr.bf16.mxu0 0
  %483 = vmatpush2.bf16.msra.mxu0 0
  %484 = vmatprep.subr.bf16.mxu0 0
  %485 = vmatpush2.bf16.msra.mxu0 0
  %486 = vmatprep.subr.bf16.mxu0 0
  %487 = vmatpush2.bf16.msra.mxu0 0
  %488 = vmatprep.subr.bf16.mxu0 0
  %489 = vmatpush2.bf16.msra.mxu0 0
  %490 = vmatprep.subr.bf16.mxu0 0
  %491 = vmatpush2.bf16.msra.mxu0 0
  %492 = vmatprep.subr.bf16.mxu0 0
  %493 = vmatpush2.bf16.msra.mxu0 0
  %494 = vmatprep.subr.bf16.mxu0 0
  %495 = vmatpush2.bf16.msra.mxu0 0
  %496 = vmatprep.mubr.bf16.mxu0 0
  %497 = vmatmul.mubr.bf16.gmra.mxu0 %v460
  %v498 = vpop.f32.mrf.mxu0
  %v499 = vadd.f32 0.0, %v498
  %v500 = vpop.f32.mrf.mxu0
  %v501 = vpop.f32.mrf.mxu0
  %v502 = vadd.f32 0.0, %v501
  %v503 = vpop.f32.mrf.mxu0
  %504 = vmatprep.mubr.bf16.mxu0 0
  %505 = vmatmul.mubr.bf16.gmra.mxu0 %v461
  %v506 = vpop.f32.mrf.mxu0
  %v507 = vadd.f32 0.0, %v506
  %v508 = vpop.f32.mrf.mxu0
  %v509 = vpop.f32.mrf.mxu0
  %v510 = vadd.f32 0.0, %v509
  %v511 = vpop.f32.mrf.mxu0
  %512 = vdwg.mxu0
  %v513 = vpack.c.bf16 %v502, %v499
  %v514 = vpack.c.bf16 %v510, %v507
  %v515 = vld [vmem:[%s5] sm:$0xf]
  %v516 = vld [vmem:[%s5 + $0x4] sm:$0xf]
  %v517 = vld [vmem:[%s5 + $0x8] sm:$0xf]
  %v518 = vld [vmem:[%s5 + $0xc] sm:$0xf]
  %v519 = vld [vmem:[%s5 + $0x10] sm:$0xf]
  %v520 = vld [vmem:[%s5 + $0x14] sm:$0xf]
  %v521 = vld [vmem:[%s5 + $0x18] sm:$0xf]
  %v522 = vld [vmem:[%s5 + $0x1c] sm:$0xf]
  %v523 = vld [vmem:[%s5 + $0x20] sm:$0xf]
  %v524 = vld [vmem:[%s5 + $0x24] sm:$0xf]
  %v525 = vld [vmem:[%s5 + $0x28] sm:$0xf]
  %v526 = vld [vmem:[%s5 + $0x2c] sm:$0xf]
  %v527 = vld [vmem:[%s5 + $0x30] sm:$0xf]
  %v528 = vld [vmem:[%s5 + $0x34] sm:$0xf]
  %v529 = vld [vmem:[%s5 + $0x38] sm:$0xf]
  %v530 = vld [vmem:[%s5 + $0x3c] sm:$0xf]
  %s531 = scalar_lea.vmem %s4, 16
  %v532 = vld [vmem:[%s531] sm:$0xf]
  %v533 = vld [vmem:[%s531 + $0x4] sm:$0xf]
  %v534 = vld [vmem:[%s531 + $0x8] sm:$0xf]
  %v535 = vld [vmem:[%s531 + $0xc] sm:$0xf]
  %v540 = vunpack.c.l.b16 %v532
  %v541 = vunpack.c.l.b16 %v533
  %v542 = vunpack.c.l.b16 %v534
  %v543 = vunpack.c.l.b16 %v535
  %v544 = vpack.c.b16 %v541, %v540
  %v545 = vpack.c.b16 %v543, %v542
  %548 = vmatprep.subr.bf16.mxu0 0
  %549 = vmatpush1.bf16.msra.mxu0 %v447
  %550 = vmatprep.subr.bf16.mxu0 0
  %551 = vmatpush1.bf16.msra.mxu0 %v446
  %552 = vmatprep.subr.bf16.mxu0 0
  %553 = vmatpush1.bf16.msra.mxu0 %v445
  %554 = vmatprep.subr.bf16.mxu0 0
  %555 = vmatpush1.bf16.msra.mxu0 %v444
  %556 = vmatprep.subr.bf16.mxu0 0
  %557 = vmatpush1.bf16.msra.mxu0 %v443
  %558 = vmatprep.subr.bf16.mxu0 0
  %559 = vmatpush1.bf16.msra.mxu0 %v442
  %560 = vmatprep.subr.bf16.mxu0 0
  %561 = vmatpush1.bf16.msra.mxu0 %v441
  %562 = vmatprep.subr.bf16.mxu0 0
  %563 = vmatpush1.bf16.msra.mxu0 %v440
  %564 = vmatprep.subr.bf16.mxu0 0
  %565 = vmatpush2.bf16.msra.mxu0 0
  %566 = vmatprep.subr.bf16.mxu0 0
  %567 = vmatpush2.bf16.msra.mxu0 0
  %568 = vmatprep.subr.bf16.mxu0 0
  %569 = vmatpush2.bf16.msra.mxu0 0
  %570 = vmatprep.subr.bf16.mxu0 0
  %571 = vmatpush2.bf16.msra.mxu0 0
  %572 = vmatprep.subr.bf16.mxu0 0
  %573 = vmatpush2.bf16.msra.mxu0 0
  %574 = vmatprep.subr.bf16.mxu0 0
  %575 = vmatpush2.bf16.msra.mxu0 0
  %576 = vmatprep.subr.bf16.mxu0 0
  %577 = vmatpush2.bf16.msra.mxu0 0
  %578 = vmatprep.subr.bf16.mxu0 0
  %579 = vmatpush2.bf16.msra.mxu0 0
  %580 = vmatprep.mubr.bf16.mxu0 0
  %581 = vmatmul.mubr.bf16.gmra.mxu0 %v544
  %v582 = vpop.f32.mrf.mxu0
  %v583 = vadd.f32 0.0, %v582
  %v584 = vpop.f32.mrf.mxu0
  %v585 = vpop.f32.mrf.mxu0
  %v586 = vadd.f32 0.0, %v585
  %v587 = vpop.f32.mrf.mxu0
  %588 = vmatprep.mubr.bf16.mxu0 0
  %589 = vmatmul.mubr.bf16.gmra.mxu0 %v545
  %v590 = vpop.f32.mrf.mxu0
  %v591 = vadd.f32 0.0, %v590
  %v592 = vpop.f32.mrf.mxu0
  %v593 = vpop.f32.mrf.mxu0
  %v594 = vadd.f32 0.0, %v593
  %v595 = vpop.f32.mrf.mxu0
  %596 = vdwg.mxu0
  %v597 = vpack.c.bf16 %v586, %v583
  %v598 = vpack.c.bf16 %v594, %v591
  %s599 = scalar_lea.vmem %s5, 64
  %v600 = vld [vmem:[%s599] sm:$0xf]
  %v601 = vld [vmem:[%s599 + $0x4] sm:$0xf]
  %v602 = vld [vmem:[%s599 + $0x8] sm:$0xf]
  %v603 = vld [vmem:[%s599 + $0xc] sm:$0xf]
  %v604 = vld [vmem:[%s599 + $0x10] sm:$0xf]
  %v605 = vld [vmem:[%s599 + $0x14] sm:$0xf]
  %v606 = vld [vmem:[%s599 + $0x18] sm:$0xf]
  %v607 = vld [vmem:[%s599 + $0x1c] sm:$0xf]
  %v608 = vld [vmem:[%s599 + $0x20] sm:$0xf]
  %v609 = vld [vmem:[%s599 + $0x24] sm:$0xf]
  %v610 = vld [vmem:[%s599 + $0x28] sm:$0xf]
  %v611 = vld [vmem:[%s599 + $0x2c] sm:$0xf]
  %v612 = vld [vmem:[%s599 + $0x30] sm:$0xf]
  %v613 = vld [vmem:[%s599 + $0x34] sm:$0xf]
  %v614 = vld [vmem:[%s599 + $0x38] sm:$0xf]
  %v615 = vld [vmem:[%s599 + $0x3c] sm:$0xf]
  %v632 = vunpack.c.l.b16 %v600
  %v633 = vunpack.c.l.b16 %v601
  %v634 = vunpack.c.l.b16 %v602
  %v635 = vunpack.c.l.b16 %v603
  %v636 = vunpack.c.l.b16 %v604
  %v637 = vunpack.c.l.b16 %v605
  %v638 = vunpack.c.l.b16 %v606
  %v639 = vunpack.c.l.b16 %v607
  %v640 = vunpack.c.l.b16 %v608
  %v641 = vunpack.c.l.b16 %v609
  %v642 = vunpack.c.l.b16 %v610
  %v643 = vunpack.c.l.b16 %v611
  %v644 = vunpack.c.l.b16 %v612
  %v645 = vunpack.c.l.b16 %v613
  %v646 = vunpack.c.l.b16 %v614
  %v647 = vunpack.c.l.b16 %v615
  %v648 = vpack.c.b16 %v633, %v632
  %v649 = vpack.c.b16 %v635, %v634
  %v650 = vpack.c.b16 %v637, %v636
  %v651 = vpack.c.b16 %v639, %v638
  %v652 = vpack.c.b16 %v641, %v640
  %v653 = vpack.c.b16 %v643, %v642
  %v654 = vpack.c.b16 %v645, %v644
  %v655 = vpack.c.b16 %v647, %v646
  %664 = vmatprep.subr.bf16.mxu0 0
  %665 = vmatpush1.bf16.msra.mxu0 %v655
  %666 = vmatprep.subr.bf16.mxu0 0
  %667 = vmatpush1.bf16.msra.mxu0 %v654
  %668 = vmatprep.subr.bf16.mxu0 0
  %669 = vmatpush1.bf16.msra.mxu0 %v653
  %670 = vmatprep.subr.bf16.mxu0 0
  %671 = vmatpush1.bf16.msra.mxu0 %v652
  %672 = vmatprep.subr.bf16.mxu0 0
  %673 = vmatpush1.bf16.msra.mxu0 %v651
  %674 = vmatprep.subr.bf16.mxu0 0
  %675 = vmatpush1.bf16.msra.mxu0 %v650
  %676 = vmatprep.subr.bf16.mxu0 0
  %677 = vmatpush1.bf16.msra.mxu0 %v649
  %678 = vmatprep.subr.bf16.mxu0 0
  %679 = vmatpush1.bf16.msra.mxu0 %v648
  %680 = vmatprep.subr.bf16.mxu0 0
  %681 = vmatpush2.bf16.msra.mxu0 0
  %682 = vmatprep.subr.bf16.mxu0 0
  %683 = vmatpush2.bf16.msra.mxu0 0
  %684 = vmatprep.subr.bf16.mxu0 0
  %685 = vmatpush2.bf16.msra.mxu0 0
  %686 = vmatprep.subr.bf16.mxu0 0
  %687 = vmatpush2.bf16.msra.mxu0 0
  %688 = vmatprep.subr.bf16.mxu0 0
  %689 = vmatpush2.bf16.msra.mxu0 0
  %690 = vmatprep.subr.bf16.mxu0 0
  %691 = vmatpush2.bf16.msra.mxu0 0
  %692 = vmatprep.subr.bf16.mxu0 0
  %693 = vmatpush2.bf16.msra.mxu0 0
  %694 = vmatprep.subr.bf16.mxu0 0
  %695 = vmatpush2.bf16.msra.mxu0 0
  %696 = vmatprep.mubr.bf16.mxu0 0
  %697 = vmatmul.mubr.bf16.gmra.mxu0 %v597
  %v698 = vpop.f32.mrf.mxu0
  %v699 = vadd.f32 0.0, %v698
  %v700 = vpop.f32.mrf.mxu0
  %v701 = vpop.f32.mrf.mxu0
  %v702 = vadd.f32 0.0, %v701
  %v703 = vpop.f32.mrf.mxu0
  %704 = vmatprep.mubr.bf16.mxu0 0
  %705 = vmatmul.mubr.bf16.gmra.mxu0 %v598
  %v706 = vpop.f32.mrf.mxu0
  %v707 = vadd.f32 0.0, %v706
  %v708 = vpop.f32.mrf.mxu0
  %v709 = vpop.f32.mrf.mxu0
  %v710 = vadd.f32 0.0, %v709
  %v711 = vpop.f32.mrf.mxu0
  %712 = vdwg.mxu0
  %v729 = vunpack.c.l.b16 %v515
  %v730 = vunpack.c.l.b16 %v516
  %v731 = vunpack.c.l.b16 %v517
  %v732 = vunpack.c.l.b16 %v518
  %v733 = vunpack.c.l.b16 %v519
  %v734 = vunpack.c.l.b16 %v520
  %v735 = vunpack.c.l.b16 %v521
  %v736 = vunpack.c.l.b16 %v522
  %v737 = vunpack.c.l.b16 %v523
  %v738 = vunpack.c.l.b16 %v524
  %v739 = vunpack.c.l.b16 %v525
  %v740 = vunpack.c.l.b16 %v526
  %v741 = vunpack.c.l.b16 %v527
  %v742 = vunpack.c.l.b16 %v528
  %v743 = vunpack.c.l.b16 %v529
  %v744 = vunpack.c.l.b16 %v530
  %v745 = vpack.c.b16 %v730, %v729
  %v746 = vpack.c.b16 %v732, %v731
  %v747 = vpack.c.b16 %v734, %v733
  %v748 = vpack.c.b16 %v736, %v735
  %v749 = vpack.c.b16 %v738, %v737
  %v750 = vpack.c.b16 %v740, %v739
  %v751 = vpack.c.b16 %v742, %v741
  %v752 = vpack.c.b16 %v744, %v743
  %761 = vmatprep.subr.bf16.mxu0 0
  %762 = vmatpush1.bf16.msra.mxu0 %v752
  %763 = vmatprep.subr.bf16.mxu0 0
  %764 = vmatpush1.bf16.msra.mxu0 %v751
  %765 = vmatprep.subr.bf16.mxu0 0
  %766 = vmatpush1.bf16.msra.mxu0 %v750
  %767 = vmatprep.subr.bf16.mxu0 0
  %768 = vmatpush1.bf16.msra.mxu0 %v749
  %769 = vmatprep.subr.bf16.mxu0 0
  %770 = vmatpush1.bf16.msra.mxu0 %v748
  %771 = vmatprep.subr.bf16.mxu0 0
  %772 = vmatpush1.bf16.msra.mxu0 %v747
  %773 = vmatprep.subr.bf16.mxu0 0
  %774 = vmatpush1.bf16.msra.mxu0 %v746
  %775 = vmatprep.subr.bf16.mxu0 0
  %776 = vmatpush1.bf16.msra.mxu0 %v745
  %777 = vmatprep.subr.bf16.mxu0 0
  %778 = vmatpush2.bf16.msra.mxu0 0
  %779 = vmatprep.subr.bf16.mxu0 0
  %780 = vmatpush2.bf16.msra.mxu0 0
  %781 = vmatprep.subr.bf16.mxu0 0
  %782 = vmatpush2.bf16.msra.mxu0 0
  %783 = vmatprep.subr.bf16.mxu0 0
  %784 = vmatpush2.bf16.msra.mxu0 0
  %785 = vmatprep.subr.bf16.mxu0 0
  %786 = vmatpush2.bf16.msra.mxu0 0
  %787 = vmatprep.subr.bf16.mxu0 0
  %788 = vmatpush2.bf16.msra.mxu0 0
  %789 = vmatprep.subr.bf16.mxu0 0
  %790 = vmatpush2.bf16.msra.mxu0 0
  %791 = vmatprep.subr.bf16.mxu0 0
  %792 = vmatpush2.bf16.msra.mxu0 0
  %793 = vmatprep.mubr.bf16.mxu0 0
  %794 = vmatmul.mubr.bf16.gmra.mxu0 %v513
  %v795 = vpop.f32.mrf.mxu0
  %v796 = vadd.f32 %v699, %v795
  %v797 = vpop.f32.mrf.mxu0
  %v798 = vpop.f32.mrf.mxu0
  %v799 = vadd.f32 %v702, %v798
  %v800 = vpop.f32.mrf.mxu0
  %801 = vmatprep.mubr.bf16.mxu0 0
  %802 = vmatmul.mubr.bf16.gmra.mxu0 %v514
  %v803 = vpop.f32.mrf.mxu0
  %v804 = vadd.f32 %v707, %v803
  %v805 = vpop.f32.mrf.mxu0
  %v806 = vpop.f32.mrf.mxu0
  %v807 = vadd.f32 %v710, %v806
  %v808 = vpop.f32.mrf.mxu0
  %809 = vdwg.mxu0
  %s810 = scalar_lea.vmem %s4, 32
  %v811 = vld [vmem:[%s810] sm:$0xf]
  %v812 = vld [vmem:[%s810 + $0x4] sm:$0xf]
  %v813 = vld [vmem:[%s810 + $0x8] sm:$0xf]
  %v814 = vld [vmem:[%s810 + $0xc] sm:$0xf]
  %v819 = vunpack.c.l.b16 %v811
  %v820 = vunpack.c.l.b16 %v812
  %v821 = vunpack.c.l.b16 %v813
  %v822 = vunpack.c.l.b16 %v814
  %v823 = vpack.c.b16 %v820, %v819
  %v824 = vpack.c.b16 %v822, %v821
  %827 = vmatprep.subr.bf16.mxu0 0
  %828 = vmatpush1.bf16.msra.mxu0 %v447
  %829 = vmatprep.subr.bf16.mxu0 0
  %830 = vmatpush1.bf16.msra.mxu0 %v446
  %831 = vmatprep.subr.bf16.mxu0 0
  %832 = vmatpush1.bf16.msra.mxu0 %v445
  %833 = vmatprep.subr.bf16.mxu0 0
  %834 = vmatpush1.bf16.msra.mxu0 %v444
  %835 = vmatprep.subr.bf16.mxu0 0
  %836 = vmatpush1.bf16.msra.mxu0 %v443
  %837 = vmatprep.subr.bf16.mxu0 0
  %838 = vmatpush1.bf16.msra.mxu0 %v442
  %839 = vmatprep.subr.bf16.mxu0 0
  %840 = vmatpush1.bf16.msra.mxu0 %v441
  %841 = vmatprep.subr.bf16.mxu0 0
  %842 = vmatpush1.bf16.msra.mxu0 %v440
  %843 = vmatprep.subr.bf16.mxu0 0
  %844 = vmatpush2.bf16.msra.mxu0 0
  %845 = vmatprep.subr.bf16.mxu0 0
  %846 = vmatpush2.bf16.msra.mxu0 0
  %847 = vmatprep.subr.bf16.mxu0 0
  %848 = vmatpush2.bf16.msra.mxu0 0
  %849 = vmatprep.subr.bf16.mxu0 0
  %850 = vmatpush2.bf16.msra.mxu0 0
  %851 = vmatprep.subr.bf16.mxu0 0
  %852 = vmatpush2.bf16.msra.mxu0 0
  %853 = vmatprep.subr.bf16.mxu0 0
  %854 = vmatpush2.bf16.msra.mxu0 0
  %855 = vmatprep.subr.bf16.mxu0 0
  %856 = vmatpush2.bf16.msra.mxu0 0
  %857 = vmatprep.subr.bf16.mxu0 0
  %858 = vmatpush2.bf16.msra.mxu0 0
  %859 = vmatprep.mubr.bf16.mxu0 0
  %860 = vmatmul.mubr.bf16.gmra.mxu0 %v823
  %v861 = vpop.f32.mrf.mxu0
  %v862 = vadd.f32 0.0, %v861
  %v863 = vpop.f32.mrf.mxu0
  %v864 = vpop.f32.mrf.mxu0
  %v865 = vadd.f32 0.0, %v864
  %v866 = vpop.f32.mrf.mxu0
  %867 = vmatprep.mubr.bf16.mxu0 0
  %868 = vmatmul.mubr.bf16.gmra.mxu0 %v824
  %v869 = vpop.f32.mrf.mxu0
  %v870 = vadd.f32 0.0, %v869
  %v871 = vpop.f32.mrf.mxu0
  %v872 = vpop.f32.mrf.mxu0
  %v873 = vadd.f32 0.0, %v872
  %v874 = vpop.f32.mrf.mxu0
  %875 = vdwg.mxu0
  %v876 = vpack.c.bf16 %v865, %v862
  %v877 = vpack.c.bf16 %v873, %v870
  %s878 = scalar_lea.vmem %s5, 128
  %v879 = vld [vmem:[%s878] sm:$0xf]
  %v880 = vld [vmem:[%s878 + $0x4] sm:$0xf]
  %v881 = vld [vmem:[%s878 + $0x8] sm:$0xf]
  %v882 = vld [vmem:[%s878 + $0xc] sm:$0xf]
  %v883 = vld [vmem:[%s878 + $0x10] sm:$0xf]
  %v884 = vld [vmem:[%s878 + $0x14] sm:$0xf]
  %v885 = vld [vmem:[%s878 + $0x18] sm:$0xf]
  %v886 = vld [vmem:[%s878 + $0x1c] sm:$0xf]
  %v887 = vld [vmem:[%s878 + $0x20] sm:$0xf]
  %v888 = vld [vmem:[%s878 + $0x24] sm:$0xf]
  %v889 = vld [vmem:[%s878 + $0x28] sm:$0xf]
  %v890 = vld [vmem:[%s878 + $0x2c] sm:$0xf]
  %v891 = vld [vmem:[%s878 + $0x30] sm:$0xf]
  %v892 = vld [vmem:[%s878 + $0x34] sm:$0xf]
  %v893 = vld [vmem:[%s878 + $0x38] sm:$0xf]
  %v894 = vld [vmem:[%s878 + $0x3c] sm:$0xf]
  %v911 = vunpack.c.l.b16 %v879
  %v912 = vunpack.c.l.b16 %v880
  %v913 = vunpack.c.l.b16 %v881
  %v914 = vunpack.c.l.b16 %v882
  %v915 = vunpack.c.l.b16 %v883
  %v916 = vunpack.c.l.b16 %v884
  %v917 = vunpack.c.l.b16 %v885
  %v918 = vunpack.c.l.b16 %v886
  %v919 = vunpack.c.l.b16 %v887
  %v920 = vunpack.c.l.b16 %v888
  %v921 = vunpack.c.l.b16 %v889
  %v922 = vunpack.c.l.b16 %v890
  %v923 = vunpack.c.l.b16 %v891
  %v924 = vunpack.c.l.b16 %v892
  %v925 = vunpack.c.l.b16 %v893
  %v926 = vunpack.c.l.b16 %v894
  %v927 = vpack.c.b16 %v912, %v911
  %v928 = vpack.c.b16 %v914, %v913
  %v929 = vpack.c.b16 %v916, %v915
  %v930 = vpack.c.b16 %v918, %v917
  %v931 = vpack.c.b16 %v920, %v919
  %v932 = vpack.c.b16 %v922, %v921
  %v933 = vpack.c.b16 %v924, %v923
  %v934 = vpack.c.b16 %v926, %v925
  %943 = vmatprep.subr.bf16.mxu0 0
  %944 = vmatpush1.bf16.msra.mxu0 %v934
  %945 = vmatprep.subr.bf16.mxu0 0
  %946 = vmatpush1.bf16.msra.mxu0 %v933
  %947 = vmatprep.subr.bf16.mxu0 0
  %948 = vmatpush1.bf16.msra.mxu0 %v932
  %949 = vmatprep.subr.bf16.mxu0 0
  %950 = vmatpush1.bf16.msra.mxu0 %v931
  %951 = vmatprep.subr.bf16.mxu0 0
  %952 = vmatpush1.bf16.msra.mxu0 %v930
  %953 = vmatprep.subr.bf16.mxu0 0
  %954 = vmatpush1.bf16.msra.mxu0 %v929
  %955 = vmatprep.subr.bf16.mxu0 0
  %956 = vmatpush1.bf16.msra.mxu0 %v928
  %957 = vmatprep.subr.bf16.mxu0 0
  %958 = vmatpush1.bf16.msra.mxu0 %v927
  %959 = vmatprep.subr.bf16.mxu0 0
  %960 = vmatpush2.bf16.msra.mxu0 0
  %961 = vmatprep.subr.bf16.mxu0 0
  %962 = vmatpush2.bf16.msra.mxu0 0
  %963 = vmatprep.subr.bf16.mxu0 0
  %964 = vmatpush2.bf16.msra.mxu0 0
  %965 = vmatprep.subr.bf16.mxu0 0
  %966 = vmatpush2.bf16.msra.mxu0 0
  %967 = vmatprep.subr.bf16.mxu0 0
  %968 = vmatpush2.bf16.msra.mxu0 0
  %969 = vmatprep.subr.bf16.mxu0 0
  %970 = vmatpush2.bf16.msra.mxu0 0
  %971 = vmatprep.subr.bf16.mxu0 0
  %972 = vmatpush2.bf16.msra.mxu0 0
  %973 = vmatprep.subr.bf16.mxu0 0
  %974 = vmatpush2.bf16.msra.mxu0 0
  %975 = vmatprep.mubr.bf16.mxu0 0
  %976 = vmatmul.mubr.bf16.gmra.mxu0 %v876
  %v977 = vpop.f32.mrf.mxu0
  %v978 = vadd.f32 0.0, %v977
  %v979 = vpop.f32.mrf.mxu0
  %v980 = vpop.f32.mrf.mxu0
  %v981 = vadd.f32 0.0, %v980
  %v982 = vpop.f32.mrf.mxu0
  %983 = vmatprep.mubr.bf16.mxu0 0
  %984 = vmatmul.mubr.bf16.gmra.mxu0 %v877
  %v985 = vpop.f32.mrf.mxu0
  %v986 = vadd.f32 0.0, %v985
  %v987 = vpop.f32.mrf.mxu0
  %v988 = vpop.f32.mrf.mxu0
  %v989 = vadd.f32 0.0, %v988
  %v990 = vpop.f32.mrf.mxu0
  %991 = vdwg.mxu0
  %v992 = vadd.f32 %v796, %v978
  %v993 = vadd.f32 %v799, %v981
  %v994 = vadd.f32 %v804, %v986
  %v995 = vadd.f32 %v807, %v989
  %s996 = scalar_lea.vmem %s4, 48
  %v997 = vld [vmem:[%s996] sm:$0xf]
  %v998 = vld [vmem:[%s996 + $0x4] sm:$0xf]
  %v999 = vld [vmem:[%s996 + $0x8] sm:$0xf]
  %v1000 = vld [vmem:[%s996 + $0xc] sm:$0xf]
  %v1005 = vunpack.c.l.b16 %v997
  %v1006 = vunpack.c.l.b16 %v998
  %v1007 = vunpack.c.l.b16 %v999
  %v1008 = vunpack.c.l.b16 %v1000
  %v1009 = vpack.c.b16 %v1006, %v1005
  %v1010 = vpack.c.b16 %v1008, %v1007
  %1013 = vmatprep.subr.bf16.mxu0 0
  %1014 = vmatpush1.bf16.msra.mxu0 %v447
  %1015 = vmatprep.subr.bf16.mxu0 0
  %1016 = vmatpush1.bf16.msra.mxu0 %v446
  %1017 = vmatprep.subr.bf16.mxu0 0
  %1018 = vmatpush1.bf16.msra.mxu0 %v445
  %1019 = vmatprep.subr.bf16.mxu0 0
  %1020 = vmatpush1.bf16.msra.mxu0 %v444
  %1021 = vmatprep.subr.bf16.mxu0 0
  %1022 = vmatpush1.bf16.msra.mxu0 %v443
  %1023 = vmatprep.subr.bf16.mxu0 0
  %1024 = vmatpush1.bf16.msra.mxu0 %v442
  %1025 = vmatprep.subr.bf16.mxu0 0
  %1026 = vmatpush1.bf16.msra.mxu0 %v441
  %1027 = vmatprep.subr.bf16.mxu0 0
  %1028 = vmatpush1.bf16.msra.mxu0 %v440
  %1029 = vmatprep.subr.bf16.mxu0 0
  %1030 = vmatpush2.bf16.msra.mxu0 0
  %1031 = vmatprep.subr.bf16.mxu0 0
  %1032 = vmatpush2.bf16.msra.mxu0 0
  %1033 = vmatprep.subr.bf16.mxu0 0
  %1034 = vmatpush2.bf16.msra.mxu0 0
  %1035 = vmatprep.subr.bf16.mxu0 0
  %1036 = vmatpush2.bf16.msra.mxu0 0
  %1037 = vmatprep.subr.bf16.mxu0 0
  %1038 = vmatpush2.bf16.msra.mxu0 0
  %1039 = vmatprep.subr.bf16.mxu0 0
  %1040 = vmatpush2.bf16.msra.mxu0 0
  %1041 = vmatprep.subr.bf16.mxu0 0
  %1042 = vmatpush2.bf16.msra.mxu0 0
  %1043 = vmatprep.subr.bf16.mxu0 0
  %1044 = vmatpush2.bf16.msra.mxu0 0
  %1045 = vmatprep.mubr.bf16.mxu0 0
  %1046 = vmatmul.mubr.bf16.gmra.mxu0 %v1009
  %v1047 = vpop.f32.mrf.mxu0
  %v1048 = vadd.f32 0.0, %v1047
  %v1049 = vpop.f32.mrf.mxu0
  %v1050 = vpop.f32.mrf.mxu0
  %v1051 = vadd.f32 0.0, %v1050
  %v1052 = vpop.f32.mrf.mxu0
  %1053 = vmatprep.mubr.bf16.mxu0 0
  %1054 = vmatmul.mubr.bf16.gmra.mxu0 %v1010
  %v1055 = vpop.f32.mrf.mxu0
  %v1056 = vadd.f32 0.0, %v1055
  %v1057 = vpop.f32.mrf.mxu0
  %v1058 = vpop.f32.mrf.mxu0
  %v1059 = vadd.f32 0.0, %v1058
  %v1060 = vpop.f32.mrf.mxu0
  %1061 = vdwg.mxu0
  %v1062 = vpack.c.bf16 %v1051, %v1048
  %v1063 = vpack.c.bf16 %v1059, %v1056
  %s1064 = scalar_lea.vmem %s5, 192
  %v1065 = vld [vmem:[%s1064] sm:$0xf]
  %v1066 = vld [vmem:[%s1064 + $0x4] sm:$0xf]
  %v1067 = vld [vmem:[%s1064 + $0x8] sm:$0xf]
  %v1068 = vld [vmem:[%s1064 + $0xc] sm:$0xf]
  %v1069 = vld [vmem:[%s1064 + $0x10] sm:$0xf]
  %v1070 = vld [vmem:[%s1064 + $0x14] sm:$0xf]
  %v1071 = vld [vmem:[%s1064 + $0x18] sm:$0xf]
  %v1072 = vld [vmem:[%s1064 + $0x1c] sm:$0xf]
  %v1073 = vld [vmem:[%s1064 + $0x20] sm:$0xf]
  %v1074 = vld [vmem:[%s1064 + $0x24] sm:$0xf]
  %v1075 = vld [vmem:[%s1064 + $0x28] sm:$0xf]
  %v1076 = vld [vmem:[%s1064 + $0x2c] sm:$0xf]
  %v1077 = vld [vmem:[%s1064 + $0x30] sm:$0xf]
  %v1078 = vld [vmem:[%s1064 + $0x34] sm:$0xf]
  %v1079 = vld [vmem:[%s1064 + $0x38] sm:$0xf]
  %v1080 = vld [vmem:[%s1064 + $0x3c] sm:$0xf]
  %v1097 = vunpack.c.l.b16 %v1065
  %v1098 = vunpack.c.l.b16 %v1066
  %v1099 = vunpack.c.l.b16 %v1067
  %v1100 = vunpack.c.l.b16 %v1068
  %v1101 = vunpack.c.l.b16 %v1069
  %v1102 = vunpack.c.l.b16 %v1070
  %v1103 = vunpack.c.l.b16 %v1071
  %v1104 = vunpack.c.l.b16 %v1072
  %v1105 = vunpack.c.l.b16 %v1073
  %v1106 = vunpack.c.l.b16 %v1074
  %v1107 = vunpack.c.l.b16 %v1075
  %v1108 = vunpack.c.l.b16 %v1076
  %v1109 = vunpack.c.l.b16 %v1077
  %v1110 = vunpack.c.l.b16 %v1078
  %v1111 = vunpack.c.l.b16 %v1079
  %v1112 = vunpack.c.l.b16 %v1080
  %v1113 = vpack.c.b16 %v1098, %v1097
  %v1114 = vpack.c.b16 %v1100, %v1099
  %v1115 = vpack.c.b16 %v1102, %v1101
  %v1116 = vpack.c.b16 %v1104, %v1103
  %v1117 = vpack.c.b16 %v1106, %v1105
  %v1118 = vpack.c.b16 %v1108, %v1107
  %v1119 = vpack.c.b16 %v1110, %v1109
  %v1120 = vpack.c.b16 %v1112, %v1111
  %1129 = vmatprep.subr.bf16.mxu0 0
  %1130 = vmatpush1.bf16.msra.mxu0 %v1120
  %1131 = vmatprep.subr.bf16.mxu0 0
  %1132 = vmatpush1.bf16.msra.mxu0 %v1119
  %1133 = vmatprep.subr.bf16.mxu0 0
  %1134 = vmatpush1.bf16.msra.mxu0 %v1118
  %1135 = vmatprep.subr.bf16.mxu0 0
  %1136 = vmatpush1.bf16.msra.mxu0 %v1117
  %1137 = vmatprep.subr.bf16.mxu0 0
  %1138 = vmatpush1.bf16.msra.mxu0 %v1116
  %1139 = vmatprep.subr.bf16.mxu0 0
  %1140 = vmatpush1.bf16.msra.mxu0 %v1115
  %1141 = vmatprep.subr.bf16.mxu0 0
  %1142 = vmatpush1.bf16.msra.mxu0 %v1114
  %1143 = vmatprep.subr.bf16.mxu0 0
  %1144 = vmatpush1.bf16.msra.mxu0 %v1113
  %1145 = vmatprep.subr.bf16.mxu0 0
  %1146 = vmatpush2.bf16.msra.mxu0 0
  %1147 = vmatprep.subr.bf16.mxu0 0
  %1148 = vmatpush2.bf16.msra.mxu0 0
  %1149 = vmatprep.subr.bf16.mxu0 0
  %1150 = vmatpush2.bf16.msra.mxu0 0
  %1151 = vmatprep.subr.bf16.mxu0 0
  %1152 = vmatpush2.bf16.msra.mxu0 0
  %1153 = vmatprep.subr.bf16.mxu0 0
  %1154 = vmatpush2.bf16.msra.mxu0 0
  %1155 = vmatprep.subr.bf16.mxu0 0
  %1156 = vmatpush2.bf16.msra.mxu0 0
  %1157 = vmatprep.subr.bf16.mxu0 0
  %1158 = vmatpush2.bf16.msra.mxu0 0
  %1159 = vmatprep.subr.bf16.mxu0 0
  %1160 = vmatpush2.bf16.msra.mxu0 0
  %1161 = vmatprep.mubr.bf16.mxu0 0
  %1162 = vmatmul.mubr.bf16.gmra.mxu0 %v1062
  %v1163 = vpop.f32.mrf.mxu0
  %v1164 = vadd.f32 0.0, %v1163
  %v1165 = vpop.f32.mrf.mxu0
  %v1166 = vpop.f32.mrf.mxu0
  %v1167 = vadd.f32 0.0, %v1166
  %v1168 = vpop.f32.mrf.mxu0
  %1169 = vmatprep.mubr.bf16.mxu0 0
  %1170 = vmatmul.mubr.bf16.gmra.mxu0 %v1063
  %v1171 = vpop.f32.mrf.mxu0
  %v1172 = vadd.f32 0.0, %v1171
  %v1173 = vpop.f32.mrf.mxu0
  %v1174 = vpop.f32.mrf.mxu0
  %v1175 = vadd.f32 0.0, %v1174
  %v1176 = vpop.f32.mrf.mxu0
  %1177 = vdwg.mxu0
  %v1178 = vadd.f32 %v992, %v1164
  %v1179 = vadd.f32 %v993, %v1167
  %v1180 = vadd.f32 %v994, %v1172
  %v1181 = vadd.f32 %v995, %v1175
  %s1182 = scalar_lea.vmem %s4, 64
  %v1183 = vld [vmem:[%s1182] sm:$0xf]
  %v1184 = vld [vmem:[%s1182 + $0x4] sm:$0xf]
  %v1185 = vld [vmem:[%s1182 + $0x8] sm:$0xf]
  %v1186 = vld [vmem:[%s1182 + $0xc] sm:$0xf]
  %v1191 = vunpack.c.l.b16 %v1183
  %v1192 = vunpack.c.l.b16 %v1184
  %v1193 = vunpack.c.l.b16 %v1185
  %v1194 = vunpack.c.l.b16 %v1186
  %v1195 = vpack.c.b16 %v1192, %v1191
  %v1196 = vpack.c.b16 %v1194, %v1193
  %1199 = vmatprep.subr.bf16.mxu0 0
  %1200 = vmatpush1.bf16.msra.mxu0 %v447
  %1201 = vmatprep.subr.bf16.mxu0 0
  %1202 = vmatpush1.bf16.msra.mxu0 %v446
  %1203 = vmatprep.subr.bf16.mxu0 0
  %1204 = vmatpush1.bf16.msra.mxu0 %v445
  %1205 = vmatprep.subr.bf16.mxu0 0
  %1206 = vmatpush1.bf16.msra.mxu0 %v444
  %1207 = vmatprep.subr.bf16.mxu0 0
  %1208 = vmatpush1.bf16.msra.mxu0 %v443
  %1209 = vmatprep.subr.bf16.mxu0 0
  %1210 = vmatpush1.bf16.msra.mxu0 %v442
  %1211 = vmatprep.subr.bf16.mxu0 0
  %1212 = vmatpush1.bf16.msra.mxu0 %v441
  %1213 = vmatprep.subr.bf16.mxu0 0
  %1214 = vmatpush1.bf16.msra.mxu0 %v440
  %1215 = vmatprep.subr.bf16.mxu0 0
  %1216 = vmatpush2.bf16.msra.mxu0 0
  %1217 = vmatprep.subr.bf16.mxu0 0
  %1218 = vmatpush2.bf16.msra.mxu0 0
  %1219 = vmatprep.subr.bf16.mxu0 0
  %1220 = vmatpush2.bf16.msra.mxu0 0
  %1221 = vmatprep.subr.bf16.mxu0 0
  %1222 = vmatpush2.bf16.msra.mxu0 0
  %1223 = vmatprep.subr.bf16.mxu0 0
  %1224 = vmatpush2.bf16.msra.mxu0 0
  %1225 = vmatprep.subr.bf16.mxu0 0
  %1226 = vmatpush2.bf16.msra.mxu0 0
  %1227 = vmatprep.subr.bf16.mxu0 0
  %1228 = vmatpush2.bf16.msra.mxu0 0
  %1229 = vmatprep.subr.bf16.mxu0 0
  %1230 = vmatpush2.bf16.msra.mxu0 0
  %1231 = vmatprep.mubr.bf16.mxu0 0
  %1232 = vmatmul.mubr.bf16.gmra.mxu0 %v1195
  %v1233 = vpop.f32.mrf.mxu0
  %v1234 = vadd.f32 0.0, %v1233
  %v1235 = vpop.f32.mrf.mxu0
  %v1236 = vpop.f32.mrf.mxu0
  %v1237 = vadd.f32 0.0, %v1236
  %v1238 = vpop.f32.mrf.mxu0
  %1239 = vmatprep.mubr.bf16.mxu0 0
  %1240 = vmatmul.mubr.bf16.gmra.mxu0 %v1196
  %v1241 = vpop.f32.mrf.mxu0
  %v1242 = vadd.f32 0.0, %v1241
  %v1243 = vpop.f32.mrf.mxu0
  %v1244 = vpop.f32.mrf.mxu0
  %v1245 = vadd.f32 0.0, %v1244
  %v1246 = vpop.f32.mrf.mxu0
  %1247 = vdwg.mxu0
  %v1248 = vpack.c.bf16 %v1237, %v1234
  %v1249 = vpack.c.bf16 %v1245, %v1242
  %s1250 = scalar_lea.vmem %s5, 256
  %v1251 = vld [vmem:[%s1250] sm:$0xf]
  %v1252 = vld [vmem:[%s1250 + $0x4] sm:$0xf]
  %v1253 = vld [vmem:[%s1250 + $0x8] sm:$0xf]
  %v1254 = vld [vmem:[%s1250 + $0xc] sm:$0xf]
  %v1255 = vld [vmem:[%s1250 + $0x10] sm:$0xf]
  %v1256 = vld [vmem:[%s1250 + $0x14] sm:$0xf]
  %v1257 = vld [vmem:[%s1250 + $0x18] sm:$0xf]
  %v1258 = vld [vmem:[%s1250 + $0x1c] sm:$0xf]
  %v1259 = vld [vmem:[%s1250 + $0x20] sm:$0xf]
  %v1260 = vld [vmem:[%s1250 + $0x24] sm:$0xf]
  %v1261 = vld [vmem:[%s1250 + $0x28] sm:$0xf]
  %v1262 = vld [vmem:[%s1250 + $0x2c] sm:$0xf]
  %v1263 = vld [vmem:[%s1250 + $0x30] sm:$0xf]
  %v1264 = vld [vmem:[%s1250 + $0x34] sm:$0xf]
  %v1265 = vld [vmem:[%s1250 + $0x38] sm:$0xf]
  %v1266 = vld [vmem:[%s1250 + $0x3c] sm:$0xf]
  %v1283 = vunpack.c.l.b16 %v1251
  %v1284 = vunpack.c.l.b16 %v1252
  %v1285 = vunpack.c.l.b16 %v1253
  %v1286 = vunpack.c.l.b16 %v1254
  %v1287 = vunpack.c.l.b16 %v1255
  %v1288 = vunpack.c.l.b16 %v1256
  %v1289 = vunpack.c.l.b16 %v1257
  %v1290 = vunpack.c.l.b16 %v1258
  %v1291 = vunpack.c.l.b16 %v1259
  %v1292 = vunpack.c.l.b16 %v1260
  %v1293 = vunpack.c.l.b16 %v1261
  %v1294 = vunpack.c.l.b16 %v1262
  %v1295 = vunpack.c.l.b16 %v1263
  %v1296 = vunpack.c.l.b16 %v1264
  %v1297 = vunpack.c.l.b16 %v1265
  %v1298 = vunpack.c.l.b16 %v1266
  %v1299 = vpack.c.b16 %v1284, %v1283
  %v1300 = vpack.c.b16 %v1286, %v1285
  %v1301 = vpack.c.b16 %v1288, %v1287
  %v1302 = vpack.c.b16 %v1290, %v1289
  %v1303 = vpack.c.b16 %v1292, %v1291
  %v1304 = vpack.c.b16 %v1294, %v1293
  %v1305 = vpack.c.b16 %v1296, %v1295
  %v1306 = vpack.c.b16 %v1298, %v1297
  %1315 = vmatprep.subr.bf16.mxu0 0
  %1316 = vmatpush1.bf16.msra.mxu0 %v1306
  %1317 = vmatprep.subr.bf16.mxu0 0
  %1318 = vmatpush1.bf16.msra.mxu0 %v1305
  %1319 = vmatprep.subr.bf16.mxu0 0
  %1320 = vmatpush1.bf16.msra.mxu0 %v1304
  %1321 = vmatprep.subr.bf16.mxu0 0
  %1322 = vmatpush1.bf16.msra.mxu0 %v1303
  %1323 = vmatprep.subr.bf16.mxu0 0
  %1324 = vmatpush1.bf16.msra.mxu0 %v1302
  %1325 = vmatprep.subr.bf16.mxu0 0
  %1326 = vmatpush1.bf16.msra.mxu0 %v1301
  %1327 = vmatprep.subr.bf16.mxu0 0
  %1328 = vmatpush1.bf16.msra.mxu0 %v1300
  %1329 = vmatprep.subr.bf16.mxu0 0
  %1330 = vmatpush1.bf16.msra.mxu0 %v1299
  %1331 = vmatprep.subr.bf16.mxu0 0
  %1332 = vmatpush2.bf16.msra.mxu0 0
  %1333 = vmatprep.subr.bf16.mxu0 0
  %1334 = vmatpush2.bf16.msra.mxu0 0
  %1335 = vmatprep.subr.bf16.mxu0 0
  %1336 = vmatpush2.bf16.msra.mxu0 0
  %1337 = vmatprep.subr.bf16.mxu0 0
  %1338 = vmatpush2.bf16.msra.mxu0 0
  %1339 = vmatprep.subr.bf16.mxu0 0
  %1340 = vmatpush2.bf16.msra.mxu0 0
  %1341 = vmatprep.subr.bf16.mxu0 0
  %1342 = vmatpush2.bf16.msra.mxu0 0
  %1343 = vmatprep.subr.bf16.mxu0 0
  %1344 = vmatpush2.bf16.msra.mxu0 0
  %1345 = vmatprep.subr.bf16.mxu0 0
  %1346 = vmatpush2.bf16.msra.mxu0 0
  %1347 = vmatprep.mubr.bf16.mxu0 0
  %1348 = vmatmul.mubr.bf16.gmra.mxu0 %v1248
  %v1349 = vpop.f32.mrf.mxu0
  %v1350 = vadd.f32 0.0, %v1349
  %v1351 = vpop.f32.mrf.mxu0
  %v1352 = vpop.f32.mrf.mxu0
  %v1353 = vadd.f32 0.0, %v1352
  %v1354 = vpop.f32.mrf.mxu0
  %1355 = vmatprep.mubr.bf16.mxu0 0
  %1356 = vmatmul.mubr.bf16.gmra.mxu0 %v1249
  %v1357 = vpop.f32.mrf.mxu0
  %v1358 = vadd.f32 0.0, %v1357
  %v1359 = vpop.f32.mrf.mxu0
  %v1360 = vpop.f32.mrf.mxu0
  %v1361 = vadd.f32 0.0, %v1360
  %v1362 = vpop.f32.mrf.mxu0
  %1363 = vdwg.mxu0
  %v1364 = vadd.f32 %v1178, %v1350
  %v1365 = vadd.f32 %v1179, %v1353
  %v1366 = vadd.f32 %v1180, %v1358
  %v1367 = vadd.f32 %v1181, %v1361
  %s1368 = scalar_lea.vmem %s4, 80
  %v1369 = vld [vmem:[%s1368] sm:$0xf]
  %v1370 = vld [vmem:[%s1368 + $0x4] sm:$0xf]
  %v1371 = vld [vmem:[%s1368 + $0x8] sm:$0xf]
  %v1372 = vld [vmem:[%s1368 + $0xc] sm:$0xf]
  %v1377 = vunpack.c.l.b16 %v1369
  %v1378 = vunpack.c.l.b16 %v1370
  %v1379 = vunpack.c.l.b16 %v1371
  %v1380 = vunpack.c.l.b16 %v1372
  %v1381 = vpack.c.b16 %v1378, %v1377
  %v1382 = vpack.c.b16 %v1380, %v1379
  %1385 = vmatprep.subr.bf16.mxu0 0
  %1386 = vmatpush1.bf16.msra.mxu0 %v447
  %1387 = vmatprep.subr.bf16.mxu0 0
  %1388 = vmatpush1.bf16.msra.mxu0 %v446
  %1389 = vmatprep.subr.bf16.mxu0 0
  %1390 = vmatpush1.bf16.msra.mxu0 %v445
  %1391 = vmatprep.subr.bf16.mxu0 0
  %1392 = vmatpush1.bf16.msra.mxu0 %v444
  %1393 = vmatprep.subr.bf16.mxu0 0
  %1394 = vmatpush1.bf16.msra.mxu0 %v443
  %1395 = vmatprep.subr.bf16.mxu0 0
  %1396 = vmatpush1.bf16.msra.mxu0 %v442
  %1397 = vmatprep.subr.bf16.mxu0 0
  %1398 = vmatpush1.bf16.msra.mxu0 %v441
  %1399 = vmatprep.subr.bf16.mxu0 0
  %1400 = vmatpush1.bf16.msra.mxu0 %v440
  %1401 = vmatprep.subr.bf16.mxu0 0
  %1402 = vmatpush2.bf16.msra.mxu0 0
  %1403 = vmatprep.subr.bf16.mxu0 0
  %1404 = vmatpush2.bf16.msra.mxu0 0
  %1405 = vmatprep.subr.bf16.mxu0 0
  %1406 = vmatpush2.bf16.msra.mxu0 0
  %1407 = vmatprep.subr.bf16.mxu0 0
  %1408 = vmatpush2.bf16.msra.mxu0 0
  %1409 = vmatprep.subr.bf16.mxu0 0
  %1410 = vmatpush2.bf16.msra.mxu0 0
  %1411 = vmatprep.subr.bf16.mxu0 0
  %1412 = vmatpush2.bf16.msra.mxu0 0
  %1413 = vmatprep.subr.bf16.mxu0 0
  %1414 = vmatpush2.bf16.msra.mxu0 0
  %1415 = vmatprep.subr.bf16.mxu0 0
  %1416 = vmatpush2.bf16.msra.mxu0 0
  %1417 = vmatprep.mubr.bf16.mxu0 0
  %1418 = vmatmul.mubr.bf16.gmra.mxu0 %v1381
  %v1419 = vpop.f32.mrf.mxu0
  %v1420 = vadd.f32 0.0, %v1419
  %v1421 = vpop.f32.mrf.mxu0
  %v1422 = vpop.f32.mrf.mxu0
  %v1423 = vadd.f32 0.0, %v1422
  %v1424 = vpop.f32.mrf.mxu0
  %1425 = vmatprep.mubr.bf16.mxu0 0
  %1426 = vmatmul.mubr.bf16.gmra.mxu0 %v1382
  %v1427 = vpop.f32.mrf.mxu0
  %v1428 = vadd.f32 0.0, %v1427
  %v1429 = vpop.f32.mrf.mxu0
  %v1430 = vpop.f32.mrf.mxu0
  %v1431 = vadd.f32 0.0, %v1430
  %v1432 = vpop.f32.mrf.mxu0
  %1433 = vdwg.mxu0
  %v1434 = vpack.c.bf16 %v1423, %v1420
  %v1435 = vpack.c.bf16 %v1431, %v1428
  %s1436 = scalar_lea.vmem %s5, 320
  %v1437 = vld [vmem:[%s1436] sm:$0xf]
  %v1438 = vld [vmem:[%s1436 + $0x4] sm:$0xf]
  %v1439 = vld [vmem:[%s1436 + $0x8] sm:$0xf]
  %v1440 = vld [vmem:[%s1436 + $0xc] sm:$0xf]
  %v1441 = vld [vmem:[%s1436 + $0x10] sm:$0xf]
  %v1442 = vld [vmem:[%s1436 + $0x14] sm:$0xf]
  %v1443 = vld [vmem:[%s1436 + $0x18] sm:$0xf]
  %v1444 = vld [vmem:[%s1436 + $0x1c] sm:$0xf]
  %v1445 = vld [vmem:[%s1436 + $0x20] sm:$0xf]
  %v1446 = vld [vmem:[%s1436 + $0x24] sm:$0xf]
  %v1447 = vld [vmem:[%s1436 + $0x28] sm:$0xf]
  %v1448 = vld [vmem:[%s1436 + $0x2c] sm:$0xf]
  %v1449 = vld [vmem:[%s1436 + $0x30] sm:$0xf]
  %v1450 = vld [vmem:[%s1436 + $0x34] sm:$0xf]
  %v1451 = vld [vmem:[%s1436 + $0x38] sm:$0xf]
  %v1452 = vld [vmem:[%s1436 + $0x3c] sm:$0xf]
  %v1469 = vunpack.c.l.b16 %v1437
  %v1470 = vunpack.c.l.b16 %v1438
  %v1471 = vunpack.c.l.b16 %v1439
  %v1472 = vunpack.c.l.b16 %v1440
  %v1473 = vunpack.c.l.b16 %v1441
  %v1474 = vunpack.c.l.b16 %v1442
  %v1475 = vunpack.c.l.b16 %v1443
  %v1476 = vunpack.c.l.b16 %v1444
  %v1477 = vunpack.c.l.b16 %v1445
  %v1478 = vunpack.c.l.b16 %v1446
  %v1479 = vunpack.c.l.b16 %v1447
  %v1480 = vunpack.c.l.b16 %v1448
  %v1481 = vunpack.c.l.b16 %v1449
  %v1482 = vunpack.c.l.b16 %v1450
  %v1483 = vunpack.c.l.b16 %v1451
  %v1484 = vunpack.c.l.b16 %v1452
  %v1485 = vpack.c.b16 %v1470, %v1469
  %v1486 = vpack.c.b16 %v1472, %v1471
  %v1487 = vpack.c.b16 %v1474, %v1473
  %v1488 = vpack.c.b16 %v1476, %v1475
  %v1489 = vpack.c.b16 %v1478, %v1477
  %v1490 = vpack.c.b16 %v1480, %v1479
  %v1491 = vpack.c.b16 %v1482, %v1481
  %v1492 = vpack.c.b16 %v1484, %v1483
  %1501 = vmatprep.subr.bf16.mxu0 0
  %1502 = vmatpush1.bf16.msra.mxu0 %v1492
  %1503 = vmatprep.subr.bf16.mxu0 0
  %1504 = vmatpush1.bf16.msra.mxu0 %v1491
  %1505 = vmatprep.subr.bf16.mxu0 0
  %1506 = vmatpush1.bf16.msra.mxu0 %v1490
  %1507 = vmatprep.subr.bf16.mxu0 0
  %1508 = vmatpush1.bf16.msra.mxu0 %v1489
  %1509 = vmatprep.subr.bf16.mxu0 0
  %1510 = vmatpush1.bf16.msra.mxu0 %v1488
  %1511 = vmatprep.subr.bf16.mxu0 0
  %1512 = vmatpush1.bf16.msra.mxu0 %v1487
  %1513 = vmatprep.subr.bf16.mxu0 0
  %1514 = vmatpush1.bf16.msra.mxu0 %v1486
  %1515 = vmatprep.subr.bf16.mxu0 0
  %1516 = vmatpush1.bf16.msra.mxu0 %v1485
  %1517 = vmatprep.subr.bf16.mxu0 0
  %1518 = vmatpush2.bf16.msra.mxu0 0
  %1519 = vmatprep.subr.bf16.mxu0 0
  %1520 = vmatpush2.bf16.msra.mxu0 0
  %1521 = vmatprep.subr.bf16.mxu0 0
  %1522 = vmatpush2.bf16.msra.mxu0 0
  %1523 = vmatprep.subr.bf16.mxu0 0
  %1524 = vmatpush2.bf16.msra.mxu0 0
  %1525 = vmatprep.subr.bf16.mxu0 0
  %1526 = vmatpush2.bf16.msra.mxu0 0
  %1527 = vmatprep.subr.bf16.mxu0 0
  %1528 = vmatpush2.bf16.msra.mxu0 0
  %1529 = vmatprep.subr.bf16.mxu0 0
  %1530 = vmatpush2.bf16.msra.mxu0 0
  %1531 = vmatprep.subr.bf16.mxu0 0
  %1532 = vmatpush2.bf16.msra.mxu0 0
  %1533 = vmatprep.mubr.bf16.mxu0 0
  %1534 = vmatmul.mubr.bf16.gmra.mxu0 %v1434
  %v1535 = vpop.f32.mrf.mxu0
  %v1536 = vadd.f32 0.0, %v1535
  %v1537 = vpop.f32.mrf.mxu0
  %v1538 = vpop.f32.mrf.mxu0
  %v1539 = vadd.f32 0.0, %v1538
  %v1540 = vpop.f32.mrf.mxu0
  %1541 = vmatprep.mubr.bf16.mxu0 0
  %1542 = vmatmul.mubr.bf16.gmra.mxu0 %v1435
  %v1543 = vpop.f32.mrf.mxu0
  %v1544 = vadd.f32 0.0, %v1543
  %v1545 = vpop.f32.mrf.mxu0
  %v1546 = vpop.f32.mrf.mxu0
  %v1547 = vadd.f32 0.0, %v1546
  %v1548 = vpop.f32.mrf.mxu0
  %1549 = vdwg.mxu0
  %v1550 = vadd.f32 %v1364, %v1536
  %v1551 = vadd.f32 %v1365, %v1539
  %v1552 = vadd.f32 %v1366, %v1544
  %v1553 = vadd.f32 %v1367, %v1547
  %s1554 = scalar_lea.vmem %s4, 96
  %v1555 = vld [vmem:[%s1554] sm:$0xf]
  %v1556 = vld [vmem:[%s1554 + $0x4] sm:$0xf]
  %v1557 = vld [vmem:[%s1554 + $0x8] sm:$0xf]
  %v1558 = vld [vmem:[%s1554 + $0xc] sm:$0xf]
  %v1563 = vunpack.c.l.b16 %v1555
  %v1564 = vunpack.c.l.b16 %v1556
  %v1565 = vunpack.c.l.b16 %v1557
  %v1566 = vunpack.c.l.b16 %v1558
  %v1567 = vpack.c.b16 %v1564, %v1563
  %v1568 = vpack.c.b16 %v1566, %v1565
  %1571 = vmatprep.subr.bf16.mxu0 0
  %1572 = vmatpush1.bf16.msra.mxu0 %v447
  %1573 = vmatprep.subr.bf16.mxu0 0
  %1574 = vmatpush1.bf16.msra.mxu0 %v446
  %1575 = vmatprep.subr.bf16.mxu0 0
  %1576 = vmatpush1.bf16.msra.mxu0 %v445
  %1577 = vmatprep.subr.bf16.mxu0 0
  %1578 = vmatpush1.bf16.msra.mxu0 %v444
  %1579 = vmatprep.subr.bf16.mxu0 0
  %1580 = vmatpush1.bf16.msra.mxu0 %v443
  %1581 = vmatprep.subr.bf16.mxu0 0
  %1582 = vmatpush1.bf16.msra.mxu0 %v442
  %1583 = vmatprep.subr.bf16.mxu0 0
  %1584 = vmatpush1.bf16.msra.mxu0 %v441
  %1585 = vmatprep.subr.bf16.mxu0 0
  %1586 = vmatpush1.bf16.msra.mxu0 %v440
  %1587 = vmatprep.subr.bf16.mxu0 0
  %1588 = vmatpush2.bf16.msra.mxu0 0
  %1589 = vmatprep.subr.bf16.mxu0 0
  %1590 = vmatpush2.bf16.msra.mxu0 0
  %1591 = vmatprep.subr.bf16.mxu0 0
  %1592 = vmatpush2.bf16.msra.mxu0 0
  %1593 = vmatprep.subr.bf16.mxu0 0
  %1594 = vmatpush2.bf16.msra.mxu0 0
  %1595 = vmatprep.subr.bf16.mxu0 0
  %1596 = vmatpush2.bf16.msra.mxu0 0
  %1597 = vmatprep.subr.bf16.mxu0 0
  %1598 = vmatpush2.bf16.msra.mxu0 0
  %1599 = vmatprep.subr.bf16.mxu0 0
  %1600 = vmatpush2.bf16.msra.mxu0 0
  %1601 = vmatprep.subr.bf16.mxu0 0
  %1602 = vmatpush2.bf16.msra.mxu0 0
  %1603 = vmatprep.mubr.bf16.mxu0 0
  %1604 = vmatmul.mubr.bf16.gmra.mxu0 %v1567
  %v1605 = vpop.f32.mrf.mxu0
  %v1606 = vadd.f32 0.0, %v1605
  %v1607 = vpop.f32.mrf.mxu0
  %v1608 = vpop.f32.mrf.mxu0
  %v1609 = vadd.f32 0.0, %v1608
  %v1610 = vpop.f32.mrf.mxu0
  %1611 = vmatprep.mubr.bf16.mxu0 0
  %1612 = vmatmul.mubr.bf16.gmra.mxu0 %v1568
  %v1613 = vpop.f32.mrf.mxu0
  %v1614 = vadd.f32 0.0, %v1613
  %v1615 = vpop.f32.mrf.mxu0
  %v1616 = vpop.f32.mrf.mxu0
  %v1617 = vadd.f32 0.0, %v1616
  %v1618 = vpop.f32.mrf.mxu0
  %1619 = vdwg.mxu0
  %v1620 = vpack.c.bf16 %v1609, %v1606
  %v1621 = vpack.c.bf16 %v1617, %v1614
  %s1622 = scalar_lea.vmem %s5, 384
  %v1623 = vld [vmem:[%s1622] sm:$0xf]
  %v1624 = vld [vmem:[%s1622 + $0x4] sm:$0xf]
  %v1625 = vld [vmem:[%s1622 + $0x8] sm:$0xf]
  %v1626 = vld [vmem:[%s1622 + $0xc] sm:$0xf]
  %v1627 = vld [vmem:[%s1622 + $0x10] sm:$0xf]
  %v1628 = vld [vmem:[%s1622 + $0x14] sm:$0xf]
  %v1629 = vld [vmem:[%s1622 + $0x18] sm:$0xf]
  %v1630 = vld [vmem:[%s1622 + $0x1c] sm:$0xf]
  %v1631 = vld [vmem:[%s1622 + $0x20] sm:$0xf]
  %v1632 = vld [vmem:[%s1622 + $0x24] sm:$0xf]
  %v1633 = vld [vmem:[%s1622 + $0x28] sm:$0xf]
  %v1634 = vld [vmem:[%s1622 + $0x2c] sm:$0xf]
  %v1635 = vld [vmem:[%s1622 + $0x30] sm:$0xf]
  %v1636 = vld [vmem:[%s1622 + $0x34] sm:$0xf]
  %v1637 = vld [vmem:[%s1622 + $0x38] sm:$0xf]
  %v1638 = vld [vmem:[%s1622 + $0x3c] sm:$0xf]
  %v1655 = vunpack.c.l.b16 %v1623
  %v1656 = vunpack.c.l.b16 %v1624
  %v1657 = vunpack.c.l.b16 %v1625
  %v1658 = vunpack.c.l.b16 %v1626
  %v1659 = vunpack.c.l.b16 %v1627
  %v1660 = vunpack.c.l.b16 %v1628
  %v1661 = vunpack.c.l.b16 %v1629
  %v1662 = vunpack.c.l.b16 %v1630
  %v1663 = vunpack.c.l.b16 %v1631
  %v1664 = vunpack.c.l.b16 %v1632
  %v1665 = vunpack.c.l.b16 %v1633
  %v1666 = vunpack.c.l.b16 %v1634
  %v1667 = vunpack.c.l.b16 %v1635
  %v1668 = vunpack.c.l.b16 %v1636
  %v1669 = vunpack.c.l.b16 %v1637
  %v1670 = vunpack.c.l.b16 %v1638
  %v1671 = vpack.c.b16 %v1656, %v1655
  %v1672 = vpack.c.b16 %v1658, %v1657
  %v1673 = vpack.c.b16 %v1660, %v1659
  %v1674 = vpack.c.b16 %v1662, %v1661
  %v1675 = vpack.c.b16 %v1664, %v1663
  %v1676 = vpack.c.b16 %v1666, %v1665
  %v1677 = vpack.c.b16 %v1668, %v1667
  %v1678 = vpack.c.b16 %v1670, %v1669
  %1687 = vmatprep.subr.bf16.mxu0 0
  %1688 = vmatpush1.bf16.msra.mxu0 %v1678
  %1689 = vmatprep.subr.bf16.mxu0 0
  %1690 = vmatpush1.bf16.msra.mxu0 %v1677
  %1691 = vmatprep.subr.bf16.mxu0 0
  %1692 = vmatpush1.bf16.msra.mxu0 %v1676
  %1693 = vmatprep.subr.bf16.mxu0 0
  %1694 = vmatpush1.bf16.msra.mxu0 %v1675
  %1695 = vmatprep.subr.bf16.mxu0 0
  %1696 = vmatpush1.bf16.msra.mxu0 %v1674
  %1697 = vmatprep.subr.bf16.mxu0 0
  %1698 = vmatpush1.bf16.msra.mxu0 %v1673
  %1699 = vmatprep.subr.bf16.mxu0 0
  %1700 = vmatpush1.bf16.msra.mxu0 %v1672
  %1701 = vmatprep.subr.bf16.mxu0 0
  %1702 = vmatpush1.bf16.msra.mxu0 %v1671
  %1703 = vmatprep.subr.bf16.mxu0 0
  %1704 = vmatpush2.bf16.msra.mxu0 0
  %1705 = vmatprep.subr.bf16.mxu0 0
  %1706 = vmatpush2.bf16.msra.mxu0 0
  %1707 = vmatprep.subr.bf16.mxu0 0
  %1708 = vmatpush2.bf16.msra.mxu0 0
  %1709 = vmatprep.subr.bf16.mxu0 0
  %1710 = vmatpush2.bf16.msra.mxu0 0
  %1711 = vmatprep.subr.bf16.mxu0 0
  %1712 = vmatpush2.bf16.msra.mxu0 0
  %1713 = vmatprep.subr.bf16.mxu0 0
  %1714 = vmatpush2.bf16.msra.mxu0 0
  %1715 = vmatprep.subr.bf16.mxu0 0
  %1716 = vmatpush2.bf16.msra.mxu0 0
  %1717 = vmatprep.subr.bf16.mxu0 0
  %1718 = vmatpush2.bf16.msra.mxu0 0
  %1719 = vmatprep.mubr.bf16.mxu0 0
  %1720 = vmatmul.mubr.bf16.gmra.mxu0 %v1620
  %v1721 = vpop.f32.mrf.mxu0
  %v1722 = vadd.f32 0.0, %v1721
  %v1723 = vpop.f32.mrf.mxu0
  %v1724 = vpop.f32.mrf.mxu0
  %v1725 = vadd.f32 0.0, %v1724
  %v1726 = vpop.f32.mrf.mxu0
  %1727 = vmatprep.mubr.bf16.mxu0 0
  %1728 = vmatmul.mubr.bf16.gmra.mxu0 %v1621
  %v1729 = vpop.f32.mrf.mxu0
  %v1730 = vadd.f32 0.0, %v1729
  %v1731 = vpop.f32.mrf.mxu0
  %v1732 = vpop.f32.mrf.mxu0
  %v1733 = vadd.f32 0.0, %v1732
  %v1734 = vpop.f32.mrf.mxu0
  %1735 = vdwg.mxu0
  %v1736 = vadd.f32 %v1550, %v1722
  %v1737 = vadd.f32 %v1551, %v1725
  %v1738 = vadd.f32 %v1552, %v1730
  %v1739 = vadd.f32 %v1553, %v1733
  %s1740 = scalar_lea.vmem %s4, 112
  %v1741 = vld [vmem:[%s1740] sm:$0xf]
  %v1742 = vld [vmem:[%s1740 + $0x4] sm:$0xf]
  %v1743 = vld [vmem:[%s1740 + $0x8] sm:$0xf]
  %v1744 = vld [vmem:[%s1740 + $0xc] sm:$0xf]
  %v1749 = vunpack.c.l.b16 %v1741
  %v1750 = vunpack.c.l.b16 %v1742
  %v1751 = vunpack.c.l.b16 %v1743
  %v1752 = vunpack.c.l.b16 %v1744
  %v1753 = vpack.c.b16 %v1750, %v1749
  %v1754 = vpack.c.b16 %v1752, %v1751
  %1757 = vmatprep.subr.bf16.mxu0 0
  %1758 = vmatpush1.bf16.msra.mxu0 %v447
  %1759 = vmatprep.subr.bf16.mxu0 0
  %1760 = vmatpush1.bf16.msra.mxu0 %v446
  %1761 = vmatprep.subr.bf16.mxu0 0
  %1762 = vmatpush1.bf16.msra.mxu0 %v445
  %1763 = vmatprep.subr.bf16.mxu0 0
  %1764 = vmatpush1.bf16.msra.mxu0 %v444
  %1765 = vmatprep.subr.bf16.mxu0 0
  %1766 = vmatpush1.bf16.msra.mxu0 %v443
  %1767 = vmatprep.subr.bf16.mxu0 0
  %1768 = vmatpush1.bf16.msra.mxu0 %v442
  %1769 = vmatprep.subr.bf16.mxu0 0
  %1770 = vmatpush1.bf16.msra.mxu0 %v441
  %1771 = vmatprep.subr.bf16.mxu0 0
  %1772 = vmatpush1.bf16.msra.mxu0 %v440
  %1773 = vmatprep.subr.bf16.mxu0 0
  %1774 = vmatpush2.bf16.msra.mxu0 0
  %1775 = vmatprep.subr.bf16.mxu0 0
  %1776 = vmatpush2.bf16.msra.mxu0 0
  %1777 = vmatprep.subr.bf16.mxu0 0
  %1778 = vmatpush2.bf16.msra.mxu0 0
  %1779 = vmatprep.subr.bf16.mxu0 0
  %1780 = vmatpush2.bf16.msra.mxu0 0
  %1781 = vmatprep.subr.bf16.mxu0 0
  %1782 = vmatpush2.bf16.msra.mxu0 0
  %1783 = vmatprep.subr.bf16.mxu0 0
  %1784 = vmatpush2.bf16.msra.mxu0 0
  %1785 = vmatprep.subr.bf16.mxu0 0
  %1786 = vmatpush2.bf16.msra.mxu0 0
  %1787 = vmatprep.subr.bf16.mxu0 0
  %1788 = vmatpush2.bf16.msra.mxu0 0
  %1789 = vmatprep.mubr.bf16.mxu0 0
  %1790 = vmatmul.mubr.bf16.gmra.mxu0 %v1753
  %v1791 = vpop.f32.mrf.mxu0
  %v1792 = vadd.f32 0.0, %v1791
  %v1793 = vpop.f32.mrf.mxu0
  %v1794 = vpop.f32.mrf.mxu0
  %v1795 = vadd.f32 0.0, %v1794
  %v1796 = vpop.f32.mrf.mxu0
  %1797 = vmatprep.mubr.bf16.mxu0 0
  %1798 = vmatmul.mubr.bf16.gmra.mxu0 %v1754
  %v1799 = vpop.f32.mrf.mxu0
  %v1800 = vadd.f32 0.0, %v1799
  %v1801 = vpop.f32.mrf.mxu0
  %v1802 = vpop.f32.mrf.mxu0
  %v1803 = vadd.f32 0.0, %v1802
  %v1804 = vpop.f32.mrf.mxu0
  %1805 = vdwg.mxu0
  %v1806 = vpack.c.bf16 %v1795, %v1792
  %v1807 = vpack.c.bf16 %v1803, %v1800
  %s1808 = scalar_lea.vmem %s5, 448
  %v1809 = vld [vmem:[%s1808] sm:$0xf]
  %v1810 = vld [vmem:[%s1808 + $0x4] sm:$0xf]
  %v1811 = vld [vmem:[%s1808 + $0x8] sm:$0xf]
  %v1812 = vld [vmem:[%s1808 + $0xc] sm:$0xf]
  %v1813 = vld [vmem:[%s1808 + $0x10] sm:$0xf]
  %v1814 = vld [vmem:[%s1808 + $0x14] sm:$0xf]
  %v1815 = vld [vmem:[%s1808 + $0x18] sm:$0xf]
  %v1816 = vld [vmem:[%s1808 + $0x1c] sm:$0xf]
  %v1817 = vld [vmem:[%s1808 + $0x20] sm:$0xf]
  %v1818 = vld [vmem:[%s1808 + $0x24] sm:$0xf]
  %v1819 = vld [vmem:[%s1808 + $0x28] sm:$0xf]
  %v1820 = vld [vmem:[%s1808 + $0x2c] sm:$0xf]
  %v1821 = vld [vmem:[%s1808 + $0x30] sm:$0xf]
  %v1822 = vld [vmem:[%s1808 + $0x34] sm:$0xf]
  %v1823 = vld [vmem:[%s1808 + $0x38] sm:$0xf]
  %v1824 = vld [vmem:[%s1808 + $0x3c] sm:$0xf]
  %v1841 = vunpack.c.l.b16 %v1809
  %v1842 = vunpack.c.l.b16 %v1810
  %v1843 = vunpack.c.l.b16 %v1811
  %v1844 = vunpack.c.l.b16 %v1812
  %v1845 = vunpack.c.l.b16 %v1813
  %v1846 = vunpack.c.l.b16 %v1814
  %v1847 = vunpack.c.l.b16 %v1815
  %v1848 = vunpack.c.l.b16 %v1816
  %v1849 = vunpack.c.l.b16 %v1817
  %v1850 = vunpack.c.l.b16 %v1818
  %v1851 = vunpack.c.l.b16 %v1819
  %v1852 = vunpack.c.l.b16 %v1820
  %v1853 = vunpack.c.l.b16 %v1821
  %v1854 = vunpack.c.l.b16 %v1822
  %v1855 = vunpack.c.l.b16 %v1823
  %v1856 = vunpack.c.l.b16 %v1824
  %v1857 = vpack.c.b16 %v1842, %v1841
  %v1858 = vpack.c.b16 %v1844, %v1843
  %v1859 = vpack.c.b16 %v1846, %v1845
  %v1860 = vpack.c.b16 %v1848, %v1847
  %v1861 = vpack.c.b16 %v1850, %v1849
  %v1862 = vpack.c.b16 %v1852, %v1851
  %v1863 = vpack.c.b16 %v1854, %v1853
  %v1864 = vpack.c.b16 %v1856, %v1855
  %1873 = vmatprep.subr.bf16.mxu0 0
  %1874 = vmatpush1.bf16.msra.mxu0 %v1864
  %1875 = vmatprep.subr.bf16.mxu0 0
  %1876 = vmatpush1.bf16.msra.mxu0 %v1863
  %1877 = vmatprep.subr.bf16.mxu0 0
  %1878 = vmatpush1.bf16.msra.mxu0 %v1862
  %1879 = vmatprep.subr.bf16.mxu0 0
  %1880 = vmatpush1.bf16.msra.mxu0 %v1861
  %1881 = vmatprep.subr.bf16.mxu0 0
  %1882 = vmatpush1.bf16.msra.mxu0 %v1860
  %1883 = vmatprep.subr.bf16.mxu0 0
  %1884 = vmatpush1.bf16.msra.mxu0 %v1859
  %1885 = vmatprep.subr.bf16.mxu0 0
  %1886 = vmatpush1.bf16.msra.mxu0 %v1858
  %1887 = vmatprep.subr.bf16.mxu0 0
  %1888 = vmatpush1.bf16.msra.mxu0 %v1857
  %1889 = vmatprep.subr.bf16.mxu0 0
  %1890 = vmatpush2.bf16.msra.mxu0 0
  %1891 = vmatprep.subr.bf16.mxu0 0
  %1892 = vmatpush2.bf16.msra.mxu0 0
  %1893 = vmatprep.subr.bf16.mxu0 0
  %1894 = vmatpush2.bf16.msra.mxu0 0
  %1895 = vmatprep.subr.bf16.mxu0 0
  %1896 = vmatpush2.bf16.msra.mxu0 0
  %1897 = vmatprep.subr.bf16.mxu0 0
  %1898 = vmatpush2.bf16.msra.mxu0 0
  %1899 = vmatprep.subr.bf16.mxu0 0
  %1900 = vmatpush2.bf16.msra.mxu0 0
  %1901 = vmatprep.subr.bf16.mxu0 0
  %1902 = vmatpush2.bf16.msra.mxu0 0
  %1903 = vmatprep.subr.bf16.mxu0 0
  %1904 = vmatpush2.bf16.msra.mxu0 0
  %1905 = vmatprep.mubr.bf16.mxu0 0
  %1906 = vmatmul.mubr.bf16.gmra.mxu0 %v1806
  %v1907 = vpop.f32.mrf.mxu0
  %v1908 = vadd.f32 0.0, %v1907
  %v1909 = vpop.f32.mrf.mxu0
  %v1910 = vpop.f32.mrf.mxu0
  %v1911 = vadd.f32 0.0, %v1910
  %v1912 = vpop.f32.mrf.mxu0
  %1913 = vmatprep.mubr.bf16.mxu0 0
  %1914 = vmatmul.mubr.bf16.gmra.mxu0 %v1807
  %v1915 = vpop.f32.mrf.mxu0
  %v1916 = vadd.f32 0.0, %v1915
  %v1917 = vpop.f32.mrf.mxu0
  %v1918 = vpop.f32.mrf.mxu0
  %v1919 = vadd.f32 0.0, %v1918
  %v1920 = vpop.f32.mrf.mxu0
  %1921 = vdwg.mxu0
  %v1922 = vadd.f32 %v1736, %v1908
  %v1923 = vadd.f32 %v1737, %v1911
  %v1924 = vadd.f32 %v1738, %v1916
  %v1925 = vadd.f32 %v1739, %v1919
  %s1926 = scalar_lea.vmem %s4, 128
  %v1927 = vld [vmem:[%s1926] sm:$0xf]
  %v1928 = vld [vmem:[%s1926 + $0x4] sm:$0xf]
  %v1929 = vld [vmem:[%s1926 + $0x8] sm:$0xf]
  %v1930 = vld [vmem:[%s1926 + $0xc] sm:$0xf]
  %v1935 = vunpack.c.l.b16 %v1927
  %v1936 = vunpack.c.l.b16 %v1928
  %v1937 = vunpack.c.l.b16 %v1929
  %v1938 = vunpack.c.l.b16 %v1930
  %v1939 = vpack.c.b16 %v1936, %v1935
  %v1940 = vpack.c.b16 %v1938, %v1937
  %1943 = vmatprep.subr.bf16.mxu0 0
  %1944 = vmatpush1.bf16.msra.mxu0 %v447
  %1945 = vmatprep.subr.bf16.mxu0 0
  %1946 = vmatpush1.bf16.msra.mxu0 %v446
  %1947 = vmatprep.subr.bf16.mxu0 0
  %1948 = vmatpush1.bf16.msra.mxu0 %v445
  %1949 = vmatprep.subr.bf16.mxu0 0
  %1950 = vmatpush1.bf16.msra.mxu0 %v444
  %1951 = vmatprep.subr.bf16.mxu0 0
  %1952 = vmatpush1.bf16.msra.mxu0 %v443
  %1953 = vmatprep.subr.bf16.mxu0 0
  %1954 = vmatpush1.bf16.msra.mxu0 %v442
  %1955 = vmatprep.subr.bf16.mxu0 0
  %1956 = vmatpush1.bf16.msra.mxu0 %v441
  %1957 = vmatprep.subr.bf16.mxu0 0
  %1958 = vmatpush1.bf16.msra.mxu0 %v440
  %1959 = vmatprep.subr.bf16.mxu0 0
  %1960 = vmatpush2.bf16.msra.mxu0 0
  %1961 = vmatprep.subr.bf16.mxu0 0
  %1962 = vmatpush2.bf16.msra.mxu0 0
  %1963 = vmatprep.subr.bf16.mxu0 0
  %1964 = vmatpush2.bf16.msra.mxu0 0
  %1965 = vmatprep.subr.bf16.mxu0 0
  %1966 = vmatpush2.bf16.msra.mxu0 0
  %1967 = vmatprep.subr.bf16.mxu0 0
  %1968 = vmatpush2.bf16.msra.mxu0 0
  %1969 = vmatprep.subr.bf16.mxu0 0
  %1970 = vmatpush2.bf16.msra.mxu0 0
  %1971 = vmatprep.subr.bf16.mxu0 0
  %1972 = vmatpush2.bf16.msra.mxu0 0
  %1973 = vmatprep.subr.bf16.mxu0 0
  %1974 = vmatpush2.bf16.msra.mxu0 0
  %1975 = vmatprep.mubr.bf16.mxu0 0
  %1976 = vmatmul.mubr.bf16.gmra.mxu0 %v1939
  %v1977 = vpop.f32.mrf.mxu0
  %v1978 = vadd.f32 0.0, %v1977
  %v1979 = vpop.f32.mrf.mxu0
  %v1980 = vpop.f32.mrf.mxu0
  %v1981 = vadd.f32 0.0, %v1980
  %v1982 = vpop.f32.mrf.mxu0
  %1983 = vmatprep.mubr.bf16.mxu0 0
  %1984 = vmatmul.mubr.bf16.gmra.mxu0 %v1940
  %v1985 = vpop.f32.mrf.mxu0
  %v1986 = vadd.f32 0.0, %v1985
  %v1987 = vpop.f32.mrf.mxu0
  %v1988 = vpop.f32.mrf.mxu0
  %v1989 = vadd.f32 0.0, %v1988
  %v1990 = vpop.f32.mrf.mxu0
  %1991 = vdwg.mxu0
  %v1992 = vpack.c.bf16 %v1981, %v1978
  %v1993 = vpack.c.bf16 %v1989, %v1986
  %s1994 = scalar_lea.vmem %s5, 512
  %v1995 = vld [vmem:[%s1994] sm:$0xf]
  %v1996 = vld [vmem:[%s1994 + $0x4] sm:$0xf]
  %v1997 = vld [vmem:[%s1994 + $0x8] sm:$0xf]
  %v1998 = vld [vmem:[%s1994 + $0xc] sm:$0xf]
  %v1999 = vld [vmem:[%s1994 + $0x10] sm:$0xf]
  %v2000 = vld [vmem:[%s1994 + $0x14] sm:$0xf]
  %v2001 = vld [vmem:[%s1994 + $0x18] sm:$0xf]
  %v2002 = vld [vmem:[%s1994 + $0x1c] sm:$0xf]
  %v2003 = vld [vmem:[%s1994 + $0x20] sm:$0xf]
  %v2004 = vld [vmem:[%s1994 + $0x24] sm:$0xf]
  %v2005 = vld [vmem:[%s1994 + $0x28] sm:$0xf]
  %v2006 = vld [vmem:[%s1994 + $0x2c] sm:$0xf]
  %v2007 = vld [vmem:[%s1994 + $0x30] sm:$0xf]
  %v2008 = vld [vmem:[%s1994 + $0x34] sm:$0xf]
  %v2009 = vld [vmem:[%s1994 + $0x38] sm:$0xf]
  %v2010 = vld [vmem:[%s1994 + $0x3c] sm:$0xf]
  %v2027 = vunpack.c.l.b16 %v1995
  %v2028 = vunpack.c.l.b16 %v1996
  %v2029 = vunpack.c.l.b16 %v1997
  %v2030 = vunpack.c.l.b16 %v1998
  %v2031 = vunpack.c.l.b16 %v1999
  %v2032 = vunpack.c.l.b16 %v2000
  %v2033 = vunpack.c.l.b16 %v2001
  %v2034 = vunpack.c.l.b16 %v2002
  %v2035 = vunpack.c.l.b16 %v2003
  %v2036 = vunpack.c.l.b16 %v2004
  %v2037 = vunpack.c.l.b16 %v2005
  %v2038 = vunpack.c.l.b16 %v2006
  %v2039 = vunpack.c.l.b16 %v2007
  %v2040 = vunpack.c.l.b16 %v2008
  %v2041 = vunpack.c.l.b16 %v2009
  %v2042 = vunpack.c.l.b16 %v2010
  %v2043 = vpack.c.b16 %v2028, %v2027
  %v2044 = vpack.c.b16 %v2030, %v2029
  %v2045 = vpack.c.b16 %v2032, %v2031
  %v2046 = vpack.c.b16 %v2034, %v2033
  %v2047 = vpack.c.b16 %v2036, %v2035
  %v2048 = vpack.c.b16 %v2038, %v2037
  %v2049 = vpack.c.b16 %v2040, %v2039
  %v2050 = vpack.c.b16 %v2042, %v2041
  %2059 = vmatprep.subr.bf16.mxu0 0
  %2060 = vmatpush1.bf16.msra.mxu0 %v2050
  %2061 = vmatprep.subr.bf16.mxu0 0
  %2062 = vmatpush1.bf16.msra.mxu0 %v2049
  %2063 = vmatprep.subr.bf16.mxu0 0
  %2064 = vmatpush1.bf16.msra.mxu0 %v2048
  %2065 = vmatprep.subr.bf16.mxu0 0
  %2066 = vmatpush1.bf16.msra.mxu0 %v2047
  %2067 = vmatprep.subr.bf16.mxu0 0
  %2068 = vmatpush1.bf16.msra.mxu0 %v2046
  %2069 = vmatprep.subr.bf16.mxu0 0
  %2070 = vmatpush1.bf16.msra.mxu0 %v2045
  %2071 = vmatprep.subr.bf16.mxu0 0
  %2072 = vmatpush1.bf16.msra.mxu0 %v2044
  %2073 = vmatprep.subr.bf16.mxu0 0
  %2074 = vmatpush1.bf16.msra.mxu0 %v2043
  %2075 = vmatprep.subr.bf16.mxu0 0
  %2076 = vmatpush2.bf16.msra.mxu0 0
  %2077 = vmatprep.subr.bf16.mxu0 0
  %2078 = vmatpush2.bf16.msra.mxu0 0
  %2079 = vmatprep.subr.bf16.mxu0 0
  %2080 = vmatpush2.bf16.msra.mxu0 0
  %2081 = vmatprep.subr.bf16.mxu0 0
  %2082 = vmatpush2.bf16.msra.mxu0 0
  %2083 = vmatprep.subr.bf16.mxu0 0
  %2084 = vmatpush2.bf16.msra.mxu0 0
  %2085 = vmatprep.subr.bf16.mxu0 0
  %2086 = vmatpush2.bf16.msra.mxu0 0
  %2087 = vmatprep.subr.bf16.mxu0 0
  %2088 = vmatpush2.bf16.msra.mxu0 0
  %2089 = vmatprep.subr.bf16.mxu0 0
  %2090 = vmatpush2.bf16.msra.mxu0 0
  %2091 = vmatprep.mubr.bf16.mxu0 0
  %2092 = vmatmul.mubr.bf16.gmra.mxu0 %v1992
  %v2093 = vpop.f32.mrf.mxu0
  %v2094 = vadd.f32 0.0, %v2093
  %v2095 = vpop.f32.mrf.mxu0
  %v2096 = vpop.f32.mrf.mxu0
  %v2097 = vadd.f32 0.0, %v2096
  %v2098 = vpop.f32.mrf.mxu0
  %2099 = vmatprep.mubr.bf16.mxu0 0
  %2100 = vmatmul.mubr.bf16.gmra.mxu0 %v1993
  %v2101 = vpop.f32.mrf.mxu0
  %v2102 = vadd.f32 0.0, %v2101
  %v2103 = vpop.f32.mrf.mxu0
  %v2104 = vpop.f32.mrf.mxu0
  %v2105 = vadd.f32 0.0, %v2104
  %v2106 = vpop.f32.mrf.mxu0
  %2107 = vdwg.mxu0
  %v2108 = vadd.f32 %v1922, %v2094
  %v2109 = vadd.f32 %v1923, %v2097
  %v2110 = vadd.f32 %v1924, %v2102
  %v2111 = vadd.f32 %v1925, %v2105
  %s2112 = scalar_lea.vmem %s4, 144
  %v2113 = vld [vmem:[%s2112] sm:$0xf]
  %v2114 = vld [vmem:[%s2112 + $0x4] sm:$0xf]
  %v2115 = vld [vmem:[%s2112 + $0x8] sm:$0xf]
  %v2116 = vld [vmem:[%s2112 + $0xc] sm:$0xf]
  %v2121 = vunpack.c.l.b16 %v2113
  %v2122 = vunpack.c.l.b16 %v2114
  %v2123 = vunpack.c.l.b16 %v2115
  %v2124 = vunpack.c.l.b16 %v2116
  %v2125 = vpack.c.b16 %v2122, %v2121
  %v2126 = vpack.c.b16 %v2124, %v2123
  %2129 = vmatprep.subr.bf16.mxu0 0
  %2130 = vmatpush1.bf16.msra.mxu0 %v447
  %2131 = vmatprep.subr.bf16.mxu0 0
  %2132 = vmatpush1.bf16.msra.mxu0 %v446
  %2133 = vmatprep.subr.bf16.mxu0 0
  %2134 = vmatpush1.bf16.msra.mxu0 %v445
  %2135 = vmatprep.subr.bf16.mxu0 0
  %2136 = vmatpush1.bf16.msra.mxu0 %v444
  %2137 = vmatprep.subr.bf16.mxu0 0
  %2138 = vmatpush1.bf16.msra.mxu0 %v443
  %2139 = vmatprep.subr.bf16.mxu0 0
  %2140 = vmatpush1.bf16.msra.mxu0 %v442
  %2141 = vmatprep.subr.bf16.mxu0 0
  %2142 = vmatpush1.bf16.msra.mxu0 %v441
  %2143 = vmatprep.subr.bf16.mxu0 0
  %2144 = vmatpush1.bf16.msra.mxu0 %v440
  %2145 = vmatprep.subr.bf16.mxu0 0
  %2146 = vmatpush2.bf16.msra.mxu0 0
  %2147 = vmatprep.subr.bf16.mxu0 0
  %2148 = vmatpush2.bf16.msra.mxu0 0
  %2149 = vmatprep.subr.bf16.mxu0 0
  %2150 = vmatpush2.bf16.msra.mxu0 0
  %2151 = vmatprep.subr.bf16.mxu0 0
  %2152 = vmatpush2.bf16.msra.mxu0 0
  %2153 = vmatprep.subr.bf16.mxu0 0
  %2154 = vmatpush2.bf16.msra.mxu0 0
  %2155 = vmatprep.subr.bf16.mxu0 0
  %2156 = vmatpush2.bf16.msra.mxu0 0
  %2157 = vmatprep.subr.bf16.mxu0 0
  %2158 = vmatpush2.bf16.msra.mxu0 0
  %2159 = vmatprep.subr.bf16.mxu0 0
  %2160 = vmatpush2.bf16.msra.mxu0 0
  %2161 = vmatprep.mubr.bf16.mxu0 0
  %2162 = vmatmul.mubr.bf16.gmra.mxu0 %v2125
  %v2163 = vpop.f32.mrf.mxu0
  %v2164 = vadd.f32 0.0, %v2163
  %v2165 = vpop.f32.mrf.mxu0
  %v2166 = vpop.f32.mrf.mxu0
  %v2167 = vadd.f32 0.0, %v2166
  %v2168 = vpop.f32.mrf.mxu0
  %2169 = vmatprep.mubr.bf16.mxu0 0
  %2170 = vmatmul.mubr.bf16.gmra.mxu0 %v2126
  %v2171 = vpop.f32.mrf.mxu0
  %v2172 = vadd.f32 0.0, %v2171
  %v2173 = vpop.f32.mrf.mxu0
  %v2174 = vpop.f32.mrf.mxu0
  %v2175 = vadd.f32 0.0, %v2174
  %v2176 = vpop.f32.mrf.mxu0
  %2177 = vdwg.mxu0
  %v2178 = vpack.c.bf16 %v2167, %v2164
  %v2179 = vpack.c.bf16 %v2175, %v2172
  %s2180 = scalar_lea.vmem %s5, 576
  %v2181 = vld [vmem:[%s2180] sm:$0xf]
  %v2182 = vld [vmem:[%s2180 + $0x4] sm:$0xf]
  %v2183 = vld [vmem:[%s2180 + $0x8] sm:$0xf]
  %v2184 = vld [vmem:[%s2180 + $0xc] sm:$0xf]
  %v2185 = vld [vmem:[%s2180 + $0x10] sm:$0xf]
  %v2186 = vld [vmem:[%s2180 + $0x14] sm:$0xf]
  %v2187 = vld [vmem:[%s2180 + $0x18] sm:$0xf]
  %v2188 = vld [vmem:[%s2180 + $0x1c] sm:$0xf]
  %v2189 = vld [vmem:[%s2180 + $0x20] sm:$0xf]
  %v2190 = vld [vmem:[%s2180 + $0x24] sm:$0xf]
  %v2191 = vld [vmem:[%s2180 + $0x28] sm:$0xf]
  %v2192 = vld [vmem:[%s2180 + $0x2c] sm:$0xf]
  %v2193 = vld [vmem:[%s2180 + $0x30] sm:$0xf]
  %v2194 = vld [vmem:[%s2180 + $0x34] sm:$0xf]
  %v2195 = vld [vmem:[%s2180 + $0x38] sm:$0xf]
  %v2196 = vld [vmem:[%s2180 + $0x3c] sm:$0xf]
  %v2213 = vunpack.c.l.b16 %v2181
  %v2214 = vunpack.c.l.b16 %v2182
  %v2215 = vunpack.c.l.b16 %v2183
  %v2216 = vunpack.c.l.b16 %v2184
  %v2217 = vunpack.c.l.b16 %v2185
  %v2218 = vunpack.c.l.b16 %v2186
  %v2219 = vunpack.c.l.b16 %v2187
  %v2220 = vunpack.c.l.b16 %v2188
  %v2221 = vunpack.c.l.b16 %v2189
  %v2222 = vunpack.c.l.b16 %v2190
  %v2223 = vunpack.c.l.b16 %v2191
  %v2224 = vunpack.c.l.b16 %v2192
  %v2225 = vunpack.c.l.b16 %v2193
  %v2226 = vunpack.c.l.b16 %v2194
  %v2227 = vunpack.c.l.b16 %v2195
  %v2228 = vunpack.c.l.b16 %v2196
  %v2229 = vpack.c.b16 %v2214, %v2213
  %v2230 = vpack.c.b16 %v2216, %v2215
  %v2231 = vpack.c.b16 %v2218, %v2217
  %v2232 = vpack.c.b16 %v2220, %v2219
  %v2233 = vpack.c.b16 %v2222, %v2221
  %v2234 = vpack.c.b16 %v2224, %v2223
  %v2235 = vpack.c.b16 %v2226, %v2225
  %v2236 = vpack.c.b16 %v2228, %v2227
  %2245 = vmatprep.subr.bf16.mxu0 0
  %2246 = vmatpush1.bf16.msra.mxu0 %v2236
  %2247 = vmatprep.subr.bf16.mxu0 0
  %2248 = vmatpush1.bf16.msra.mxu0 %v2235
  %2249 = vmatprep.subr.bf16.mxu0 0
  %2250 = vmatpush1.bf16.msra.mxu0 %v2234
  %2251 = vmatprep.subr.bf16.mxu0 0
  %2252 = vmatpush1.bf16.msra.mxu0 %v2233
  %2253 = vmatprep.subr.bf16.mxu0 0
  %2254 = vmatpush1.bf16.msra.mxu0 %v2232
  %2255 = vmatprep.subr.bf16.mxu0 0
  %2256 = vmatpush1.bf16.msra.mxu0 %v2231
  %2257 = vmatprep.subr.bf16.mxu0 0
  %2258 = vmatpush1.bf16.msra.mxu0 %v2230
  %2259 = vmatprep.subr.bf16.mxu0 0
  %2260 = vmatpush1.bf16.msra.mxu0 %v2229
  %2261 = vmatprep.subr.bf16.mxu0 0
  %2262 = vmatpush2.bf16.msra.mxu0 0
  %2263 = vmatprep.subr.bf16.mxu0 0
  %2264 = vmatpush2.bf16.msra.mxu0 0
  %2265 = vmatprep.subr.bf16.mxu0 0
  %2266 = vmatpush2.bf16.msra.mxu0 0
  %2267 = vmatprep.subr.bf16.mxu0 0
  %2268 = vmatpush2.bf16.msra.mxu0 0
  %2269 = vmatprep.subr.bf16.mxu0 0
  %2270 = vmatpush2.bf16.msra.mxu0 0
  %2271 = vmatprep.subr.bf16.mxu0 0
  %2272 = vmatpush2.bf16.msra.mxu0 0
  %2273 = vmatprep.subr.bf16.mxu0 0
  %2274 = vmatpush2.bf16.msra.mxu0 0
  %2275 = vmatprep.subr.bf16.mxu0 0
  %2276 = vmatpush2.bf16.msra.mxu0 0
  %2277 = vmatprep.mubr.bf16.mxu0 0
  %2278 = vmatmul.mubr.bf16.gmra.mxu0 %v2178
  %v2279 = vpop.f32.mrf.mxu0
  %v2280 = vadd.f32 0.0, %v2279
  %v2281 = vpop.f32.mrf.mxu0
  %v2282 = vpop.f32.mrf.mxu0
  %v2283 = vadd.f32 0.0, %v2282
  %v2284 = vpop.f32.mrf.mxu0
  %2285 = vmatprep.mubr.bf16.mxu0 0
  %2286 = vmatmul.mubr.bf16.gmra.mxu0 %v2179
  %v2287 = vpop.f32.mrf.mxu0
  %v2288 = vadd.f32 0.0, %v2287
  %v2289 = vpop.f32.mrf.mxu0
  %v2290 = vpop.f32.mrf.mxu0
  %v2291 = vadd.f32 0.0, %v2290
  %v2292 = vpop.f32.mrf.mxu0
  %2293 = vdwg.mxu0
  %v2294 = vadd.f32 %v2108, %v2280
  %v2295 = vadd.f32 %v2109, %v2283
  %v2296 = vadd.f32 %v2110, %v2288
  %v2297 = vadd.f32 %v2111, %v2291
  %s2298 = scalar_lea.vmem %s4, 160
  %v2299 = vld [vmem:[%s2298] sm:$0xf]
  %v2300 = vld [vmem:[%s2298 + $0x4] sm:$0xf]
  %v2301 = vld [vmem:[%s2298 + $0x8] sm:$0xf]
  %v2302 = vld [vmem:[%s2298 + $0xc] sm:$0xf]
  %v2307 = vunpack.c.l.b16 %v2299
  %v2308 = vunpack.c.l.b16 %v2300
  %v2309 = vunpack.c.l.b16 %v2301
  %v2310 = vunpack.c.l.b16 %v2302
  %v2311 = vpack.c.b16 %v2308, %v2307
  %v2312 = vpack.c.b16 %v2310, %v2309
  %2315 = vmatprep.subr.bf16.mxu0 0
  %2316 = vmatpush1.bf16.msra.mxu0 %v447
  %2317 = vmatprep.subr.bf16.mxu0 0
  %2318 = vmatpush1.bf16.msra.mxu0 %v446
  %2319 = vmatprep.subr.bf16.mxu0 0
  %2320 = vmatpush1.bf16.msra.mxu0 %v445
  %2321 = vmatprep.subr.bf16.mxu0 0
  %2322 = vmatpush1.bf16.msra.mxu0 %v444
  %2323 = vmatprep.subr.bf16.mxu0 0
  %2324 = vmatpush1.bf16.msra.mxu0 %v443
  %2325 = vmatprep.subr.bf16.mxu0 0
  %2326 = vmatpush1.bf16.msra.mxu0 %v442
  %2327 = vmatprep.subr.bf16.mxu0 0
  %2328 = vmatpush1.bf16.msra.mxu0 %v441
  %2329 = vmatprep.subr.bf16.mxu0 0
  %2330 = vmatpush1.bf16.msra.mxu0 %v440
  %2331 = vmatprep.subr.bf16.mxu0 0
  %2332 = vmatpush2.bf16.msra.mxu0 0
  %2333 = vmatprep.subr.bf16.mxu0 0
  %2334 = vmatpush2.bf16.msra.mxu0 0
  %2335 = vmatprep.subr.bf16.mxu0 0
  %2336 = vmatpush2.bf16.msra.mxu0 0
  %2337 = vmatprep.subr.bf16.mxu0 0
  %2338 = vmatpush2.bf16.msra.mxu0 0
  %2339 = vmatprep.subr.bf16.mxu0 0
  %2340 = vmatpush2.bf16.msra.mxu0 0
  %2341 = vmatprep.subr.bf16.mxu0 0
  %2342 = vmatpush2.bf16.msra.mxu0 0
  %2343 = vmatprep.subr.bf16.mxu0 0
  %2344 = vmatpush2.bf16.msra.mxu0 0
  %2345 = vmatprep.subr.bf16.mxu0 0
  %2346 = vmatpush2.bf16.msra.mxu0 0
  %2347 = vmatprep.mubr.bf16.mxu0 0
  %2348 = vmatmul.mubr.bf16.gmra.mxu0 %v2311
  %v2349 = vpop.f32.mrf.mxu0
  %v2350 = vadd.f32 0.0, %v2349
  %v2351 = vpop.f32.mrf.mxu0
  %v2352 = vpop.f32.mrf.mxu0
  %v2353 = vadd.f32 0.0, %v2352
  %v2354 = vpop.f32.mrf.mxu0
  %2355 = vmatprep.mubr.bf16.mxu0 0
  %2356 = vmatmul.mubr.bf16.gmra.mxu0 %v2312
  %v2357 = vpop.f32.mrf.mxu0
  %v2358 = vadd.f32 0.0, %v2357
  %v2359 = vpop.f32.mrf.mxu0
  %v2360 = vpop.f32.mrf.mxu0
  %v2361 = vadd.f32 0.0, %v2360
  %v2362 = vpop.f32.mrf.mxu0
  %2363 = vdwg.mxu0
  %v2364 = vpack.c.bf16 %v2353, %v2350
  %v2365 = vpack.c.bf16 %v2361, %v2358
  %s2366 = scalar_lea.vmem %s5, 640
  %v2367 = vld [vmem:[%s2366] sm:$0xf]
  %v2368 = vld [vmem:[%s2366 + $0x4] sm:$0xf]
  %v2369 = vld [vmem:[%s2366 + $0x8] sm:$0xf]
  %v2370 = vld [vmem:[%s2366 + $0xc] sm:$0xf]
  %v2371 = vld [vmem:[%s2366 + $0x10] sm:$0xf]
  %v2372 = vld [vmem:[%s2366 + $0x14] sm:$0xf]
  %v2373 = vld [vmem:[%s2366 + $0x18] sm:$0xf]
  %v2374 = vld [vmem:[%s2366 + $0x1c] sm:$0xf]
  %v2375 = vld [vmem:[%s2366 + $0x20] sm:$0xf]
  %v2376 = vld [vmem:[%s2366 + $0x24] sm:$0xf]
  %v2377 = vld [vmem:[%s2366 + $0x28] sm:$0xf]
  %v2378 = vld [vmem:[%s2366 + $0x2c] sm:$0xf]
  %v2379 = vld [vmem:[%s2366 + $0x30] sm:$0xf]
  %v2380 = vld [vmem:[%s2366 + $0x34] sm:$0xf]
  %v2381 = vld [vmem:[%s2366 + $0x38] sm:$0xf]
  %v2382 = vld [vmem:[%s2366 + $0x3c] sm:$0xf]
  %v2399 = vunpack.c.l.b16 %v2367
  %v2400 = vunpack.c.l.b16 %v2368
  %v2401 = vunpack.c.l.b16 %v2369
  %v2402 = vunpack.c.l.b16 %v2370
  %v2403 = vunpack.c.l.b16 %v2371
  %v2404 = vunpack.c.l.b16 %v2372
  %v2405 = vunpack.c.l.b16 %v2373
  %v2406 = vunpack.c.l.b16 %v2374
  %v2407 = vunpack.c.l.b16 %v2375
  %v2408 = vunpack.c.l.b16 %v2376
  %v2409 = vunpack.c.l.b16 %v2377
  %v2410 = vunpack.c.l.b16 %v2378
  %v2411 = vunpack.c.l.b16 %v2379
  %v2412 = vunpack.c.l.b16 %v2380
  %v2413 = vunpack.c.l.b16 %v2381
  %v2414 = vunpack.c.l.b16 %v2382
  %v2415 = vpack.c.b16 %v2400, %v2399
  %v2416 = vpack.c.b16 %v2402, %v2401
  %v2417 = vpack.c.b16 %v2404, %v2403
  %v2418 = vpack.c.b16 %v2406, %v2405
  %v2419 = vpack.c.b16 %v2408, %v2407
  %v2420 = vpack.c.b16 %v2410, %v2409
  %v2421 = vpack.c.b16 %v2412, %v2411
  %v2422 = vpack.c.b16 %v2414, %v2413
  %2431 = vmatprep.subr.bf16.mxu0 0
  %2432 = vmatpush1.bf16.msra.mxu0 %v2422
  %2433 = vmatprep.subr.bf16.mxu0 0
  %2434 = vmatpush1.bf16.msra.mxu0 %v2421
  %2435 = vmatprep.subr.bf16.mxu0 0
  %2436 = vmatpush1.bf16.msra.mxu0 %v2420
  %2437 = vmatprep.subr.bf16.mxu0 0
  %2438 = vmatpush1.bf16.msra.mxu0 %v2419
  %2439 = vmatprep.subr.bf16.mxu0 0
  %2440 = vmatpush1.bf16.msra.mxu0 %v2418
  %2441 = vmatprep.subr.bf16.mxu0 0
  %2442 = vmatpush1.bf16.msra.mxu0 %v2417
  %2443 = vmatprep.subr.bf16.mxu0 0
  %2444 = vmatpush1.bf16.msra.mxu0 %v2416
  %2445 = vmatprep.subr.bf16.mxu0 0
  %2446 = vmatpush1.bf16.msra.mxu0 %v2415
  %2447 = vmatprep.subr.bf16.mxu0 0
  %2448 = vmatpush2.bf16.msra.mxu0 0
  %2449 = vmatprep.subr.bf16.mxu0 0
  %2450 = vmatpush2.bf16.msra.mxu0 0
  %2451 = vmatprep.subr.bf16.mxu0 0
  %2452 = vmatpush2.bf16.msra.mxu0 0
  %2453 = vmatprep.subr.bf16.mxu0 0
  %2454 = vmatpush2.bf16.msra.mxu0 0
  %2455 = vmatprep.subr.bf16.mxu0 0
  %2456 = vmatpush2.bf16.msra.mxu0 0
  %2457 = vmatprep.subr.bf16.mxu0 0
  %2458 = vmatpush2.bf16.msra.mxu0 0
  %2459 = vmatprep.subr.bf16.mxu0 0
  %2460 = vmatpush2.bf16.msra.mxu0 0
  %2461 = vmatprep.subr.bf16.mxu0 0
  %2462 = vmatpush2.bf16.msra.mxu0 0
  %2463 = vmatprep.mubr.bf16.mxu0 0
  %2464 = vmatmul.mubr.bf16.gmra.mxu0 %v2364
  %v2465 = vpop.f32.mrf.mxu0
  %v2466 = vadd.f32 0.0, %v2465
  %v2467 = vpop.f32.mrf.mxu0
  %v2468 = vpop.f32.mrf.mxu0
  %v2469 = vadd.f32 0.0, %v2468
  %v2470 = vpop.f32.mrf.mxu0
  %2471 = vmatprep.mubr.bf16.mxu0 0
  %2472 = vmatmul.mubr.bf16.gmra.mxu0 %v2365
  %v2473 = vpop.f32.mrf.mxu0
  %v2474 = vadd.f32 0.0, %v2473
  %v2475 = vpop.f32.mrf.mxu0
  %v2476 = vpop.f32.mrf.mxu0
  %v2477 = vadd.f32 0.0, %v2476
  %v2478 = vpop.f32.mrf.mxu0
  %2479 = vdwg.mxu0
  %v2480 = vadd.f32 %v2294, %v2466
  %v2481 = vadd.f32 %v2295, %v2469
  %v2482 = vadd.f32 %v2296, %v2474
  %v2483 = vadd.f32 %v2297, %v2477
  %s2484 = scalar_lea.vmem %s4, 176
  %v2485 = vld [vmem:[%s2484] sm:$0xf]
  %v2486 = vld [vmem:[%s2484 + $0x4] sm:$0xf]
  %v2487 = vld [vmem:[%s2484 + $0x8] sm:$0xf]
  %v2488 = vld [vmem:[%s2484 + $0xc] sm:$0xf]
  %v2493 = vunpack.c.l.b16 %v2485
  %v2494 = vunpack.c.l.b16 %v2486
  %v2495 = vunpack.c.l.b16 %v2487
  %v2496 = vunpack.c.l.b16 %v2488
  %v2497 = vpack.c.b16 %v2494, %v2493
  %v2498 = vpack.c.b16 %v2496, %v2495
  %2501 = vmatprep.subr.bf16.mxu0 0
  %2502 = vmatpush1.bf16.msra.mxu0 %v447
  %2503 = vmatprep.subr.bf16.mxu0 0
  %2504 = vmatpush1.bf16.msra.mxu0 %v446
  %2505 = vmatprep.subr.bf16.mxu0 0
  %2506 = vmatpush1.bf16.msra.mxu0 %v445
  %2507 = vmatprep.subr.bf16.mxu0 0
  %2508 = vmatpush1.bf16.msra.mxu0 %v444
  %2509 = vmatprep.subr.bf16.mxu0 0
  %2510 = vmatpush1.bf16.msra.mxu0 %v443
  %2511 = vmatprep.subr.bf16.mxu0 0
  %2512 = vmatpush1.bf16.msra.mxu0 %v442
  %2513 = vmatprep.subr.bf16.mxu0 0
  %2514 = vmatpush1.bf16.msra.mxu0 %v441
  %2515 = vmatprep.subr.bf16.mxu0 0
  %2516 = vmatpush1.bf16.msra.mxu0 %v440
  %2517 = vmatprep.subr.bf16.mxu0 0
  %2518 = vmatpush2.bf16.msra.mxu0 0
  %2519 = vmatprep.subr.bf16.mxu0 0
  %2520 = vmatpush2.bf16.msra.mxu0 0
  %2521 = vmatprep.subr.bf16.mxu0 0
  %2522 = vmatpush2.bf16.msra.mxu0 0
  %2523 = vmatprep.subr.bf16.mxu0 0
  %2524 = vmatpush2.bf16.msra.mxu0 0
  %2525 = vmatprep.subr.bf16.mxu0 0
  %2526 = vmatpush2.bf16.msra.mxu0 0
  %2527 = vmatprep.subr.bf16.mxu0 0
  %2528 = vmatpush2.bf16.msra.mxu0 0
  %2529 = vmatprep.subr.bf16.mxu0 0
  %2530 = vmatpush2.bf16.msra.mxu0 0
  %2531 = vmatprep.subr.bf16.mxu0 0
  %2532 = vmatpush2.bf16.msra.mxu0 0
  %2533 = vmatprep.mubr.bf16.mxu0 0
  %2534 = vmatmul.mubr.bf16.gmra.mxu0 %v2497
  %v2535 = vpop.f32.mrf.mxu0
  %v2536 = vadd.f32 0.0, %v2535
  %v2537 = vpop.f32.mrf.mxu0
  %v2538 = vpop.f32.mrf.mxu0
  %v2539 = vadd.f32 0.0, %v2538
  %v2540 = vpop.f32.mrf.mxu0
  %2541 = vmatprep.mubr.bf16.mxu0 0
  %2542 = vmatmul.mubr.bf16.gmra.mxu0 %v2498
  %v2543 = vpop.f32.mrf.mxu0
  %v2544 = vadd.f32 0.0, %v2543
  %v2545 = vpop.f32.mrf.mxu0
  %v2546 = vpop.f32.mrf.mxu0
  %v2547 = vadd.f32 0.0, %v2546
  %v2548 = vpop.f32.mrf.mxu0
  %2549 = vdwg.mxu0
  %v2550 = vpack.c.bf16 %v2539, %v2536
  %v2551 = vpack.c.bf16 %v2547, %v2544
  %s2552 = scalar_lea.vmem %s5, 704
  %v2553 = vld [vmem:[%s2552] sm:$0xf]
  %v2554 = vld [vmem:[%s2552 + $0x4] sm:$0xf]
  %v2555 = vld [vmem:[%s2552 + $0x8] sm:$0xf]
  %v2556 = vld [vmem:[%s2552 + $0xc] sm:$0xf]
  %v2557 = vld [vmem:[%s2552 + $0x10] sm:$0xf]
  %v2558 = vld [vmem:[%s2552 + $0x14] sm:$0xf]
  %v2559 = vld [vmem:[%s2552 + $0x18] sm:$0xf]
  %v2560 = vld [vmem:[%s2552 + $0x1c] sm:$0xf]
  %v2561 = vld [vmem:[%s2552 + $0x20] sm:$0xf]
  %v2562 = vld [vmem:[%s2552 + $0x24] sm:$0xf]
  %v2563 = vld [vmem:[%s2552 + $0x28] sm:$0xf]
  %v2564 = vld [vmem:[%s2552 + $0x2c] sm:$0xf]
  %v2565 = vld [vmem:[%s2552 + $0x30] sm:$0xf]
  %v2566 = vld [vmem:[%s2552 + $0x34] sm:$0xf]
  %v2567 = vld [vmem:[%s2552 + $0x38] sm:$0xf]
  %v2568 = vld [vmem:[%s2552 + $0x3c] sm:$0xf]
  %v2585 = vunpack.c.l.b16 %v2553
  %v2586 = vunpack.c.l.b16 %v2554
  %v2587 = vunpack.c.l.b16 %v2555
  %v2588 = vunpack.c.l.b16 %v2556
  %v2589 = vunpack.c.l.b16 %v2557
  %v2590 = vunpack.c.l.b16 %v2558
  %v2591 = vunpack.c.l.b16 %v2559
  %v2592 = vunpack.c.l.b16 %v2560
  %v2593 = vunpack.c.l.b16 %v2561
  %v2594 = vunpack.c.l.b16 %v2562
  %v2595 = vunpack.c.l.b16 %v2563
  %v2596 = vunpack.c.l.b16 %v2564
  %v2597 = vunpack.c.l.b16 %v2565
  %v2598 = vunpack.c.l.b16 %v2566
  %v2599 = vunpack.c.l.b16 %v2567
  %v2600 = vunpack.c.l.b16 %v2568
  %v2601 = vpack.c.b16 %v2586, %v2585
  %v2602 = vpack.c.b16 %v2588, %v2587
  %v2603 = vpack.c.b16 %v2590, %v2589
  %v2604 = vpack.c.b16 %v2592, %v2591
  %v2605 = vpack.c.b16 %v2594, %v2593
  %v2606 = vpack.c.b16 %v2596, %v2595
  %v2607 = vpack.c.b16 %v2598, %v2597
  %v2608 = vpack.c.b16 %v2600, %v2599
  %2617 = vmatprep.subr.bf16.mxu0 0
  %2618 = vmatpush1.bf16.msra.mxu0 %v2608
  %2619 = vmatprep.subr.bf16.mxu0 0
  %2620 = vmatpush1.bf16.msra.mxu0 %v2607
  %2621 = vmatprep.subr.bf16.mxu0 0
  %2622 = vmatpush1.bf16.msra.mxu0 %v2606
  %2623 = vmatprep.subr.bf16.mxu0 0
  %2624 = vmatpush1.bf16.msra.mxu0 %v2605
  %2625 = vmatprep.subr.bf16.mxu0 0
  %2626 = vmatpush1.bf16.msra.mxu0 %v2604
  %2627 = vmatprep.subr.bf16.mxu0 0
  %2628 = vmatpush1.bf16.msra.mxu0 %v2603
  %2629 = vmatprep.subr.bf16.mxu0 0
  %2630 = vmatpush1.bf16.msra.mxu0 %v2602
  %2631 = vmatprep.subr.bf16.mxu0 0
  %2632 = vmatpush1.bf16.msra.mxu0 %v2601
  %2633 = vmatprep.subr.bf16.mxu0 0
  %2634 = vmatpush2.bf16.msra.mxu0 0
  %2635 = vmatprep.subr.bf16.mxu0 0
  %2636 = vmatpush2.bf16.msra.mxu0 0
  %2637 = vmatprep.subr.bf16.mxu0 0
  %2638 = vmatpush2.bf16.msra.mxu0 0
  %2639 = vmatprep.subr.bf16.mxu0 0
  %2640 = vmatpush2.bf16.msra.mxu0 0
  %2641 = vmatprep.subr.bf16.mxu0 0
  %2642 = vmatpush2.bf16.msra.mxu0 0
  %2643 = vmatprep.subr.bf16.mxu0 0
  %2644 = vmatpush2.bf16.msra.mxu0 0
  %2645 = vmatprep.subr.bf16.mxu0 0
  %2646 = vmatpush2.bf16.msra.mxu0 0
  %2647 = vmatprep.subr.bf16.mxu0 0
  %2648 = vmatpush2.bf16.msra.mxu0 0
  %2649 = vmatprep.mubr.bf16.mxu0 0
  %2650 = vmatmul.mubr.bf16.gmra.mxu0 %v2550
  %v2651 = vpop.f32.mrf.mxu0
  %v2652 = vadd.f32 0.0, %v2651
  %v2653 = vpop.f32.mrf.mxu0
  %v2654 = vpop.f32.mrf.mxu0
  %v2655 = vadd.f32 0.0, %v2654
  %v2656 = vpop.f32.mrf.mxu0
  %2657 = vmatprep.mubr.bf16.mxu0 0
  %2658 = vmatmul.mubr.bf16.gmra.mxu0 %v2551
  %v2659 = vpop.f32.mrf.mxu0
  %v2660 = vadd.f32 0.0, %v2659
  %v2661 = vpop.f32.mrf.mxu0
  %v2662 = vpop.f32.mrf.mxu0
  %v2663 = vadd.f32 0.0, %v2662
  %v2664 = vpop.f32.mrf.mxu0
  %2665 = vdwg.mxu0
  %v2666 = vadd.f32 %v2480, %v2652
  %v2667 = vadd.f32 %v2481, %v2655
  %v2668 = vadd.f32 %v2482, %v2660
  %v2669 = vadd.f32 %v2483, %v2663
  %s2670 = scalar_lea.vmem %s4, 192
  %v2671 = vld [vmem:[%s2670] sm:$0xf]
  %v2672 = vld [vmem:[%s2670 + $0x4] sm:$0xf]
  %v2673 = vld [vmem:[%s2670 + $0x8] sm:$0xf]
  %v2674 = vld [vmem:[%s2670 + $0xc] sm:$0xf]
  %v2679 = vunpack.c.l.b16 %v2671
  %v2680 = vunpack.c.l.b16 %v2672
  %v2681 = vunpack.c.l.b16 %v2673
  %v2682 = vunpack.c.l.b16 %v2674
  %v2683 = vpack.c.b16 %v2680, %v2679
  %v2684 = vpack.c.b16 %v2682, %v2681
  %2687 = vmatprep.subr.bf16.mxu0 0
  %2688 = vmatpush1.bf16.msra.mxu0 %v447
  %2689 = vmatprep.subr.bf16.mxu0 0
  %2690 = vmatpush1.bf16.msra.mxu0 %v446
  %2691 = vmatprep.subr.bf16.mxu0 0
  %2692 = vmatpush1.bf16.msra.mxu0 %v445
  %2693 = vmatprep.subr.bf16.mxu0 0
  %2694 = vmatpush1.bf16.msra.mxu0 %v444
  %2695 = vmatprep.subr.bf16.mxu0 0
  %2696 = vmatpush1.bf16.msra.mxu0 %v443
  %2697 = vmatprep.subr.bf16.mxu0 0
  %2698 = vmatpush1.bf16.msra.mxu0 %v442
  %2699 = vmatprep.subr.bf16.mxu0 0
  %2700 = vmatpush1.bf16.msra.mxu0 %v441
  %2701 = vmatprep.subr.bf16.mxu0 0
  %2702 = vmatpush1.bf16.msra.mxu0 %v440
  %2703 = vmatprep.subr.bf16.mxu0 0
  %2704 = vmatpush2.bf16.msra.mxu0 0
  %2705 = vmatprep.subr.bf16.mxu0 0
  %2706 = vmatpush2.bf16.msra.mxu0 0
  %2707 = vmatprep.subr.bf16.mxu0 0
  %2708 = vmatpush2.bf16.msra.mxu0 0
  %2709 = vmatprep.subr.bf16.mxu0 0
  %2710 = vmatpush2.bf16.msra.mxu0 0
  %2711 = vmatprep.subr.bf16.mxu0 0
  %2712 = vmatpush2.bf16.msra.mxu0 0
  %2713 = vmatprep.subr.bf16.mxu0 0
  %2714 = vmatpush2.bf16.msra.mxu0 0
  %2715 = vmatprep.subr.bf16.mxu0 0
  %2716 = vmatpush2.bf16.msra.mxu0 0
  %2717 = vmatprep.subr.bf16.mxu0 0
  %2718 = vmatpush2.bf16.msra.mxu0 0
  %2719 = vmatprep.mubr.bf16.mxu0 0
  %2720 = vmatmul.mubr.bf16.gmra.mxu0 %v2683
  %v2721 = vpop.f32.mrf.mxu0
  %v2722 = vadd.f32 0.0, %v2721
  %v2723 = vpop.f32.mrf.mxu0
  %v2724 = vpop.f32.mrf.mxu0
  %v2725 = vadd.f32 0.0, %v2724
  %v2726 = vpop.f32.mrf.mxu0
  %2727 = vmatprep.mubr.bf16.mxu0 0
  %2728 = vmatmul.mubr.bf16.gmra.mxu0 %v2684
  %v2729 = vpop.f32.mrf.mxu0
  %v2730 = vadd.f32 0.0, %v2729
  %v2731 = vpop.f32.mrf.mxu0
  %v2732 = vpop.f32.mrf.mxu0
  %v2733 = vadd.f32 0.0, %v2732
  %v2734 = vpop.f32.mrf.mxu0
  %2735 = vdwg.mxu0
  %v2736 = vpack.c.bf16 %v2725, %v2722
  %v2737 = vpack.c.bf16 %v2733, %v2730
  %s2738 = scalar_lea.vmem %s5, 768
  %v2739 = vld [vmem:[%s2738] sm:$0xf]
  %v2740 = vld [vmem:[%s2738 + $0x4] sm:$0xf]
  %v2741 = vld [vmem:[%s2738 + $0x8] sm:$0xf]
  %v2742 = vld [vmem:[%s2738 + $0xc] sm:$0xf]
  %v2743 = vld [vmem:[%s2738 + $0x10] sm:$0xf]
  %v2744 = vld [vmem:[%s2738 + $0x14] sm:$0xf]
  %v2745 = vld [vmem:[%s2738 + $0x18] sm:$0xf]
  %v2746 = vld [vmem:[%s2738 + $0x1c] sm:$0xf]
  %v2747 = vld [vmem:[%s2738 + $0x20] sm:$0xf]
  %v2748 = vld [vmem:[%s2738 + $0x24] sm:$0xf]
  %v2749 = vld [vmem:[%s2738 + $0x28] sm:$0xf]
  %v2750 = vld [vmem:[%s2738 + $0x2c] sm:$0xf]
  %v2751 = vld [vmem:[%s2738 + $0x30] sm:$0xf]
  %v2752 = vld [vmem:[%s2738 + $0x34] sm:$0xf]
  %v2753 = vld [vmem:[%s2738 + $0x38] sm:$0xf]
  %v2754 = vld [vmem:[%s2738 + $0x3c] sm:$0xf]
  %v2771 = vunpack.c.l.b16 %v2739
  %v2772 = vunpack.c.l.b16 %v2740
  %v2773 = vunpack.c.l.b16 %v2741
  %v2774 = vunpack.c.l.b16 %v2742
  %v2775 = vunpack.c.l.b16 %v2743
  %v2776 = vunpack.c.l.b16 %v2744
  %v2777 = vunpack.c.l.b16 %v2745
  %v2778 = vunpack.c.l.b16 %v2746
  %v2779 = vunpack.c.l.b16 %v2747
  %v2780 = vunpack.c.l.b16 %v2748
  %v2781 = vunpack.c.l.b16 %v2749
  %v2782 = vunpack.c.l.b16 %v2750
  %v2783 = vunpack.c.l.b16 %v2751
  %v2784 = vunpack.c.l.b16 %v2752
  %v2785 = vunpack.c.l.b16 %v2753
  %v2786 = vunpack.c.l.b16 %v2754
  %v2787 = vpack.c.b16 %v2772, %v2771
  %v2788 = vpack.c.b16 %v2774, %v2773
  %v2789 = vpack.c.b16 %v2776, %v2775
  %v2790 = vpack.c.b16 %v2778, %v2777
  %v2791 = vpack.c.b16 %v2780, %v2779
  %v2792 = vpack.c.b16 %v2782, %v2781
  %v2793 = vpack.c.b16 %v2784, %v2783
  %v2794 = vpack.c.b16 %v2786, %v2785
  %2803 = vmatprep.subr.bf16.mxu0 0
  %2804 = vmatpush1.bf16.msra.mxu0 %v2794
  %2805 = vmatprep.subr.bf16.mxu0 0
  %2806 = vmatpush1.bf16.msra.mxu0 %v2793
  %2807 = vmatprep.subr.bf16.mxu0 0
  %2808 = vmatpush1.bf16.msra.mxu0 %v2792
  %2809 = vmatprep.subr.bf16.mxu0 0
  %2810 = vmatpush1.bf16.msra.mxu0 %v2791
  %2811 = vmatprep.subr.bf16.mxu0 0
  %2812 = vmatpush1.bf16.msra.mxu0 %v2790
  %2813 = vmatprep.subr.bf16.mxu0 0
  %2814 = vmatpush1.bf16.msra.mxu0 %v2789
  %2815 = vmatprep.subr.bf16.mxu0 0
  %2816 = vmatpush1.bf16.msra.mxu0 %v2788
  %2817 = vmatprep.subr.bf16.mxu0 0
  %2818 = vmatpush1.bf16.msra.mxu0 %v2787
  %2819 = vmatprep.subr.bf16.mxu0 0
  %2820 = vmatpush2.bf16.msra.mxu0 0
  %2821 = vmatprep.subr.bf16.mxu0 0
  %2822 = vmatpush2.bf16.msra.mxu0 0
  %2823 = vmatprep.subr.bf16.mxu0 0
  %2824 = vmatpush2.bf16.msra.mxu0 0
  %2825 = vmatprep.subr.bf16.mxu0 0
  %2826 = vmatpush2.bf16.msra.mxu0 0
  %2827 = vmatprep.subr.bf16.mxu0 0
  %2828 = vmatpush2.bf16.msra.mxu0 0
  %2829 = vmatprep.subr.bf16.mxu0 0
  %2830 = vmatpush2.bf16.msra.mxu0 0
  %2831 = vmatprep.subr.bf16.mxu0 0
  %2832 = vmatpush2.bf16.msra.mxu0 0
  %2833 = vmatprep.subr.bf16.mxu0 0
  %2834 = vmatpush2.bf16.msra.mxu0 0
  %2835 = vmatprep.mubr.bf16.mxu0 0
  %2836 = vmatmul.mubr.bf16.gmra.mxu0 %v2736
  %v2837 = vpop.f32.mrf.mxu0
  %v2838 = vadd.f32 0.0, %v2837
  %v2839 = vpop.f32.mrf.mxu0
  %v2840 = vpop.f32.mrf.mxu0
  %v2841 = vadd.f32 0.0, %v2840
  %v2842 = vpop.f32.mrf.mxu0
  %2843 = vmatprep.mubr.bf16.mxu0 0
  %2844 = vmatmul.mubr.bf16.gmra.mxu0 %v2737
  %v2845 = vpop.f32.mrf.mxu0
  %v2846 = vadd.f32 0.0, %v2845
  %v2847 = vpop.f32.mrf.mxu0
  %v2848 = vpop.f32.mrf.mxu0
  %v2849 = vadd.f32 0.0, %v2848
  %v2850 = vpop.f32.mrf.mxu0
  %2851 = vdwg.mxu0
  %v2852 = vadd.f32 %v2666, %v2838
  %v2853 = vadd.f32 %v2667, %v2841
  %v2854 = vadd.f32 %v2668, %v2846
  %v2855 = vadd.f32 %v2669, %v2849
  %s2856 = scalar_lea.vmem %s4, 208
  %v2857 = vld [vmem:[%s2856] sm:$0xf]
  %v2858 = vld [vmem:[%s2856 + $0x4] sm:$0xf]
  %v2859 = vld [vmem:[%s2856 + $0x8] sm:$0xf]
  %v2860 = vld [vmem:[%s2856 + $0xc] sm:$0xf]
  %v2865 = vunpack.c.l.b16 %v2857
  %v2866 = vunpack.c.l.b16 %v2858
  %v2867 = vunpack.c.l.b16 %v2859
  %v2868 = vunpack.c.l.b16 %v2860
  %v2869 = vpack.c.b16 %v2866, %v2865
  %v2870 = vpack.c.b16 %v2868, %v2867
  %2873 = vmatprep.subr.bf16.mxu0 0
  %2874 = vmatpush1.bf16.msra.mxu0 %v447
  %2875 = vmatprep.subr.bf16.mxu0 0
  %2876 = vmatpush1.bf16.msra.mxu0 %v446
  %2877 = vmatprep.subr.bf16.mxu0 0
  %2878 = vmatpush1.bf16.msra.mxu0 %v445
  %2879 = vmatprep.subr.bf16.mxu0 0
  %2880 = vmatpush1.bf16.msra.mxu0 %v444
  %2881 = vmatprep.subr.bf16.mxu0 0
  %2882 = vmatpush1.bf16.msra.mxu0 %v443
  %2883 = vmatprep.subr.bf16.mxu0 0
  %2884 = vmatpush1.bf16.msra.mxu0 %v442
  %2885 = vmatprep.subr.bf16.mxu0 0
  %2886 = vmatpush1.bf16.msra.mxu0 %v441
  %2887 = vmatprep.subr.bf16.mxu0 0
  %2888 = vmatpush1.bf16.msra.mxu0 %v440
  %2889 = vmatprep.subr.bf16.mxu0 0
  %2890 = vmatpush2.bf16.msra.mxu0 0
  %2891 = vmatprep.subr.bf16.mxu0 0
  %2892 = vmatpush2.bf16.msra.mxu0 0
  %2893 = vmatprep.subr.bf16.mxu0 0
  %2894 = vmatpush2.bf16.msra.mxu0 0
  %2895 = vmatprep.subr.bf16.mxu0 0
  %2896 = vmatpush2.bf16.msra.mxu0 0
  %2897 = vmatprep.subr.bf16.mxu0 0
  %2898 = vmatpush2.bf16.msra.mxu0 0
  %2899 = vmatprep.subr.bf16.mxu0 0
  %2900 = vmatpush2.bf16.msra.mxu0 0
  %2901 = vmatprep.subr.bf16.mxu0 0
  %2902 = vmatpush2.bf16.msra.mxu0 0
  %2903 = vmatprep.subr.bf16.mxu0 0
  %2904 = vmatpush2.bf16.msra.mxu0 0
  %2905 = vmatprep.mubr.bf16.mxu0 0
  %2906 = vmatmul.mubr.bf16.gmra.mxu0 %v2869
  %v2907 = vpop.f32.mrf.mxu0
  %v2908 = vadd.f32 0.0, %v2907
  %v2909 = vpop.f32.mrf.mxu0
  %v2910 = vpop.f32.mrf.mxu0
  %v2911 = vadd.f32 0.0, %v2910
  %v2912 = vpop.f32.mrf.mxu0
  %2913 = vmatprep.mubr.bf16.mxu0 0
  %2914 = vmatmul.mubr.bf16.gmra.mxu0 %v2870
  %v2915 = vpop.f32.mrf.mxu0
  %v2916 = vadd.f32 0.0, %v2915
  %v2917 = vpop.f32.mrf.mxu0
  %v2918 = vpop.f32.mrf.mxu0
  %v2919 = vadd.f32 0.0, %v2918
  %v2920 = vpop.f32.mrf.mxu0
  %2921 = vdwg.mxu0
  %v2922 = vpack.c.bf16 %v2911, %v2908
  %v2923 = vpack.c.bf16 %v2919, %v2916
  %s2924 = scalar_lea.vmem %s5, 832
  %v2925 = vld [vmem:[%s2924] sm:$0xf]
  %v2926 = vld [vmem:[%s2924 + $0x4] sm:$0xf]
  %v2927 = vld [vmem:[%s2924 + $0x8] sm:$0xf]
  %v2928 = vld [vmem:[%s2924 + $0xc] sm:$0xf]
  %v2929 = vld [vmem:[%s2924 + $0x10] sm:$0xf]
  %v2930 = vld [vmem:[%s2924 + $0x14] sm:$0xf]
  %v2931 = vld [vmem:[%s2924 + $0x18] sm:$0xf]
  %v2932 = vld [vmem:[%s2924 + $0x1c] sm:$0xf]
  %v2933 = vld [vmem:[%s2924 + $0x20] sm:$0xf]
  %v2934 = vld [vmem:[%s2924 + $0x24] sm:$0xf]
  %v2935 = vld [vmem:[%s2924 + $0x28] sm:$0xf]
  %v2936 = vld [vmem:[%s2924 + $0x2c] sm:$0xf]
  %v2937 = vld [vmem:[%s2924 + $0x30] sm:$0xf]
  %v2938 = vld [vmem:[%s2924 + $0x34] sm:$0xf]
  %v2939 = vld [vmem:[%s2924 + $0x38] sm:$0xf]
  %v2940 = vld [vmem:[%s2924 + $0x3c] sm:$0xf]
  %v2957 = vunpack.c.l.b16 %v2925
  %v2958 = vunpack.c.l.b16 %v2926
  %v2959 = vunpack.c.l.b16 %v2927
  %v2960 = vunpack.c.l.b16 %v2928
  %v2961 = vunpack.c.l.b16 %v2929
  %v2962 = vunpack.c.l.b16 %v2930
  %v2963 = vunpack.c.l.b16 %v2931
  %v2964 = vunpack.c.l.b16 %v2932
  %v2965 = vunpack.c.l.b16 %v2933
  %v2966 = vunpack.c.l.b16 %v2934
  %v2967 = vunpack.c.l.b16 %v2935
  %v2968 = vunpack.c.l.b16 %v2936
  %v2969 = vunpack.c.l.b16 %v2937
  %v2970 = vunpack.c.l.b16 %v2938
  %v2971 = vunpack.c.l.b16 %v2939
  %v2972 = vunpack.c.l.b16 %v2940
  %v2973 = vpack.c.b16 %v2958, %v2957
  %v2974 = vpack.c.b16 %v2960, %v2959
  %v2975 = vpack.c.b16 %v2962, %v2961
  %v2976 = vpack.c.b16 %v2964, %v2963
  %v2977 = vpack.c.b16 %v2966, %v2965
  %v2978 = vpack.c.b16 %v2968, %v2967
  %v2979 = vpack.c.b16 %v2970, %v2969
  %v2980 = vpack.c.b16 %v2972, %v2971
  %2989 = vmatprep.subr.bf16.mxu0 0
  %2990 = vmatpush1.bf16.msra.mxu0 %v2980
  %2991 = vmatprep.subr.bf16.mxu0 0
  %2992 = vmatpush1.bf16.msra.mxu0 %v2979
  %2993 = vmatprep.subr.bf16.mxu0 0
  %2994 = vmatpush1.bf16.msra.mxu0 %v2978
  %2995 = vmatprep.subr.bf16.mxu0 0
  %2996 = vmatpush1.bf16.msra.mxu0 %v2977
  %2997 = vmatprep.subr.bf16.mxu0 0
  %2998 = vmatpush1.bf16.msra.mxu0 %v2976
  %2999 = vmatprep.subr.bf16.mxu0 0
  %3000 = vmatpush1.bf16.msra.mxu0 %v2975
  %3001 = vmatprep.subr.bf16.mxu0 0
  %3002 = vmatpush1.bf16.msra.mxu0 %v2974
  %3003 = vmatprep.subr.bf16.mxu0 0
  %3004 = vmatpush1.bf16.msra.mxu0 %v2973
  %3005 = vmatprep.subr.bf16.mxu0 0
  %3006 = vmatpush2.bf16.msra.mxu0 0
  %3007 = vmatprep.subr.bf16.mxu0 0
  %3008 = vmatpush2.bf16.msra.mxu0 0
  %3009 = vmatprep.subr.bf16.mxu0 0
  %3010 = vmatpush2.bf16.msra.mxu0 0
  %3011 = vmatprep.subr.bf16.mxu0 0
  %3012 = vmatpush2.bf16.msra.mxu0 0
  %3013 = vmatprep.subr.bf16.mxu0 0
  %3014 = vmatpush2.bf16.msra.mxu0 0
  %3015 = vmatprep.subr.bf16.mxu0 0
  %3016 = vmatpush2.bf16.msra.mxu0 0
  %3017 = vmatprep.subr.bf16.mxu0 0
  %3018 = vmatpush2.bf16.msra.mxu0 0
  %3019 = vmatprep.subr.bf16.mxu0 0
  %3020 = vmatpush2.bf16.msra.mxu0 0
  %3021 = vmatprep.mubr.bf16.mxu0 0
  %3022 = vmatmul.mubr.bf16.gmra.mxu0 %v2922
  %v3023 = vpop.f32.mrf.mxu0
  %v3024 = vadd.f32 0.0, %v3023
  %v3025 = vpop.f32.mrf.mxu0
  %v3026 = vpop.f32.mrf.mxu0
  %v3027 = vadd.f32 0.0, %v3026
  %v3028 = vpop.f32.mrf.mxu0
  %3029 = vmatprep.mubr.bf16.mxu0 0
  %3030 = vmatmul.mubr.bf16.gmra.mxu0 %v2923
  %v3031 = vpop.f32.mrf.mxu0
  %v3032 = vadd.f32 0.0, %v3031
  %v3033 = vpop.f32.mrf.mxu0
  %v3034 = vpop.f32.mrf.mxu0
  %v3035 = vadd.f32 0.0, %v3034
  %v3036 = vpop.f32.mrf.mxu0
  %3037 = vdwg.mxu0
  %v3038 = vadd.f32 %v2852, %v3024
  %v3039 = vadd.f32 %v2853, %v3027
  %v3040 = vadd.f32 %v2854, %v3032
  %v3041 = vadd.f32 %v2855, %v3035
  %s3042 = scalar_lea.vmem %s4, 224
  %v3043 = vld [vmem:[%s3042] sm:$0xf]
  %v3044 = vld [vmem:[%s3042 + $0x4] sm:$0xf]
  %v3045 = vld [vmem:[%s3042 + $0x8] sm:$0xf]
  %v3046 = vld [vmem:[%s3042 + $0xc] sm:$0xf]
  %v3051 = vunpack.c.l.b16 %v3043
  %v3052 = vunpack.c.l.b16 %v3044
  %v3053 = vunpack.c.l.b16 %v3045
  %v3054 = vunpack.c.l.b16 %v3046
  %v3055 = vpack.c.b16 %v3052, %v3051
  %v3056 = vpack.c.b16 %v3054, %v3053
  %3059 = vmatprep.subr.bf16.mxu0 0
  %3060 = vmatpush1.bf16.msra.mxu0 %v447
  %3061 = vmatprep.subr.bf16.mxu0 0
  %3062 = vmatpush1.bf16.msra.mxu0 %v446
  %3063 = vmatprep.subr.bf16.mxu0 0
  %3064 = vmatpush1.bf16.msra.mxu0 %v445
  %3065 = vmatprep.subr.bf16.mxu0 0
  %3066 = vmatpush1.bf16.msra.mxu0 %v444
  %3067 = vmatprep.subr.bf16.mxu0 0
  %3068 = vmatpush1.bf16.msra.mxu0 %v443
  %3069 = vmatprep.subr.bf16.mxu0 0
  %3070 = vmatpush1.bf16.msra.mxu0 %v442
  %3071 = vmatprep.subr.bf16.mxu0 0
  %3072 = vmatpush1.bf16.msra.mxu0 %v441
  %3073 = vmatprep.subr.bf16.mxu0 0
  %3074 = vmatpush1.bf16.msra.mxu0 %v440
  %3075 = vmatprep.subr.bf16.mxu0 0
  %3076 = vmatpush2.bf16.msra.mxu0 0
  %3077 = vmatprep.subr.bf16.mxu0 0
  %3078 = vmatpush2.bf16.msra.mxu0 0
  %3079 = vmatprep.subr.bf16.mxu0 0
  %3080 = vmatpush2.bf16.msra.mxu0 0
  %3081 = vmatprep.subr.bf16.mxu0 0
  %3082 = vmatpush2.bf16.msra.mxu0 0
  %3083 = vmatprep.subr.bf16.mxu0 0
  %3084 = vmatpush2.bf16.msra.mxu0 0
  %3085 = vmatprep.subr.bf16.mxu0 0
  %3086 = vmatpush2.bf16.msra.mxu0 0
  %3087 = vmatprep.subr.bf16.mxu0 0
  %3088 = vmatpush2.bf16.msra.mxu0 0
  %3089 = vmatprep.subr.bf16.mxu0 0
  %3090 = vmatpush2.bf16.msra.mxu0 0
  %3091 = vmatprep.mubr.bf16.mxu0 0
  %3092 = vmatmul.mubr.bf16.gmra.mxu0 %v3055
  %v3093 = vpop.f32.mrf.mxu0
  %v3094 = vadd.f32 0.0, %v3093
  %v3095 = vpop.f32.mrf.mxu0
  %v3096 = vpop.f32.mrf.mxu0
  %v3097 = vadd.f32 0.0, %v3096
  %v3098 = vpop.f32.mrf.mxu0
  %3099 = vmatprep.mubr.bf16.mxu0 0
  %3100 = vmatmul.mubr.bf16.gmra.mxu0 %v3056
  %v3101 = vpop.f32.mrf.mxu0
  %v3102 = vadd.f32 0.0, %v3101
  %v3103 = vpop.f32.mrf.mxu0
  %v3104 = vpop.f32.mrf.mxu0
  %v3105 = vadd.f32 0.0, %v3104
  %v3106 = vpop.f32.mrf.mxu0
  %3107 = vdwg.mxu0
  %v3108 = vpack.c.bf16 %v3097, %v3094
  %v3109 = vpack.c.bf16 %v3105, %v3102
  %s3110 = scalar_lea.vmem %s5, 896
  %v3111 = vld [vmem:[%s3110] sm:$0xf]
  %v3112 = vld [vmem:[%s3110 + $0x4] sm:$0xf]
  %v3113 = vld [vmem:[%s3110 + $0x8] sm:$0xf]
  %v3114 = vld [vmem:[%s3110 + $0xc] sm:$0xf]
  %v3115 = vld [vmem:[%s3110 + $0x10] sm:$0xf]
  %v3116 = vld [vmem:[%s3110 + $0x14] sm:$0xf]
  %v3117 = vld [vmem:[%s3110 + $0x18] sm:$0xf]
  %v3118 = vld [vmem:[%s3110 + $0x1c] sm:$0xf]
  %v3119 = vld [vmem:[%s3110 + $0x20] sm:$0xf]
  %v3120 = vld [vmem:[%s3110 + $0x24] sm:$0xf]
  %v3121 = vld [vmem:[%s3110 + $0x28] sm:$0xf]
  %v3122 = vld [vmem:[%s3110 + $0x2c] sm:$0xf]
  %v3123 = vld [vmem:[%s3110 + $0x30] sm:$0xf]
  %v3124 = vld [vmem:[%s3110 + $0x34] sm:$0xf]
  %v3125 = vld [vmem:[%s3110 + $0x38] sm:$0xf]
  %v3126 = vld [vmem:[%s3110 + $0x3c] sm:$0xf]
  %v3143 = vunpack.c.l.b16 %v3111
  %v3144 = vunpack.c.l.b16 %v3112
  %v3145 = vunpack.c.l.b16 %v3113
  %v3146 = vunpack.c.l.b16 %v3114
  %v3147 = vunpack.c.l.b16 %v3115
  %v3148 = vunpack.c.l.b16 %v3116
  %v3149 = vunpack.c.l.b16 %v3117
  %v3150 = vunpack.c.l.b16 %v3118
  %v3151 = vunpack.c.l.b16 %v3119
  %v3152 = vunpack.c.l.b16 %v3120
  %v3153 = vunpack.c.l.b16 %v3121
  %v3154 = vunpack.c.l.b16 %v3122
  %v3155 = vunpack.c.l.b16 %v3123
  %v3156 = vunpack.c.l.b16 %v3124
  %v3157 = vunpack.c.l.b16 %v3125
  %v3158 = vunpack.c.l.b16 %v3126
  %v3159 = vpack.c.b16 %v3144, %v3143
  %v3160 = vpack.c.b16 %v3146, %v3145
  %v3161 = vpack.c.b16 %v3148, %v3147
  %v3162 = vpack.c.b16 %v3150, %v3149
  %v3163 = vpack.c.b16 %v3152, %v3151
  %v3164 = vpack.c.b16 %v3154, %v3153
  %v3165 = vpack.c.b16 %v3156, %v3155
  %v3166 = vpack.c.b16 %v3158, %v3157
  %3175 = vmatprep.subr.bf16.mxu0 0
  %3176 = vmatpush1.bf16.msra.mxu0 %v3166
  %3177 = vmatprep.subr.bf16.mxu0 0
  %3178 = vmatpush1.bf16.msra.mxu0 %v3165
  %3179 = vmatprep.subr.bf16.mxu0 0
  %3180 = vmatpush1.bf16.msra.mxu0 %v3164
  %3181 = vmatprep.subr.bf16.mxu0 0
  %3182 = vmatpush1.bf16.msra.mxu0 %v3163
  %3183 = vmatprep.subr.bf16.mxu0 0
  %3184 = vmatpush1.bf16.msra.mxu0 %v3162
  %3185 = vmatprep.subr.bf16.mxu0 0
  %3186 = vmatpush1.bf16.msra.mxu0 %v3161
  %3187 = vmatprep.subr.bf16.mxu0 0
  %3188 = vmatpush1.bf16.msra.mxu0 %v3160
  %3189 = vmatprep.subr.bf16.mxu0 0
  %3190 = vmatpush1.bf16.msra.mxu0 %v3159
  %3191 = vmatprep.subr.bf16.mxu0 0
  %3192 = vmatpush2.bf16.msra.mxu0 0
  %3193 = vmatprep.subr.bf16.mxu0 0
  %3194 = vmatpush2.bf16.msra.mxu0 0
  %3195 = vmatprep.subr.bf16.mxu0 0
  %3196 = vmatpush2.bf16.msra.mxu0 0
  %3197 = vmatprep.subr.bf16.mxu0 0
  %3198 = vmatpush2.bf16.msra.mxu0 0
  %3199 = vmatprep.subr.bf16.mxu0 0
  %3200 = vmatpush2.bf16.msra.mxu0 0
  %3201 = vmatprep.subr.bf16.mxu0 0
  %3202 = vmatpush2.bf16.msra.mxu0 0
  %3203 = vmatprep.subr.bf16.mxu0 0
  %3204 = vmatpush2.bf16.msra.mxu0 0
  %3205 = vmatprep.subr.bf16.mxu0 0
  %3206 = vmatpush2.bf16.msra.mxu0 0
  %3207 = vmatprep.mubr.bf16.mxu0 0
  %3208 = vmatmul.mubr.bf16.gmra.mxu0 %v3108
  %v3209 = vpop.f32.mrf.mxu0
  %v3210 = vadd.f32 0.0, %v3209
  %v3211 = vpop.f32.mrf.mxu0
  %v3212 = vpop.f32.mrf.mxu0
  %v3213 = vadd.f32 0.0, %v3212
  %v3214 = vpop.f32.mrf.mxu0
  %3215 = vmatprep.mubr.bf16.mxu0 0
  %3216 = vmatmul.mubr.bf16.gmra.mxu0 %v3109
  %v3217 = vpop.f32.mrf.mxu0
  %v3218 = vadd.f32 0.0, %v3217
  %v3219 = vpop.f32.mrf.mxu0
  %v3220 = vpop.f32.mrf.mxu0
  %v3221 = vadd.f32 0.0, %v3220
  %v3222 = vpop.f32.mrf.mxu0
  %3223 = vdwg.mxu0
  %v3224 = vadd.f32 %v3038, %v3210
  %v3225 = vadd.f32 %v3039, %v3213
  %v3226 = vadd.f32 %v3040, %v3218
  %v3227 = vadd.f32 %v3041, %v3221
  %s3228 = scalar_lea.vmem %s4, 240
  %v3229 = vld [vmem:[%s3228] sm:$0xf]
  %v3230 = vld [vmem:[%s3228 + $0x4] sm:$0xf]
  %v3231 = vld [vmem:[%s3228 + $0x8] sm:$0xf]
  %v3232 = vld [vmem:[%s3228 + $0xc] sm:$0xf]
  %v3237 = vunpack.c.l.b16 %v3229
  %v3238 = vunpack.c.l.b16 %v3230
  %v3239 = vunpack.c.l.b16 %v3231
  %v3240 = vunpack.c.l.b16 %v3232
  %v3241 = vpack.c.b16 %v3238, %v3237
  %v3242 = vpack.c.b16 %v3240, %v3239
  %3245 = vmatprep.subr.bf16.mxu0 0
  %3246 = vmatpush1.bf16.msra.mxu0 %v447
  %3247 = vmatprep.subr.bf16.mxu0 0
  %3248 = vmatpush1.bf16.msra.mxu0 %v446
  %3249 = vmatprep.subr.bf16.mxu0 0
  %3250 = vmatpush1.bf16.msra.mxu0 %v445
  %3251 = vmatprep.subr.bf16.mxu0 0
  %3252 = vmatpush1.bf16.msra.mxu0 %v444
  %3253 = vmatprep.subr.bf16.mxu0 0
  %3254 = vmatpush1.bf16.msra.mxu0 %v443
  %3255 = vmatprep.subr.bf16.mxu0 0
  %3256 = vmatpush1.bf16.msra.mxu0 %v442
  %3257 = vmatprep.subr.bf16.mxu0 0
  %3258 = vmatpush1.bf16.msra.mxu0 %v441
  %3259 = vmatprep.subr.bf16.mxu0 0
  %3260 = vmatpush1.bf16.msra.mxu0 %v440
  %3261 = vmatprep.subr.bf16.mxu0 0
  %3262 = vmatpush2.bf16.msra.mxu0 0
  %3263 = vmatprep.subr.bf16.mxu0 0
  %3264 = vmatpush2.bf16.msra.mxu0 0
  %3265 = vmatprep.subr.bf16.mxu0 0
  %3266 = vmatpush2.bf16.msra.mxu0 0
  %3267 = vmatprep.subr.bf16.mxu0 0
  %3268 = vmatpush2.bf16.msra.mxu0 0
  %3269 = vmatprep.subr.bf16.mxu0 0
  %3270 = vmatpush2.bf16.msra.mxu0 0
  %3271 = vmatprep.subr.bf16.mxu0 0
  %3272 = vmatpush2.bf16.msra.mxu0 0
  %3273 = vmatprep.subr.bf16.mxu0 0
  %3274 = vmatpush2.bf16.msra.mxu0 0
  %3275 = vmatprep.subr.bf16.mxu0 0
  %3276 = vmatpush2.bf16.msra.mxu0 0
  %3277 = vmatprep.mubr.bf16.mxu0 0
  %3278 = vmatmul.mubr.bf16.gmra.mxu0 %v3241
  %v3279 = vpop.f32.mrf.mxu0
  %v3280 = vadd.f32 0.0, %v3279
  %v3281 = vpop.f32.mrf.mxu0
  %v3282 = vpop.f32.mrf.mxu0
  %v3283 = vadd.f32 0.0, %v3282
  %v3284 = vpop.f32.mrf.mxu0
  %3285 = vmatprep.mubr.bf16.mxu0 0
  %3286 = vmatmul.mubr.bf16.gmra.mxu0 %v3242
  %v3287 = vpop.f32.mrf.mxu0
  %v3288 = vadd.f32 0.0, %v3287
  %v3289 = vpop.f32.mrf.mxu0
  %v3290 = vpop.f32.mrf.mxu0
  %v3291 = vadd.f32 0.0, %v3290
  %v3292 = vpop.f32.mrf.mxu0
  %3293 = vdwg.mxu0
  %v3294 = vpack.c.bf16 %v3283, %v3280
  %v3295 = vpack.c.bf16 %v3291, %v3288
  %s3296 = scalar_lea.vmem %s5, 960
  %v3297 = vld [vmem:[%s3296] sm:$0xf]
  %v3298 = vld [vmem:[%s3296 + $0x4] sm:$0xf]
  %v3299 = vld [vmem:[%s3296 + $0x8] sm:$0xf]
  %v3300 = vld [vmem:[%s3296 + $0xc] sm:$0xf]
  %v3301 = vld [vmem:[%s3296 + $0x10] sm:$0xf]
  %v3302 = vld [vmem:[%s3296 + $0x14] sm:$0xf]
  %v3303 = vld [vmem:[%s3296 + $0x18] sm:$0xf]
  %v3304 = vld [vmem:[%s3296 + $0x1c] sm:$0xf]
  %v3305 = vld [vmem:[%s3296 + $0x20] sm:$0xf]
  %v3306 = vld [vmem:[%s3296 + $0x24] sm:$0xf]
  %v3307 = vld [vmem:[%s3296 + $0x28] sm:$0xf]
  %v3308 = vld [vmem:[%s3296 + $0x2c] sm:$0xf]
  %v3309 = vld [vmem:[%s3296 + $0x30] sm:$0xf]
  %v3310 = vld [vmem:[%s3296 + $0x34] sm:$0xf]
  %v3311 = vld [vmem:[%s3296 + $0x38] sm:$0xf]
  %v3312 = vld [vmem:[%s3296 + $0x3c] sm:$0xf]
  %v3329 = vunpack.c.l.b16 %v3297
  %v3330 = vunpack.c.l.b16 %v3298
  %v3331 = vunpack.c.l.b16 %v3299
  %v3332 = vunpack.c.l.b16 %v3300
  %v3333 = vunpack.c.l.b16 %v3301
  %v3334 = vunpack.c.l.b16 %v3302
  %v3335 = vunpack.c.l.b16 %v3303
  %v3336 = vunpack.c.l.b16 %v3304
  %v3337 = vunpack.c.l.b16 %v3305
  %v3338 = vunpack.c.l.b16 %v3306
  %v3339 = vunpack.c.l.b16 %v3307
  %v3340 = vunpack.c.l.b16 %v3308
  %v3341 = vunpack.c.l.b16 %v3309
  %v3342 = vunpack.c.l.b16 %v3310
  %v3343 = vunpack.c.l.b16 %v3311
  %v3344 = vunpack.c.l.b16 %v3312
  %v3345 = vpack.c.b16 %v3330, %v3329
  %v3346 = vpack.c.b16 %v3332, %v3331
  %v3347 = vpack.c.b16 %v3334, %v3333
  %v3348 = vpack.c.b16 %v3336, %v3335
  %v3349 = vpack.c.b16 %v3338, %v3337
  %v3350 = vpack.c.b16 %v3340, %v3339
  %v3351 = vpack.c.b16 %v3342, %v3341
  %v3352 = vpack.c.b16 %v3344, %v3343
  %3361 = vmatprep.subr.bf16.mxu0 0
  %3362 = vmatpush1.bf16.msra.mxu0 %v3352
  %3363 = vmatprep.subr.bf16.mxu0 0
  %3364 = vmatpush1.bf16.msra.mxu0 %v3351
  %3365 = vmatprep.subr.bf16.mxu0 0
  %3366 = vmatpush1.bf16.msra.mxu0 %v3350
  %3367 = vmatprep.subr.bf16.mxu0 0
  %3368 = vmatpush1.bf16.msra.mxu0 %v3349
  %3369 = vmatprep.subr.bf16.mxu0 0
  %3370 = vmatpush1.bf16.msra.mxu0 %v3348
  %3371 = vmatprep.subr.bf16.mxu0 0
  %3372 = vmatpush1.bf16.msra.mxu0 %v3347
  %3373 = vmatprep.subr.bf16.mxu0 0
  %3374 = vmatpush1.bf16.msra.mxu0 %v3346
  %3375 = vmatprep.subr.bf16.mxu0 0
  %3376 = vmatpush1.bf16.msra.mxu0 %v3345
  %3377 = vmatprep.subr.bf16.mxu0 0
  %3378 = vmatpush2.bf16.msra.mxu0 0
  %3379 = vmatprep.subr.bf16.mxu0 0
  %3380 = vmatpush2.bf16.msra.mxu0 0
  %3381 = vmatprep.subr.bf16.mxu0 0
  %3382 = vmatpush2.bf16.msra.mxu0 0
  %3383 = vmatprep.subr.bf16.mxu0 0
  %3384 = vmatpush2.bf16.msra.mxu0 0
  %3385 = vmatprep.subr.bf16.mxu0 0
  %3386 = vmatpush2.bf16.msra.mxu0 0
  %3387 = vmatprep.subr.bf16.mxu0 0
  %3388 = vmatpush2.bf16.msra.mxu0 0
  %3389 = vmatprep.subr.bf16.mxu0 0
  %3390 = vmatpush2.bf16.msra.mxu0 0
  %3391 = vmatprep.subr.bf16.mxu0 0
  %3392 = vmatpush2.bf16.msra.mxu0 0
  %3393 = vmatprep.mubr.bf16.mxu0 0
  %3394 = vmatmul.mubr.bf16.gmra.mxu0 %v3294
  %v3395 = vpop.f32.mrf.mxu0
  %v3396 = vadd.f32 0.0, %v3395
  %v3397 = vpop.f32.mrf.mxu0
  %v3398 = vpop.f32.mrf.mxu0
  %v3399 = vadd.f32 0.0, %v3398
  %v3400 = vpop.f32.mrf.mxu0
  %3401 = vmatprep.mubr.bf16.mxu0 0
  %3402 = vmatmul.mubr.bf16.gmra.mxu0 %v3295
  %v3403 = vpop.f32.mrf.mxu0
  %v3404 = vadd.f32 0.0, %v3403
  %v3405 = vpop.f32.mrf.mxu0
  %v3406 = vpop.f32.mrf.mxu0
  %v3407 = vadd.f32 0.0, %v3406
  %v3408 = vpop.f32.mrf.mxu0
  %3409 = vdwg.mxu0
  %v3410 = vadd.f32 %v3224, %v3396
  %v3411 = vadd.f32 %v3225, %v3399
  %v3412 = vadd.f32 %v3226, %v3404
  %v3413 = vadd.f32 %v3227, %v3407
  %v3414 = vld [vmem:[%s6] sm:$0x1]
  %v3415 = vld [vmem:[%s7] sm:$0x1]
  %v3416 = vadd.f32 %v3410, %v3411
  %v3417 = vadd.f32 %v3416, %v3412
  %v3418 = vadd.f32 %v3417, %v3413
  %v3419 = vrot.slane %v3418, 4
  %v3420 = vadd.f32 %v3418, %v3419
  %v3421 = vrot.slane %v3420, 2
  %v3422 = vadd.f32 %v3420, %v3421
  %v3423 = vrot.slane %v3422, 1
  %v3424 = vadd.f32 %v3422, %v3423
  %v3425 = vrcp.pop 32.0
  %v3426 = vmul.f32 %v3424, %v3425
  %v3427 = vsub.f32 %v3410, %v3426
  %v3428 = vsub.f32 %v3411, %v3426
  %v3429 = vsub.f32 %v3412, %v3426
  %v3430 = vsub.f32 %v3413, %v3426
  %v3431 = vmul.f32 %v3427, %v3427
  %v3432 = vmul.f32 %v3428, %v3428
  %v3433 = vmul.f32 %v3429, %v3429
  %v3434 = vmul.f32 %v3430, %v3430
  %v3435 = vadd.f32 %v3431, %v3432
  %v3436 = vadd.f32 %v3435, %v3433
  %v3437 = vadd.f32 %v3436, %v3434
  %v3438 = vrot.slane %v3437, 4
  %v3439 = vadd.f32 %v3437, %v3438
  %v3440 = vrot.slane %v3439, 2
  %v3441 = vadd.f32 %v3439, %v3440
  %v3442 = vrot.slane %v3441, 1
  %v3443 = vadd.f32 %v3441, %v3442
  %v3444 = vmul.f32 %v3443, %v3425
  %v3445 = vadd.f32 %v3444, 1e-05
  %v3446 = vrsqrt.pop %v3445
  %v3447 = vmul.f32 %v3414, %v3446
  %v3448 = vmul.f32 %v3426, %v3447
  %v3449 = vsub.f32 %v3415, %v3448
  %v3451 = vlaneseq
  %v3452 = vshrl.u32 %v3451, 7
  %v3453 = vsub.s32 0, %v3452
  %v3454 = vrot.slane %v3447, %v3453
  %v3456 = vmul.f32 %v3410, %v3454
  %v3457 = vmul.f32 %v3411, %v3454
  %v3458 = vmul.f32 %v3412, %v3454
  %v3459 = vmul.f32 %v3413, %v3454
  %v3461 = vlaneseq
  %v3462 = vshrl.u32 %v3461, 7
  %v3463 = vsub.s32 0, %v3462
  %v3464 = vrot.slane %v3449, %v3463
  %v3466 = vadd.f32 %v3456, %v3464
  %v3467 = vadd.f32 %v3457, %v3464
  %v3468 = vadd.f32 %v3458, %v3464
  %v3469 = vadd.f32 %v3459, %v3464
  %vm3470 = vcmp.ge.f32.partialorder %v3466, 0.0
  %vm3471 = vcmp.ge.f32.partialorder %v3467, 0.0
  %vm3472 = vcmp.ge.f32.partialorder %v3468, 0.0
  %vm3473 = vcmp.ge.f32.partialorder %v3469, 0.0
  %v3474 = vmul.f32 %v3466, 0.2
  %v3475 = vmul.f32 %v3467, 0.2
  %v3476 = vmul.f32 %v3468, 0.2
  %v3477 = vmul.f32 %v3469, 0.2
  %v3478 = vsel %vm3470, %v3466, %v3474
  %v3479 = vsel %vm3471, %v3467, %v3475
  %v3480 = vsel %vm3472, %v3468, %v3476
  %v3481 = vsel %vm3473, %v3469, %v3477
  %v3482 = vpack.c.bf16 %v3479, %v3478
  %v3483 = vpack.c.bf16 %v3481, %v3480
  %v3484 = vld [vmem:[%s8] sm:$0xf]
  %vm3485 = vcmask 261120
  %v3487 = vsel %vm3485, %v3484, 0
  %3489 = vmatprep.subr.bf16.mxu0 0
  %3490 = vmatpush1.bf16.msra.mxu0 0
  %3491 = vmatprep.subr.bf16.mxu0 0
  %3492 = vmatpush1.bf16.msra.mxu0 0
  %3493 = vmatprep.subr.bf16.mxu0 0
  %3494 = vmatpush1.bf16.msra.mxu0 0
  %3495 = vmatprep.subr.bf16.mxu0 0
  %3496 = vmatpush1.bf16.msra.mxu0 0
  %3497 = vmatprep.subr.bf16.mxu0 0
  %3498 = vmatpush1.bf16.msra.mxu0 0
  %3499 = vmatprep.subr.bf16.mxu0 0
  %3500 = vmatpush1.bf16.msra.mxu0 0
  %3501 = vmatprep.subr.bf16.mxu0 0
  %3502 = vmatpush1.bf16.msra.mxu0 %v3483
  %3503 = vmatprep.subr.bf16.mxu0 0
  %3504 = vmatpush1.bf16.msra.mxu0 %v3482
  %3505 = vmatprep.subr.bf16.mxu0 0
  %3506 = vmatpush2.bf16.msra.mxu0 0
  %3507 = vmatprep.subr.bf16.mxu0 0
  %3508 = vmatpush2.bf16.msra.mxu0 0
  %3509 = vmatprep.subr.bf16.mxu0 0
  %3510 = vmatpush2.bf16.msra.mxu0 0
  %3511 = vmatprep.subr.bf16.mxu0 0
  %3512 = vmatpush2.bf16.msra.mxu0 0
  %3513 = vmatprep.subr.bf16.mxu0 0
  %3514 = vmatpush2.bf16.msra.mxu0 0
  %3515 = vmatprep.subr.bf16.mxu0 0
  %3516 = vmatpush2.bf16.msra.mxu0 0
  %3517 = vmatprep.subr.bf16.mxu0 0
  %3518 = vmatpush2.bf16.msra.mxu0 0
  %3519 = vmatprep.subr.bf16.mxu0 0
  %3520 = vmatpush2.bf16.msra.mxu0 0
  %3521 = vmatprep.mubr.bf16.mxu0 0
  %3522 = vmatmul.mubr.bf16.gmra.mxu0 %v3487
  %v3523 = vpop.f32.mrf.mxu0
  %v3524 = vadd.f32 0.0, %v3523
  %v3525 = vpop.f32.mrf.mxu0
  %v3526 = vpop.f32.mrf.mxu0
  %v3527 = vpop.f32.mrf.mxu0
  %3528 = vdwg.mxu0
  %v3529 = vpack.c.bf16 %v3524, %v3524
  %v3530 = vld [vmem:[%s9] sm:$0xf]
  %v3531 = vld [vmem:[%s9 + $0x4] sm:$0xf]
  %v3532 = vld [vmem:[%s9 + $0x8] sm:$0xf]
  %v3533 = vld [vmem:[%s9 + $0xc] sm:$0xf]
  %v3534 = vld [vmem:[%s9 + $0x10] sm:$0xf]
  %v3535 = vld [vmem:[%s9 + $0x14] sm:$0xf]
  %v3536 = vld [vmem:[%s9 + $0x18] sm:$0xf]
  %v3537 = vld [vmem:[%s9 + $0x1c] sm:$0xf]
  %v3538 = vld [vmem:[%s9 + $0x20] sm:$0xf]
  %v3539 = vld [vmem:[%s9 + $0x24] sm:$0xf]
  %v3540 = vld [vmem:[%s9 + $0x28] sm:$0xf]
  %v3541 = vld [vmem:[%s9 + $0x2c] sm:$0xf]
  %v3542 = vld [vmem:[%s9 + $0x30] sm:$0xf]
  %v3543 = vld [vmem:[%s9 + $0x34] sm:$0xf]
  %v3544 = vld [vmem:[%s9 + $0x38] sm:$0xf]
  %v3545 = vld [vmem:[%s9 + $0x3c] sm:$0xf]
  %s3546 = scalar_lea.vmem %s8, 4
  %v3547 = vld [vmem:[%s3546] sm:$0xf]
  %v3549 = vsel %vm3485, %v3547, 0
  %3551 = vmatprep.subr.bf16.mxu0 0
  %3552 = vmatpush1.bf16.msra.mxu0 0
  %3553 = vmatprep.subr.bf16.mxu0 0
  %3554 = vmatpush1.bf16.msra.mxu0 0
  %3555 = vmatprep.subr.bf16.mxu0 0
  %3556 = vmatpush1.bf16.msra.mxu0 0
  %3557 = vmatprep.subr.bf16.mxu0 0
  %3558 = vmatpush1.bf16.msra.mxu0 0
  %3559 = vmatprep.subr.bf16.mxu0 0
  %3560 = vmatpush1.bf16.msra.mxu0 0
  %3561 = vmatprep.subr.bf16.mxu0 0
  %3562 = vmatpush1.bf16.msra.mxu0 0
  %3563 = vmatprep.subr.bf16.mxu0 0
  %3564 = vmatpush1.bf16.msra.mxu0 %v3483
  %3565 = vmatprep.subr.bf16.mxu0 0
  %3566 = vmatpush1.bf16.msra.mxu0 %v3482
  %3567 = vmatprep.subr.bf16.mxu0 0
  %3568 = vmatpush2.bf16.msra.mxu0 0
  %3569 = vmatprep.subr.bf16.mxu0 0
  %3570 = vmatpush2.bf16.msra.mxu0 0
  %3571 = vmatprep.subr.bf16.mxu0 0
  %3572 = vmatpush2.bf16.msra.mxu0 0
  %3573 = vmatprep.subr.bf16.mxu0 0
  %3574 = vmatpush2.bf16.msra.mxu0 0
  %3575 = vmatprep.subr.bf16.mxu0 0
  %3576 = vmatpush2.bf16.msra.mxu0 0
  %3577 = vmatprep.subr.bf16.mxu0 0
  %3578 = vmatpush2.bf16.msra.mxu0 0
  %3579 = vmatprep.subr.bf16.mxu0 0
  %3580 = vmatpush2.bf16.msra.mxu0 0
  %3581 = vmatprep.subr.bf16.mxu0 0
  %3582 = vmatpush2.bf16.msra.mxu0 0
  %3583 = vmatprep.mubr.bf16.mxu0 0
  %3584 = vmatmul.mubr.bf16.gmra.mxu0 %v3549
  %v3585 = vpop.f32.mrf.mxu0
  %v3586 = vadd.f32 0.0, %v3585
  %v3587 = vpop.f32.mrf.mxu0
  %v3588 = vpop.f32.mrf.mxu0
  %v3589 = vpop.f32.mrf.mxu0
  %3590 = vdwg.mxu0
  %v3591 = vpack.c.bf16 %v3586, %v3586
  %s3592 = scalar_lea.vmem %s9, 64
  %v3593 = vld [vmem:[%s3592] sm:$0xf]
  %v3594 = vld [vmem:[%s3592 + $0x4] sm:$0xf]
  %v3595 = vld [vmem:[%s3592 + $0x8] sm:$0xf]
  %v3596 = vld [vmem:[%s3592 + $0xc] sm:$0xf]
  %v3597 = vld [vmem:[%s3592 + $0x10] sm:$0xf]
  %v3598 = vld [vmem:[%s3592 + $0x14] sm:$0xf]
  %v3599 = vld [vmem:[%s3592 + $0x18] sm:$0xf]
  %v3600 = vld [vmem:[%s3592 + $0x1c] sm:$0xf]
  %v3601 = vld [vmem:[%s3592 + $0x20] sm:$0xf]
  %v3602 = vld [vmem:[%s3592 + $0x24] sm:$0xf]
  %v3603 = vld [vmem:[%s3592 + $0x28] sm:$0xf]
  %v3604 = vld [vmem:[%s3592 + $0x2c] sm:$0xf]
  %v3605 = vld [vmem:[%s3592 + $0x30] sm:$0xf]
  %v3606 = vld [vmem:[%s3592 + $0x34] sm:$0xf]
  %v3607 = vld [vmem:[%s3592 + $0x38] sm:$0xf]
  %v3608 = vld [vmem:[%s3592 + $0x3c] sm:$0xf]
  %v3625 = vunpack.c.l.b16 %v3593
  %v3626 = vunpack.c.l.b16 %v3594
  %v3627 = vunpack.c.l.b16 %v3595
  %v3628 = vunpack.c.l.b16 %v3596
  %v3629 = vunpack.c.l.b16 %v3597
  %v3630 = vunpack.c.l.b16 %v3598
  %v3631 = vunpack.c.l.b16 %v3599
  %v3632 = vunpack.c.l.b16 %v3600
  %v3633 = vunpack.c.l.b16 %v3601
  %v3634 = vunpack.c.l.b16 %v3602
  %v3635 = vunpack.c.l.b16 %v3603
  %v3636 = vunpack.c.l.b16 %v3604
  %v3637 = vunpack.c.l.b16 %v3605
  %v3638 = vunpack.c.l.b16 %v3606
  %v3639 = vunpack.c.l.b16 %v3607
  %v3640 = vunpack.c.l.b16 %v3608
  %v3641 = vpack.c.b16 %v3626, %v3625
  %v3642 = vpack.c.b16 %v3628, %v3627
  %v3643 = vpack.c.b16 %v3630, %v3629
  %v3644 = vpack.c.b16 %v3632, %v3631
  %v3645 = vpack.c.b16 %v3634, %v3633
  %v3646 = vpack.c.b16 %v3636, %v3635
  %v3647 = vpack.c.b16 %v3638, %v3637
  %v3648 = vpack.c.b16 %v3640, %v3639
  %3657 = vmatprep.subr.bf16.mxu0 0
  %3658 = vmatpush1.bf16.msra.mxu0 %v3648
  %3659 = vmatprep.subr.bf16.mxu0 0
  %3660 = vmatpush1.bf16.msra.mxu0 %v3647
  %3661 = vmatprep.subr.bf16.mxu0 0
  %3662 = vmatpush1.bf16.msra.mxu0 %v3646
  %3663 = vmatprep.subr.bf16.mxu0 0
  %3664 = vmatpush1.bf16.msra.mxu0 %v3645
  %3665 = vmatprep.subr.bf16.mxu0 0
  %3666 = vmatpush1.bf16.msra.mxu0 %v3644
  %3667 = vmatprep.subr.bf16.mxu0 0
  %3668 = vmatpush1.bf16.msra.mxu0 %v3643
  %3669 = vmatprep.subr.bf16.mxu0 0
  %3670 = vmatpush1.bf16.msra.mxu0 %v3642
  %3671 = vmatprep.subr.bf16.mxu0 0
  %3672 = vmatpush1.bf16.msra.mxu0 %v3641
  %3673 = vmatprep.subr.bf16.mxu0 0
  %3674 = vmatpush2.bf16.msra.mxu0 0
  %3675 = vmatprep.subr.bf16.mxu0 0
  %3676 = vmatpush2.bf16.msra.mxu0 0
  %3677 = vmatprep.subr.bf16.mxu0 0
  %3678 = vmatpush2.bf16.msra.mxu0 0
  %3679 = vmatprep.subr.bf16.mxu0 0
  %3680 = vmatpush2.bf16.msra.mxu0 0
  %3681 = vmatprep.subr.bf16.mxu0 0
  %3682 = vmatpush2.bf16.msra.mxu0 0
  %3683 = vmatprep.subr.bf16.mxu0 0
  %3684 = vmatpush2.bf16.msra.mxu0 0
  %3685 = vmatprep.subr.bf16.mxu0 0
  %3686 = vmatpush2.bf16.msra.mxu0 0
  %3687 = vmatprep.subr.bf16.mxu0 0
  %3688 = vmatpush2.bf16.msra.mxu0 0
  %3689 = vmatprep.mubr.bf16.mxu0 0
  %3690 = vmatmul.mubr.bf16.gmra.mxu0 %v3591
  %v3691 = vpop.f32.mrf.mxu0
  %v3692 = vadd.f32 0.0, %v3691
  %v3693 = vpop.f32.mrf.mxu0
  %v3694 = vpop.f32.mrf.mxu0
  %v3695 = vpop.f32.mrf.mxu0
  %3696 = vdwg.mxu0
  %v3713 = vunpack.c.l.b16 %v3530
  %v3714 = vunpack.c.l.b16 %v3531
  %v3715 = vunpack.c.l.b16 %v3532
  %v3716 = vunpack.c.l.b16 %v3533
  %v3717 = vunpack.c.l.b16 %v3534
  %v3718 = vunpack.c.l.b16 %v3535
  %v3719 = vunpack.c.l.b16 %v3536
  %v3720 = vunpack.c.l.b16 %v3537
  %v3721 = vunpack.c.l.b16 %v3538
  %v3722 = vunpack.c.l.b16 %v3539
  %v3723 = vunpack.c.l.b16 %v3540
  %v3724 = vunpack.c.l.b16 %v3541
  %v3725 = vunpack.c.l.b16 %v3542
  %v3726 = vunpack.c.l.b16 %v3543
  %v3727 = vunpack.c.l.b16 %v3544
  %v3728 = vunpack.c.l.b16 %v3545
  %v3729 = vpack.c.b16 %v3714, %v3713
  %v3730 = vpack.c.b16 %v3716, %v3715
  %v3731 = vpack.c.b16 %v3718, %v3717
  %v3732 = vpack.c.b16 %v3720, %v3719
  %v3733 = vpack.c.b16 %v3722, %v3721
  %v3734 = vpack.c.b16 %v3724, %v3723
  %v3735 = vpack.c.b16 %v3726, %v3725
  %v3736 = vpack.c.b16 %v3728, %v3727
  %3745 = vmatprep.subr.bf16.mxu0 0
  %3746 = vmatpush1.bf16.msra.mxu0 %v3736
  %3747 = vmatprep.subr.bf16.mxu0 0
  %3748 = vmatpush1.bf16.msra.mxu0 %v3735
  %3749 = vmatprep.subr.bf16.mxu0 0
  %3750 = vmatpush1.bf16.msra.mxu0 %v3734
  %3751 = vmatprep.subr.bf16.mxu0 0
  %3752 = vmatpush1.bf16.msra.mxu0 %v3733
  %3753 = vmatprep.subr.bf16.mxu0 0
  %3754 = vmatpush1.bf16.msra.mxu0 %v3732
  %3755 = vmatprep.subr.bf16.mxu0 0
  %3756 = vmatpush1.bf16.msra.mxu0 %v3731
  %3757 = vmatprep.subr.bf16.mxu0 0
  %3758 = vmatpush1.bf16.msra.mxu0 %v3730
  %3759 = vmatprep.subr.bf16.mxu0 0
  %3760 = vmatpush1.bf16.msra.mxu0 %v3729
  %3761 = vmatprep.subr.bf16.mxu0 0
  %3762 = vmatpush2.bf16.msra.mxu0 0
  %3763 = vmatprep.subr.bf16.mxu0 0
  %3764 = vmatpush2.bf16.msra.mxu0 0
  %3765 = vmatprep.subr.bf16.mxu0 0
  %3766 = vmatpush2.bf16.msra.mxu0 0
  %3767 = vmatprep.subr.bf16.mxu0 0
  %3768 = vmatpush2.bf16.msra.mxu0 0
  %3769 = vmatprep.subr.bf16.mxu0 0
  %3770 = vmatpush2.bf16.msra.mxu0 0
  %3771 = vmatprep.subr.bf16.mxu0 0
  %3772 = vmatpush2.bf16.msra.mxu0 0
  %3773 = vmatprep.subr.bf16.mxu0 0
  %3774 = vmatpush2.bf16.msra.mxu0 0
  %3775 = vmatprep.subr.bf16.mxu0 0
  %3776 = vmatpush2.bf16.msra.mxu0 0
  %3777 = vmatprep.mubr.bf16.mxu0 0
  %3778 = vmatmul.mubr.bf16.gmra.mxu0 %v3529
  %v3779 = vpop.f32.mrf.mxu0
  %v3780 = vadd.f32 %v3692, %v3779
  %v3781 = vpop.f32.mrf.mxu0
  %v3782 = vpop.f32.mrf.mxu0
  %v3783 = vpop.f32.mrf.mxu0
  %3784 = vdwg.mxu0
  %s3785 = scalar_lea.vmem %s8, 8
  %v3786 = vld [vmem:[%s3785] sm:$0xf]
  %v3788 = vsel %vm3485, %v3786, 0
  %3790 = vmatprep.subr.bf16.mxu0 0
  %3791 = vmatpush1.bf16.msra.mxu0 0
  %3792 = vmatprep.subr.bf16.mxu0 0
  %3793 = vmatpush1.bf16.msra.mxu0 0
  %3794 = vmatprep.subr.bf16.mxu0 0
  %3795 = vmatpush1.bf16.msra.mxu0 0
  %3796 = vmatprep.subr.bf16.mxu0 0
  %3797 = vmatpush1.bf16.msra.mxu0 0
  %3798 = vmatprep.subr.bf16.mxu0 0
  %3799 = vmatpush1.bf16.msra.mxu0 0
  %3800 = vmatprep.subr.bf16.mxu0 0
  %3801 = vmatpush1.bf16.msra.mxu0 0
  %3802 = vmatprep.subr.bf16.mxu0 0
  %3803 = vmatpush1.bf16.msra.mxu0 %v3483
  %3804 = vmatprep.subr.bf16.mxu0 0
  %3805 = vmatpush1.bf16.msra.mxu0 %v3482
  %3806 = vmatprep.subr.bf16.mxu0 0
  %3807 = vmatpush2.bf16.msra.mxu0 0
  %3808 = vmatprep.subr.bf16.mxu0 0
  %3809 = vmatpush2.bf16.msra.mxu0 0
  %3810 = vmatprep.subr.bf16.mxu0 0
  %3811 = vmatpush2.bf16.msra.mxu0 0
  %3812 = vmatprep.subr.bf16.mxu0 0
  %3813 = vmatpush2.bf16.msra.mxu0 0
  %3814 = vmatprep.subr.bf16.mxu0 0
  %3815 = vmatpush2.bf16.msra.mxu0 0
  %3816 = vmatprep.subr.bf16.mxu0 0
  %3817 = vmatpush2.bf16.msra.mxu0 0
  %3818 = vmatprep.subr.bf16.mxu0 0
  %3819 = vmatpush2.bf16.msra.mxu0 0
  %3820 = vmatprep.subr.bf16.mxu0 0
  %3821 = vmatpush2.bf16.msra.mxu0 0
  %3822 = vmatprep.mubr.bf16.mxu0 0
  %3823 = vmatmul.mubr.bf16.gmra.mxu0 %v3788
  %v3824 = vpop.f32.mrf.mxu0
  %v3825 = vadd.f32 0.0, %v3824
  %v3826 = vpop.f32.mrf.mxu0
  %v3827 = vpop.f32.mrf.mxu0
  %v3828 = vpop.f32.mrf.mxu0
  %3829 = vdwg.mxu0
  %v3830 = vpack.c.bf16 %v3825, %v3825
  %s3831 = scalar_lea.vmem %s9, 128
  %v3832 = vld [vmem:[%s3831] sm:$0xf]
  %v3833 = vld [vmem:[%s3831 + $0x4] sm:$0xf]
  %v3834 = vld [vmem:[%s3831 + $0x8] sm:$0xf]
  %v3835 = vld [vmem:[%s3831 + $0xc] sm:$0xf]
  %v3836 = vld [vmem:[%s3831 + $0x10] sm:$0xf]
  %v3837 = vld [vmem:[%s3831 + $0x14] sm:$0xf]
  %v3838 = vld [vmem:[%s3831 + $0x18] sm:$0xf]
  %v3839 = vld [vmem:[%s3831 + $0x1c] sm:$0xf]
  %v3840 = vld [vmem:[%s3831 + $0x20] sm:$0xf]
  %v3841 = vld [vmem:[%s3831 + $0x24] sm:$0xf]
  %v3842 = vld [vmem:[%s3831 + $0x28] sm:$0xf]
  %v3843 = vld [vmem:[%s3831 + $0x2c] sm:$0xf]
  %v3844 = vld [vmem:[%s3831 + $0x30] sm:$0xf]
  %v3845 = vld [vmem:[%s3831 + $0x34] sm:$0xf]
  %v3846 = vld [vmem:[%s3831 + $0x38] sm:$0xf]
  %v3847 = vld [vmem:[%s3831 + $0x3c] sm:$0xf]
  %v3864 = vunpack.c.l.b16 %v3832
  %v3865 = vunpack.c.l.b16 %v3833
  %v3866 = vunpack.c.l.b16 %v3834
  %v3867 = vunpack.c.l.b16 %v3835
  %v3868 = vunpack.c.l.b16 %v3836
  %v3869 = vunpack.c.l.b16 %v3837
  %v3870 = vunpack.c.l.b16 %v3838
  %v3871 = vunpack.c.l.b16 %v3839
  %v3872 = vunpack.c.l.b16 %v3840
  %v3873 = vunpack.c.l.b16 %v3841
  %v3874 = vunpack.c.l.b16 %v3842
  %v3875 = vunpack.c.l.b16 %v3843
  %v3876 = vunpack.c.l.b16 %v3844
  %v3877 = vunpack.c.l.b16 %v3845
  %v3878 = vunpack.c.l.b16 %v3846
  %v3879 = vunpack.c.l.b16 %v3847
  %v3880 = vpack.c.b16 %v3865, %v3864
  %v3881 = vpack.c.b16 %v3867, %v3866
  %v3882 = vpack.c.b16 %v3869, %v3868
  %v3883 = vpack.c.b16 %v3871, %v3870
  %v3884 = vpack.c.b16 %v3873, %v3872
  %v3885 = vpack.c.b16 %v3875, %v3874
  %v3886 = vpack.c.b16 %v3877, %v3876
  %v3887 = vpack.c.b16 %v3879, %v3878
  %3896 = vmatprep.subr.bf16.mxu0 0
  %3897 = vmatpush1.bf16.msra.mxu0 %v3887
  %3898 = vmatprep.subr.bf16.mxu0 0
  %3899 = vmatpush1.bf16.msra.mxu0 %v3886
  %3900 = vmatprep.subr.bf16.mxu0 0
  %3901 = vmatpush1.bf16.msra.mxu0 %v3885
  %3902 = vmatprep.subr.bf16.mxu0 0
  %3903 = vmatpush1.bf16.msra.mxu0 %v3884
  %3904 = vmatprep.subr.bf16.mxu0 0
  %3905 = vmatpush1.bf16.msra.mxu0 %v3883
  %3906 = vmatprep.subr.bf16.mxu0 0
  %3907 = vmatpush1.bf16.msra.mxu0 %v3882
  %3908 = vmatprep.subr.bf16.mxu0 0
  %3909 = vmatpush1.bf16.msra.mxu0 %v3881
  %3910 = vmatprep.subr.bf16.mxu0 0
  %3911 = vmatpush1.bf16.msra.mxu0 %v3880
  %3912 = vmatprep.subr.bf16.mxu0 0
  %3913 = vmatpush2.bf16.msra.mxu0 0
  %3914 = vmatprep.subr.bf16.mxu0 0
  %3915 = vmatpush2.bf16.msra.mxu0 0
  %3916 = vmatprep.subr.bf16.mxu0 0
  %3917 = vmatpush2.bf16.msra.mxu0 0
  %3918 = vmatprep.subr.bf16.mxu0 0
  %3919 = vmatpush2.bf16.msra.mxu0 0
  %3920 = vmatprep.subr.bf16.mxu0 0
  %3921 = vmatpush2.bf16.msra.mxu0 0
  %3922 = vmatprep.subr.bf16.mxu0 0
  %3923 = vmatpush2.bf16.msra.mxu0 0
  %3924 = vmatprep.subr.bf16.mxu0 0
  %3925 = vmatpush2.bf16.msra.mxu0 0
  %3926 = vmatprep.subr.bf16.mxu0 0
  %3927 = vmatpush2.bf16.msra.mxu0 0
  %3928 = vmatprep.mubr.bf16.mxu0 0
  %3929 = vmatmul.mubr.bf16.gmra.mxu0 %v3830
  %v3930 = vpop.f32.mrf.mxu0
  %v3931 = vadd.f32 0.0, %v3930
  %v3932 = vpop.f32.mrf.mxu0
  %v3933 = vpop.f32.mrf.mxu0
  %v3934 = vpop.f32.mrf.mxu0
  %3935 = vdwg.mxu0
  %v3936 = vadd.f32 %v3780, %v3931
  %s3937 = scalar_lea.vmem %s8, 12
  %v3938 = vld [vmem:[%s3937] sm:$0xf]
  %v3940 = vsel %vm3485, %v3938, 0
  %3942 = vmatprep.subr.bf16.mxu0 0
  %3943 = vmatpush1.bf16.msra.mxu0 0
  %3944 = vmatprep.subr.bf16.mxu0 0
  %3945 = vmatpush1.bf16.msra.mxu0 0
  %3946 = vmatprep.subr.bf16.mxu0 0
  %3947 = vmatpush1.bf16.msra.mxu0 0
  %3948 = vmatprep.subr.bf16.mxu0 0
  %3949 = vmatpush1.bf16.msra.mxu0 0
  %3950 = vmatprep.subr.bf16.mxu0 0
  %3951 = vmatpush1.bf16.msra.mxu0 0
  %3952 = vmatprep.subr.bf16.mxu0 0
  %3953 = vmatpush1.bf16.msra.mxu0 0
  %3954 = vmatprep.subr.bf16.mxu0 0
  %3955 = vmatpush1.bf16.msra.mxu0 %v3483
  %3956 = vmatprep.subr.bf16.mxu0 0
  %3957 = vmatpush1.bf16.msra.mxu0 %v3482
  %3958 = vmatprep.subr.bf16.mxu0 0
  %3959 = vmatpush2.bf16.msra.mxu0 0
  %3960 = vmatprep.subr.bf16.mxu0 0
  %3961 = vmatpush2.bf16.msra.mxu0 0
  %3962 = vmatprep.subr.bf16.mxu0 0
  %3963 = vmatpush2.bf16.msra.mxu0 0
  %3964 = vmatprep.subr.bf16.mxu0 0
  %3965 = vmatpush2.bf16.msra.mxu0 0
  %3966 = vmatprep.subr.bf16.mxu0 0
  %3967 = vmatpush2.bf16.msra.mxu0 0
  %3968 = vmatprep.subr.bf16.mxu0 0
  %3969 = vmatpush2.bf16.msra.mxu0 0
  %3970 = vmatprep.subr.bf16.mxu0 0
  %3971 = vmatpush2.bf16.msra.mxu0 0
  %3972 = vmatprep.subr.bf16.mxu0 0
  %3973 = vmatpush2.bf16.msra.mxu0 0
  %3974 = vmatprep.mubr.bf16.mxu0 0
  %3975 = vmatmul.mubr.bf16.gmra.mxu0 %v3940
  %v3976 = vpop.f32.mrf.mxu0
  %v3977 = vadd.f32 0.0, %v3976
  %v3978 = vpop.f32.mrf.mxu0
  %v3979 = vpop.f32.mrf.mxu0
  %v3980 = vpop.f32.mrf.mxu0
  %3981 = vdwg.mxu0
  %v3982 = vpack.c.bf16 %v3977, %v3977
  %s3983 = scalar_lea.vmem %s9, 192
  %v3984 = vld [vmem:[%s3983] sm:$0xf]
  %v3985 = vld [vmem:[%s3983 + $0x4] sm:$0xf]
  %v3986 = vld [vmem:[%s3983 + $0x8] sm:$0xf]
  %v3987 = vld [vmem:[%s3983 + $0xc] sm:$0xf]
  %v3988 = vld [vmem:[%s3983 + $0x10] sm:$0xf]
  %v3989 = vld [vmem:[%s3983 + $0x14] sm:$0xf]
  %v3990 = vld [vmem:[%s3983 + $0x18] sm:$0xf]
  %v3991 = vld [vmem:[%s3983 + $0x1c] sm:$0xf]
  %v3992 = vld [vmem:[%s3983 + $0x20] sm:$0xf]
  %v3993 = vld [vmem:[%s3983 + $0x24] sm:$0xf]
  %v3994 = vld [vmem:[%s3983 + $0x28] sm:$0xf]
  %v3995 = vld [vmem:[%s3983 + $0x2c] sm:$0xf]
  %v3996 = vld [vmem:[%s3983 + $0x30] sm:$0xf]
  %v3997 = vld [vmem:[%s3983 + $0x34] sm:$0xf]
  %v3998 = vld [vmem:[%s3983 + $0x38] sm:$0xf]
  %v3999 = vld [vmem:[%s3983 + $0x3c] sm:$0xf]
  %v4016 = vunpack.c.l.b16 %v3984
  %v4017 = vunpack.c.l.b16 %v3985
  %v4018 = vunpack.c.l.b16 %v3986
  %v4019 = vunpack.c.l.b16 %v3987
  %v4020 = vunpack.c.l.b16 %v3988
  %v4021 = vunpack.c.l.b16 %v3989
  %v4022 = vunpack.c.l.b16 %v3990
  %v4023 = vunpack.c.l.b16 %v3991
  %v4024 = vunpack.c.l.b16 %v3992
  %v4025 = vunpack.c.l.b16 %v3993
  %v4026 = vunpack.c.l.b16 %v3994
  %v4027 = vunpack.c.l.b16 %v3995
  %v4028 = vunpack.c.l.b16 %v3996
  %v4029 = vunpack.c.l.b16 %v3997
  %v4030 = vunpack.c.l.b16 %v3998
  %v4031 = vunpack.c.l.b16 %v3999
  %v4032 = vpack.c.b16 %v4017, %v4016
  %v4033 = vpack.c.b16 %v4019, %v4018
  %v4034 = vpack.c.b16 %v4021, %v4020
  %v4035 = vpack.c.b16 %v4023, %v4022
  %v4036 = vpack.c.b16 %v4025, %v4024
  %v4037 = vpack.c.b16 %v4027, %v4026
  %v4038 = vpack.c.b16 %v4029, %v4028
  %v4039 = vpack.c.b16 %v4031, %v4030
  %4048 = vmatprep.subr.bf16.mxu0 0
  %4049 = vmatpush1.bf16.msra.mxu0 %v4039
  %4050 = vmatprep.subr.bf16.mxu0 0
  %4051 = vmatpush1.bf16.msra.mxu0 %v4038
  %4052 = vmatprep.subr.bf16.mxu0 0
  %4053 = vmatpush1.bf16.msra.mxu0 %v4037
  %4054 = vmatprep.subr.bf16.mxu0 0
  %4055 = vmatpush1.bf16.msra.mxu0 %v4036
  %4056 = vmatprep.subr.bf16.mxu0 0
  %4057 = vmatpush1.bf16.msra.mxu0 %v4035
  %4058 = vmatprep.subr.bf16.mxu0 0
  %4059 = vmatpush1.bf16.msra.mxu0 %v4034
  %4060 = vmatprep.subr.bf16.mxu0 0
  %4061 = vmatpush1.bf16.msra.mxu0 %v4033
  %4062 = vmatprep.subr.bf16.mxu0 0
  %4063 = vmatpush1.bf16.msra.mxu0 %v4032
  %4064 = vmatprep.subr.bf16.mxu0 0
  %4065 = vmatpush2.bf16.msra.mxu0 0
  %4066 = vmatprep.subr.bf16.mxu0 0
  %4067 = vmatpush2.bf16.msra.mxu0 0
  %4068 = vmatprep.subr.bf16.mxu0 0
  %4069 = vmatpush2.bf16.msra.mxu0 0
  %4070 = vmatprep.subr.bf16.mxu0 0
  %4071 = vmatpush2.bf16.msra.mxu0 0
  %4072 = vmatprep.subr.bf16.mxu0 0
  %4073 = vmatpush2.bf16.msra.mxu0 0
  %4074 = vmatprep.subr.bf16.mxu0 0
  %4075 = vmatpush2.bf16.msra.mxu0 0
  %4076 = vmatprep.subr.bf16.mxu0 0
  %4077 = vmatpush2.bf16.msra.mxu0 0
  %4078 = vmatprep.subr.bf16.mxu0 0
  %4079 = vmatpush2.bf16.msra.mxu0 0
  %4080 = vmatprep.mubr.bf16.mxu0 0
  %4081 = vmatmul.mubr.bf16.gmra.mxu0 %v3982
  %v4082 = vpop.f32.mrf.mxu0
  %v4083 = vadd.f32 0.0, %v4082
  %v4084 = vpop.f32.mrf.mxu0
  %v4085 = vpop.f32.mrf.mxu0
  %v4086 = vpop.f32.mrf.mxu0
  %4087 = vdwg.mxu0
  %v4088 = vadd.f32 %v3936, %v4083
  %s4089 = scalar_lea.vmem %s8, 16
  %v4090 = vld [vmem:[%s4089] sm:$0xf]
  %v4092 = vsel %vm3485, %v4090, 0
  %4094 = vmatprep.subr.bf16.mxu0 0
  %4095 = vmatpush1.bf16.msra.mxu0 0
  %4096 = vmatprep.subr.bf16.mxu0 0
  %4097 = vmatpush1.bf16.msra.mxu0 0
  %4098 = vmatprep.subr.bf16.mxu0 0
  %4099 = vmatpush1.bf16.msra.mxu0 0
  %4100 = vmatprep.subr.bf16.mxu0 0
  %4101 = vmatpush1.bf16.msra.mxu0 0
  %4102 = vmatprep.subr.bf16.mxu0 0
  %4103 = vmatpush1.bf16.msra.mxu0 0
  %4104 = vmatprep.subr.bf16.mxu0 0
  %4105 = vmatpush1.bf16.msra.mxu0 0
  %4106 = vmatprep.subr.bf16.mxu0 0
  %4107 = vmatpush1.bf16.msra.mxu0 %v3483
  %4108 = vmatprep.subr.bf16.mxu0 0
  %4109 = vmatpush1.bf16.msra.mxu0 %v3482
  %4110 = vmatprep.subr.bf16.mxu0 0
  %4111 = vmatpush2.bf16.msra.mxu0 0
  %4112 = vmatprep.subr.bf16.mxu0 0
  %4113 = vmatpush2.bf16.msra.mxu0 0
  %4114 = vmatprep.subr.bf16.mxu0 0
  %4115 = vmatpush2.bf16.msra.mxu0 0
  %4116 = vmatprep.subr.bf16.mxu0 0
  %4117 = vmatpush2.bf16.msra.mxu0 0
  %4118 = vmatprep.subr.bf16.mxu0 0
  %4119 = vmatpush2.bf16.msra.mxu0 0
  %4120 = vmatprep.subr.bf16.mxu0 0
  %4121 = vmatpush2.bf16.msra.mxu0 0
  %4122 = vmatprep.subr.bf16.mxu0 0
  %4123 = vmatpush2.bf16.msra.mxu0 0
  %4124 = vmatprep.subr.bf16.mxu0 0
  %4125 = vmatpush2.bf16.msra.mxu0 0
  %4126 = vmatprep.mubr.bf16.mxu0 0
  %4127 = vmatmul.mubr.bf16.gmra.mxu0 %v4092
  %v4128 = vpop.f32.mrf.mxu0
  %v4129 = vadd.f32 0.0, %v4128
  %v4130 = vpop.f32.mrf.mxu0
  %v4131 = vpop.f32.mrf.mxu0
  %v4132 = vpop.f32.mrf.mxu0
  %4133 = vdwg.mxu0
  %v4134 = vpack.c.bf16 %v4129, %v4129
  %s4135 = scalar_lea.vmem %s9, 256
  %v4136 = vld [vmem:[%s4135] sm:$0xf]
  %v4137 = vld [vmem:[%s4135 + $0x4] sm:$0xf]
  %v4138 = vld [vmem:[%s4135 + $0x8] sm:$0xf]
  %v4139 = vld [vmem:[%s4135 + $0xc] sm:$0xf]
  %v4140 = vld [vmem:[%s4135 + $0x10] sm:$0xf]
  %v4141 = vld [vmem:[%s4135 + $0x14] sm:$0xf]
  %v4142 = vld [vmem:[%s4135 + $0x18] sm:$0xf]
  %v4143 = vld [vmem:[%s4135 + $0x1c] sm:$0xf]
  %v4144 = vld [vmem:[%s4135 + $0x20] sm:$0xf]
  %v4145 = vld [vmem:[%s4135 + $0x24] sm:$0xf]
  %v4146 = vld [vmem:[%s4135 + $0x28] sm:$0xf]
  %v4147 = vld [vmem:[%s4135 + $0x2c] sm:$0xf]
  %v4148 = vld [vmem:[%s4135 + $0x30] sm:$0xf]
  %v4149 = vld [vmem:[%s4135 + $0x34] sm:$0xf]
  %v4150 = vld [vmem:[%s4135 + $0x38] sm:$0xf]
  %v4151 = vld [vmem:[%s4135 + $0x3c] sm:$0xf]
  %v4168 = vunpack.c.l.b16 %v4136
  %v4169 = vunpack.c.l.b16 %v4137
  %v4170 = vunpack.c.l.b16 %v4138
  %v4171 = vunpack.c.l.b16 %v4139
  %v4172 = vunpack.c.l.b16 %v4140
  %v4173 = vunpack.c.l.b16 %v4141
  %v4174 = vunpack.c.l.b16 %v4142
  %v4175 = vunpack.c.l.b16 %v4143
  %v4176 = vunpack.c.l.b16 %v4144
  %v4177 = vunpack.c.l.b16 %v4145
  %v4178 = vunpack.c.l.b16 %v4146
  %v4179 = vunpack.c.l.b16 %v4147
  %v4180 = vunpack.c.l.b16 %v4148
  %v4181 = vunpack.c.l.b16 %v4149
  %v4182 = vunpack.c.l.b16 %v4150
  %v4183 = vunpack.c.l.b16 %v4151
  %v4184 = vpack.c.b16 %v4169, %v4168
  %v4185 = vpack.c.b16 %v4171, %v4170
  %v4186 = vpack.c.b16 %v4173, %v4172
  %v4187 = vpack.c.b16 %v4175, %v4174
  %v4188 = vpack.c.b16 %v4177, %v4176
  %v4189 = vpack.c.b16 %v4179, %v4178
  %v4190 = vpack.c.b16 %v4181, %v4180
  %v4191 = vpack.c.b16 %v4183, %v4182
  %4200 = vmatprep.subr.bf16.mxu0 0
  %4201 = vmatpush1.bf16.msra.mxu0 %v4191
  %4202 = vmatprep.subr.bf16.mxu0 0
  %4203 = vmatpush1.bf16.msra.mxu0 %v4190
  %4204 = vmatprep.subr.bf16.mxu0 0
  %4205 = vmatpush1.bf16.msra.mxu0 %v4189
  %4206 = vmatprep.subr.bf16.mxu0 0
  %4207 = vmatpush1.bf16.msra.mxu0 %v4188
  %4208 = vmatprep.subr.bf16.mxu0 0
  %4209 = vmatpush1.bf16.msra.mxu0 %v4187
  %4210 = vmatprep.subr.bf16.mxu0 0
  %4211 = vmatpush1.bf16.msra.mxu0 %v4186
  %4212 = vmatprep.subr.bf16.mxu0 0
  %4213 = vmatpush1.bf16.msra.mxu0 %v4185
  %4214 = vmatprep.subr.bf16.mxu0 0
  %4215 = vmatpush1.bf16.msra.mxu0 %v4184
  %4216 = vmatprep.subr.bf16.mxu0 0
  %4217 = vmatpush2.bf16.msra.mxu0 0
  %4218 = vmatprep.subr.bf16.mxu0 0
  %4219 = vmatpush2.bf16.msra.mxu0 0
  %4220 = vmatprep.subr.bf16.mxu0 0
  %4221 = vmatpush2.bf16.msra.mxu0 0
  %4222 = vmatprep.subr.bf16.mxu0 0
  %4223 = vmatpush2.bf16.msra.mxu0 0
  %4224 = vmatprep.subr.bf16.mxu0 0
  %4225 = vmatpush2.bf16.msra.mxu0 0
  %4226 = vmatprep.subr.bf16.mxu0 0
  %4227 = vmatpush2.bf16.msra.mxu0 0
  %4228 = vmatprep.subr.bf16.mxu0 0
  %4229 = vmatpush2.bf16.msra.mxu0 0
  %4230 = vmatprep.subr.bf16.mxu0 0
  %4231 = vmatpush2.bf16.msra.mxu0 0
  %4232 = vmatprep.mubr.bf16.mxu0 0
  %4233 = vmatmul.mubr.bf16.gmra.mxu0 %v4134
  %v4234 = vpop.f32.mrf.mxu0
  %v4235 = vadd.f32 0.0, %v4234
  %v4236 = vpop.f32.mrf.mxu0
  %v4237 = vpop.f32.mrf.mxu0
  %v4238 = vpop.f32.mrf.mxu0
  %4239 = vdwg.mxu0
  %v4240 = vadd.f32 %v4088, %v4235
  %s4241 = scalar_lea.vmem %s8, 20
  %v4242 = vld [vmem:[%s4241] sm:$0xf]
  %v4244 = vsel %vm3485, %v4242, 0
  %4246 = vmatprep.subr.bf16.mxu0 0
  %4247 = vmatpush1.bf16.msra.mxu0 0
  %4248 = vmatprep.subr.bf16.mxu0 0
  %4249 = vmatpush1.bf16.msra.mxu0 0
  %4250 = vmatprep.subr.bf16.mxu0 0
  %4251 = vmatpush1.bf16.msra.mxu0 0
  %4252 = vmatprep.subr.bf16.mxu0 0
  %4253 = vmatpush1.bf16.msra.mxu0 0
  %4254 = vmatprep.subr.bf16.mxu0 0
  %4255 = vmatpush1.bf16.msra.mxu0 0
  %4256 = vmatprep.subr.bf16.mxu0 0
  %4257 = vmatpush1.bf16.msra.mxu0 0
  %4258 = vmatprep.subr.bf16.mxu0 0
  %4259 = vmatpush1.bf16.msra.mxu0 %v3483
  %4260 = vmatprep.subr.bf16.mxu0 0
  %4261 = vmatpush1.bf16.msra.mxu0 %v3482
  %4262 = vmatprep.subr.bf16.mxu0 0
  %4263 = vmatpush2.bf16.msra.mxu0 0
  %4264 = vmatprep.subr.bf16.mxu0 0
  %4265 = vmatpush2.bf16.msra.mxu0 0
  %4266 = vmatprep.subr.bf16.mxu0 0
  %4267 = vmatpush2.bf16.msra.mxu0 0
  %4268 = vmatprep.subr.bf16.mxu0 0
  %4269 = vmatpush2.bf16.msra.mxu0 0
  %4270 = vmatprep.subr.bf16.mxu0 0
  %4271 = vmatpush2.bf16.msra.mxu0 0
  %4272 = vmatprep.subr.bf16.mxu0 0
  %4273 = vmatpush2.bf16.msra.mxu0 0
  %4274 = vmatprep.subr.bf16.mxu0 0
  %4275 = vmatpush2.bf16.msra.mxu0 0
  %4276 = vmatprep.subr.bf16.mxu0 0
  %4277 = vmatpush2.bf16.msra.mxu0 0
  %4278 = vmatprep.mubr.bf16.mxu0 0
  %4279 = vmatmul.mubr.bf16.gmra.mxu0 %v4244
  %v4280 = vpop.f32.mrf.mxu0
  %v4281 = vadd.f32 0.0, %v4280
  %v4282 = vpop.f32.mrf.mxu0
  %v4283 = vpop.f32.mrf.mxu0
  %v4284 = vpop.f32.mrf.mxu0
  %4285 = vdwg.mxu0
  %v4286 = vpack.c.bf16 %v4281, %v4281
  %s4287 = scalar_lea.vmem %s9, 320
  %v4288 = vld [vmem:[%s4287] sm:$0xf]
  %v4289 = vld [vmem:[%s4287 + $0x4] sm:$0xf]
  %v4290 = vld [vmem:[%s4287 + $0x8] sm:$0xf]
  %v4291 = vld [vmem:[%s4287 + $0xc] sm:$0xf]
  %v4292 = vld [vmem:[%s4287 + $0x10] sm:$0xf]
  %v4293 = vld [vmem:[%s4287 + $0x14] sm:$0xf]
  %v4294 = vld [vmem:[%s4287 + $0x18] sm:$0xf]
  %v4295 = vld [vmem:[%s4287 + $0x1c] sm:$0xf]
  %v4296 = vld [vmem:[%s4287 + $0x20] sm:$0xf]
  %v4297 = vld [vmem:[%s4287 + $0x24] sm:$0xf]
  %v4298 = vld [vmem:[%s4287 + $0x28] sm:$0xf]
  %v4299 = vld [vmem:[%s4287 + $0x2c] sm:$0xf]
  %v4300 = vld [vmem:[%s4287 + $0x30] sm:$0xf]
  %v4301 = vld [vmem:[%s4287 + $0x34] sm:$0xf]
  %v4302 = vld [vmem:[%s4287 + $0x38] sm:$0xf]
  %v4303 = vld [vmem:[%s4287 + $0x3c] sm:$0xf]
  %v4320 = vunpack.c.l.b16 %v4288
  %v4321 = vunpack.c.l.b16 %v4289
  %v4322 = vunpack.c.l.b16 %v4290
  %v4323 = vunpack.c.l.b16 %v4291
  %v4324 = vunpack.c.l.b16 %v4292
  %v4325 = vunpack.c.l.b16 %v4293
  %v4326 = vunpack.c.l.b16 %v4294
  %v4327 = vunpack.c.l.b16 %v4295
  %v4328 = vunpack.c.l.b16 %v4296
  %v4329 = vunpack.c.l.b16 %v4297
  %v4330 = vunpack.c.l.b16 %v4298
  %v4331 = vunpack.c.l.b16 %v4299
  %v4332 = vunpack.c.l.b16 %v4300
  %v4333 = vunpack.c.l.b16 %v4301
  %v4334 = vunpack.c.l.b16 %v4302
  %v4335 = vunpack.c.l.b16 %v4303
  %v4336 = vpack.c.b16 %v4321, %v4320
  %v4337 = vpack.c.b16 %v4323, %v4322
  %v4338 = vpack.c.b16 %v4325, %v4324
  %v4339 = vpack.c.b16 %v4327, %v4326
  %v4340 = vpack.c.b16 %v4329, %v4328
  %v4341 = vpack.c.b16 %v4331, %v4330
  %v4342 = vpack.c.b16 %v4333, %v4332
  %v4343 = vpack.c.b16 %v4335, %v4334
  %4352 = vmatprep.subr.bf16.mxu0 0
  %4353 = vmatpush1.bf16.msra.mxu0 %v4343
  %4354 = vmatprep.subr.bf16.mxu0 0
  %4355 = vmatpush1.bf16.msra.mxu0 %v4342
  %4356 = vmatprep.subr.bf16.mxu0 0
  %4357 = vmatpush1.bf16.msra.mxu0 %v4341
  %4358 = vmatprep.subr.bf16.mxu0 0
  %4359 = vmatpush1.bf16.msra.mxu0 %v4340
  %4360 = vmatprep.subr.bf16.mxu0 0
  %4361 = vmatpush1.bf16.msra.mxu0 %v4339
  %4362 = vmatprep.subr.bf16.mxu0 0
  %4363 = vmatpush1.bf16.msra.mxu0 %v4338
  %4364 = vmatprep.subr.bf16.mxu0 0
  %4365 = vmatpush1.bf16.msra.mxu0 %v4337
  %4366 = vmatprep.subr.bf16.mxu0 0
  %4367 = vmatpush1.bf16.msra.mxu0 %v4336
  %4368 = vmatprep.subr.bf16.mxu0 0
  %4369 = vmatpush2.bf16.msra.mxu0 0
  %4370 = vmatprep.subr.bf16.mxu0 0
  %4371 = vmatpush2.bf16.msra.mxu0 0
  %4372 = vmatprep.subr.bf16.mxu0 0
  %4373 = vmatpush2.bf16.msra.mxu0 0
  %4374 = vmatprep.subr.bf16.mxu0 0
  %4375 = vmatpush2.bf16.msra.mxu0 0
  %4376 = vmatprep.subr.bf16.mxu0 0
  %4377 = vmatpush2.bf16.msra.mxu0 0
  %4378 = vmatprep.subr.bf16.mxu0 0
  %4379 = vmatpush2.bf16.msra.mxu0 0
  %4380 = vmatprep.subr.bf16.mxu0 0
  %4381 = vmatpush2.bf16.msra.mxu0 0
  %4382 = vmatprep.subr.bf16.mxu0 0
  %4383 = vmatpush2.bf16.msra.mxu0 0
  %4384 = vmatprep.mubr.bf16.mxu0 0
  %4385 = vmatmul.mubr.bf16.gmra.mxu0 %v4286
  %v4386 = vpop.f32.mrf.mxu0
  %v4387 = vadd.f32 0.0, %v4386
  %v4388 = vpop.f32.mrf.mxu0
  %v4389 = vpop.f32.mrf.mxu0
  %v4390 = vpop.f32.mrf.mxu0
  %4391 = vdwg.mxu0
  %v4392 = vadd.f32 %v4240, %v4387
  %s4393 = scalar_lea.vmem %s8, 24
  %v4394 = vld [vmem:[%s4393] sm:$0xf]
  %v4396 = vsel %vm3485, %v4394, 0
  %4398 = vmatprep.subr.bf16.mxu0 0
  %4399 = vmatpush1.bf16.msra.mxu0 0
  %4400 = vmatprep.subr.bf16.mxu0 0
  %4401 = vmatpush1.bf16.msra.mxu0 0
  %4402 = vmatprep.subr.bf16.mxu0 0
  %4403 = vmatpush1.bf16.msra.mxu0 0
  %4404 = vmatprep.subr.bf16.mxu0 0
  %4405 = vmatpush1.bf16.msra.mxu0 0
  %4406 = vmatprep.subr.bf16.mxu0 0
  %4407 = vmatpush1.bf16.msra.mxu0 0
  %4408 = vmatprep.subr.bf16.mxu0 0
  %4409 = vmatpush1.bf16.msra.mxu0 0
  %4410 = vmatprep.subr.bf16.mxu0 0
  %4411 = vmatpush1.bf16.msra.mxu0 %v3483
  %4412 = vmatprep.subr.bf16.mxu0 0
  %4413 = vmatpush1.bf16.msra.mxu0 %v3482
  %4414 = vmatprep.subr.bf16.mxu0 0
  %4415 = vmatpush2.bf16.msra.mxu0 0
  %4416 = vmatprep.subr.bf16.mxu0 0
  %4417 = vmatpush2.bf16.msra.mxu0 0
  %4418 = vmatprep.subr.bf16.mxu0 0
  %4419 = vmatpush2.bf16.msra.mxu0 0
  %4420 = vmatprep.subr.bf16.mxu0 0
  %4421 = vmatpush2.bf16.msra.mxu0 0
  %4422 = vmatprep.subr.bf16.mxu0 0
  %4423 = vmatpush2.bf16.msra.mxu0 0
  %4424 = vmatprep.subr.bf16.mxu0 0
  %4425 = vmatpush2.bf16.msra.mxu0 0
  %4426 = vmatprep.subr.bf16.mxu0 0
  %4427 = vmatpush2.bf16.msra.mxu0 0
  %4428 = vmatprep.subr.bf16.mxu0 0
  %4429 = vmatpush2.bf16.msra.mxu0 0
  %4430 = vmatprep.mubr.bf16.mxu0 0
  %4431 = vmatmul.mubr.bf16.gmra.mxu0 %v4396
  %v4432 = vpop.f32.mrf.mxu0
  %v4433 = vadd.f32 0.0, %v4432
  %v4434 = vpop.f32.mrf.mxu0
  %v4435 = vpop.f32.mrf.mxu0
  %v4436 = vpop.f32.mrf.mxu0
  %4437 = vdwg.mxu0
  %v4438 = vpack.c.bf16 %v4433, %v4433
  %s4439 = scalar_lea.vmem %s9, 384
  %v4440 = vld [vmem:[%s4439] sm:$0xf]
  %v4441 = vld [vmem:[%s4439 + $0x4] sm:$0xf]
  %v4442 = vld [vmem:[%s4439 + $0x8] sm:$0xf]
  %v4443 = vld [vmem:[%s4439 + $0xc] sm:$0xf]
  %v4444 = vld [vmem:[%s4439 + $0x10] sm:$0xf]
  %v4445 = vld [vmem:[%s4439 + $0x14] sm:$0xf]
  %v4446 = vld [vmem:[%s4439 + $0x18] sm:$0xf]
  %v4447 = vld [vmem:[%s4439 + $0x1c] sm:$0xf]
  %v4448 = vld [vmem:[%s4439 + $0x20] sm:$0xf]
  %v4449 = vld [vmem:[%s4439 + $0x24] sm:$0xf]
  %v4450 = vld [vmem:[%s4439 + $0x28] sm:$0xf]
  %v4451 = vld [vmem:[%s4439 + $0x2c] sm:$0xf]
  %v4452 = vld [vmem:[%s4439 + $0x30] sm:$0xf]
  %v4453 = vld [vmem:[%s4439 + $0x34] sm:$0xf]
  %v4454 = vld [vmem:[%s4439 + $0x38] sm:$0xf]
  %v4455 = vld [vmem:[%s4439 + $0x3c] sm:$0xf]
  %v4472 = vunpack.c.l.b16 %v4440
  %v4473 = vunpack.c.l.b16 %v4441
  %v4474 = vunpack.c.l.b16 %v4442
  %v4475 = vunpack.c.l.b16 %v4443
  %v4476 = vunpack.c.l.b16 %v4444
  %v4477 = vunpack.c.l.b16 %v4445
  %v4478 = vunpack.c.l.b16 %v4446
  %v4479 = vunpack.c.l.b16 %v4447
  %v4480 = vunpack.c.l.b16 %v4448
  %v4481 = vunpack.c.l.b16 %v4449
  %v4482 = vunpack.c.l.b16 %v4450
  %v4483 = vunpack.c.l.b16 %v4451
  %v4484 = vunpack.c.l.b16 %v4452
  %v4485 = vunpack.c.l.b16 %v4453
  %v4486 = vunpack.c.l.b16 %v4454
  %v4487 = vunpack.c.l.b16 %v4455
  %v4488 = vpack.c.b16 %v4473, %v4472
  %v4489 = vpack.c.b16 %v4475, %v4474
  %v4490 = vpack.c.b16 %v4477, %v4476
  %v4491 = vpack.c.b16 %v4479, %v4478
  %v4492 = vpack.c.b16 %v4481, %v4480
  %v4493 = vpack.c.b16 %v4483, %v4482
  %v4494 = vpack.c.b16 %v4485, %v4484
  %v4495 = vpack.c.b16 %v4487, %v4486
  %4504 = vmatprep.subr.bf16.mxu0 0
  %4505 = vmatpush1.bf16.msra.mxu0 %v4495
  %4506 = vmatprep.subr.bf16.mxu0 0
  %4507 = vmatpush1.bf16.msra.mxu0 %v4494
  %4508 = vmatprep.subr.bf16.mxu0 0
  %4509 = vmatpush1.bf16.msra.mxu0 %v4493
  %4510 = vmatprep.subr.bf16.mxu0 0
  %4511 = vmatpush1.bf16.msra.mxu0 %v4492
  %4512 = vmatprep.subr.bf16.mxu0 0
  %4513 = vmatpush1.bf16.msra.mxu0 %v4491
  %4514 = vmatprep.subr.bf16.mxu0 0
  %4515 = vmatpush1.bf16.msra.mxu0 %v4490
  %4516 = vmatprep.subr.bf16.mxu0 0
  %4517 = vmatpush1.bf16.msra.mxu0 %v4489
  %4518 = vmatprep.subr.bf16.mxu0 0
  %4519 = vmatpush1.bf16.msra.mxu0 %v4488
  %4520 = vmatprep.subr.bf16.mxu0 0
  %4521 = vmatpush2.bf16.msra.mxu0 0
  %4522 = vmatprep.subr.bf16.mxu0 0
  %4523 = vmatpush2.bf16.msra.mxu0 0
  %4524 = vmatprep.subr.bf16.mxu0 0
  %4525 = vmatpush2.bf16.msra.mxu0 0
  %4526 = vmatprep.subr.bf16.mxu0 0
  %4527 = vmatpush2.bf16.msra.mxu0 0
  %4528 = vmatprep.subr.bf16.mxu0 0
  %4529 = vmatpush2.bf16.msra.mxu0 0
  %4530 = vmatprep.subr.bf16.mxu0 0
  %4531 = vmatpush2.bf16.msra.mxu0 0
  %4532 = vmatprep.subr.bf16.mxu0 0
  %4533 = vmatpush2.bf16.msra.mxu0 0
  %4534 = vmatprep.subr.bf16.mxu0 0
  %4535 = vmatpush2.bf16.msra.mxu0 0
  %4536 = vmatprep.mubr.bf16.mxu0 0
  %4537 = vmatmul.mubr.bf16.gmra.mxu0 %v4438
  %v4538 = vpop.f32.mrf.mxu0
  %v4539 = vadd.f32 0.0, %v4538
  %v4540 = vpop.f32.mrf.mxu0
  %v4541 = vpop.f32.mrf.mxu0
  %v4542 = vpop.f32.mrf.mxu0
  %4543 = vdwg.mxu0
  %v4544 = vadd.f32 %v4392, %v4539
  %s4545 = scalar_lea.vmem %s8, 28
  %v4546 = vld [vmem:[%s4545] sm:$0xf]
  %v4548 = vsel %vm3485, %v4546, 0
  %4550 = vmatprep.subr.bf16.mxu0 0
  %4551 = vmatpush1.bf16.msra.mxu0 0
  %4552 = vmatprep.subr.bf16.mxu0 0
  %4553 = vmatpush1.bf16.msra.mxu0 0
  %4554 = vmatprep.subr.bf16.mxu0 0
  %4555 = vmatpush1.bf16.msra.mxu0 0
  %4556 = vmatprep.subr.bf16.mxu0 0
  %4557 = vmatpush1.bf16.msra.mxu0 0
  %4558 = vmatprep.subr.bf16.mxu0 0
  %4559 = vmatpush1.bf16.msra.mxu0 0
  %4560 = vmatprep.subr.bf16.mxu0 0
  %4561 = vmatpush1.bf16.msra.mxu0 0
  %4562 = vmatprep.subr.bf16.mxu0 0
  %4563 = vmatpush1.bf16.msra.mxu0 %v3483
  %4564 = vmatprep.subr.bf16.mxu0 0
  %4565 = vmatpush1.bf16.msra.mxu0 %v3482
  %4566 = vmatprep.subr.bf16.mxu0 0
  %4567 = vmatpush2.bf16.msra.mxu0 0
  %4568 = vmatprep.subr.bf16.mxu0 0
  %4569 = vmatpush2.bf16.msra.mxu0 0
  %4570 = vmatprep.subr.bf16.mxu0 0
  %4571 = vmatpush2.bf16.msra.mxu0 0
  %4572 = vmatprep.subr.bf16.mxu0 0
  %4573 = vmatpush2.bf16.msra.mxu0 0
  %4574 = vmatprep.subr.bf16.mxu0 0
  %4575 = vmatpush2.bf16.msra.mxu0 0
  %4576 = vmatprep.subr.bf16.mxu0 0
  %4577 = vmatpush2.bf16.msra.mxu0 0
  %4578 = vmatprep.subr.bf16.mxu0 0
  %4579 = vmatpush2.bf16.msra.mxu0 0
  %4580 = vmatprep.subr.bf16.mxu0 0
  %4581 = vmatpush2.bf16.msra.mxu0 0
  %4582 = vmatprep.mubr.bf16.mxu0 0
  %4583 = vmatmul.mubr.bf16.gmra.mxu0 %v4548
  %v4584 = vpop.f32.mrf.mxu0
  %v4585 = vadd.f32 0.0, %v4584
  %v4586 = vpop.f32.mrf.mxu0
  %v4587 = vpop.f32.mrf.mxu0
  %v4588 = vpop.f32.mrf.mxu0
  %4589 = vdwg.mxu0
  %v4590 = vpack.c.bf16 %v4585, %v4585
  %s4591 = scalar_lea.vmem %s9, 448
  %v4592 = vld [vmem:[%s4591] sm:$0xf]
  %v4593 = vld [vmem:[%s4591 + $0x4] sm:$0xf]
  %v4594 = vld [vmem:[%s4591 + $0x8] sm:$0xf]
  %v4595 = vld [vmem:[%s4591 + $0xc] sm:$0xf]
  %v4596 = vld [vmem:[%s4591 + $0x10] sm:$0xf]
  %v4597 = vld [vmem:[%s4591 + $0x14] sm:$0xf]
  %v4598 = vld [vmem:[%s4591 + $0x18] sm:$0xf]
  %v4599 = vld [vmem:[%s4591 + $0x1c] sm:$0xf]
  %v4600 = vld [vmem:[%s4591 + $0x20] sm:$0xf]
  %v4601 = vld [vmem:[%s4591 + $0x24] sm:$0xf]
  %v4602 = vld [vmem:[%s4591 + $0x28] sm:$0xf]
  %v4603 = vld [vmem:[%s4591 + $0x2c] sm:$0xf]
  %v4604 = vld [vmem:[%s4591 + $0x30] sm:$0xf]
  %v4605 = vld [vmem:[%s4591 + $0x34] sm:$0xf]
  %v4606 = vld [vmem:[%s4591 + $0x38] sm:$0xf]
  %v4607 = vld [vmem:[%s4591 + $0x3c] sm:$0xf]
  %v4624 = vunpack.c.l.b16 %v4592
  %v4625 = vunpack.c.l.b16 %v4593
  %v4626 = vunpack.c.l.b16 %v4594
  %v4627 = vunpack.c.l.b16 %v4595
  %v4628 = vunpack.c.l.b16 %v4596
  %v4629 = vunpack.c.l.b16 %v4597
  %v4630 = vunpack.c.l.b16 %v4598
  %v4631 = vunpack.c.l.b16 %v4599
  %v4632 = vunpack.c.l.b16 %v4600
  %v4633 = vunpack.c.l.b16 %v4601
  %v4634 = vunpack.c.l.b16 %v4602
  %v4635 = vunpack.c.l.b16 %v4603
  %v4636 = vunpack.c.l.b16 %v4604
  %v4637 = vunpack.c.l.b16 %v4605
  %v4638 = vunpack.c.l.b16 %v4606
  %v4639 = vunpack.c.l.b16 %v4607
  %v4640 = vpack.c.b16 %v4625, %v4624
  %v4641 = vpack.c.b16 %v4627, %v4626
  %v4642 = vpack.c.b16 %v4629, %v4628
  %v4643 = vpack.c.b16 %v4631, %v4630
  %v4644 = vpack.c.b16 %v4633, %v4632
  %v4645 = vpack.c.b16 %v4635, %v4634
  %v4646 = vpack.c.b16 %v4637, %v4636
  %v4647 = vpack.c.b16 %v4639, %v4638
  %4656 = vmatprep.subr.bf16.mxu0 0
  %4657 = vmatpush1.bf16.msra.mxu0 %v4647
  %4658 = vmatprep.subr.bf16.mxu0 0
  %4659 = vmatpush1.bf16.msra.mxu0 %v4646
  %4660 = vmatprep.subr.bf16.mxu0 0
  %4661 = vmatpush1.bf16.msra.mxu0 %v4645
  %4662 = vmatprep.subr.bf16.mxu0 0
  %4663 = vmatpush1.bf16.msra.mxu0 %v4644
  %4664 = vmatprep.subr.bf16.mxu0 0
  %4665 = vmatpush1.bf16.msra.mxu0 %v4643
  %4666 = vmatprep.subr.bf16.mxu0 0
  %4667 = vmatpush1.bf16.msra.mxu0 %v4642
  %4668 = vmatprep.subr.bf16.mxu0 0
  %4669 = vmatpush1.bf16.msra.mxu0 %v4641
  %4670 = vmatprep.subr.bf16.mxu0 0
  %4671 = vmatpush1.bf16.msra.mxu0 %v4640
  %4672 = vmatprep.subr.bf16.mxu0 0
  %4673 = vmatpush2.bf16.msra.mxu0 0
  %4674 = vmatprep.subr.bf16.mxu0 0
  %4675 = vmatpush2.bf16.msra.mxu0 0
  %4676 = vmatprep.subr.bf16.mxu0 0
  %4677 = vmatpush2.bf16.msra.mxu0 0
  %4678 = vmatprep.subr.bf16.mxu0 0
  %4679 = vmatpush2.bf16.msra.mxu0 0
  %4680 = vmatprep.subr.bf16.mxu0 0
  %4681 = vmatpush2.bf16.msra.mxu0 0
  %4682 = vmatprep.subr.bf16.mxu0 0
  %4683 = vmatpush2.bf16.msra.mxu0 0
  %4684 = vmatprep.subr.bf16.mxu0 0
  %4685 = vmatpush2.bf16.msra.mxu0 0
  %4686 = vmatprep.subr.bf16.mxu0 0
  %4687 = vmatpush2.bf16.msra.mxu0 0
  %4688 = vmatprep.mubr.bf16.mxu0 0
  %4689 = vmatmul.mubr.bf16.gmra.mxu0 %v4590
  %v4690 = vpop.f32.mrf.mxu0
  %v4691 = vadd.f32 0.0, %v4690
  %v4692 = vpop.f32.mrf.mxu0
  %v4693 = vpop.f32.mrf.mxu0
  %v4694 = vpop.f32.mrf.mxu0
  %4695 = vdwg.mxu0
  %v4696 = vadd.f32 %v4544, %v4691
  %s4697 = scalar_lea.vmem %s8, 32
  %v4698 = vld [vmem:[%s4697] sm:$0xf]
  %v4700 = vsel %vm3485, %v4698, 0
  %4702 = vmatprep.subr.bf16.mxu0 0
  %4703 = vmatpush1.bf16.msra.mxu0 0
  %4704 = vmatprep.subr.bf16.mxu0 0
  %4705 = vmatpush1.bf16.msra.mxu0 0
  %4706 = vmatprep.subr.bf16.mxu0 0
  %4707 = vmatpush1.bf16.msra.mxu0 0
  %4708 = vmatprep.subr.bf16.mxu0 0
  %4709 = vmatpush1.bf16.msra.mxu0 0
  %4710 = vmatprep.subr.bf16.mxu0 0
  %4711 = vmatpush1.bf16.msra.mxu0 0
  %4712 = vmatprep.subr.bf16.mxu0 0
  %4713 = vmatpush1.bf16.msra.mxu0 0
  %4714 = vmatprep.subr.bf16.mxu0 0
  %4715 = vmatpush1.bf16.msra.mxu0 %v3483
  %4716 = vmatprep.subr.bf16.mxu0 0
  %4717 = vmatpush1.bf16.msra.mxu0 %v3482
  %4718 = vmatprep.subr.bf16.mxu0 0
  %4719 = vmatpush2.bf16.msra.mxu0 0
  %4720 = vmatprep.subr.bf16.mxu0 0
  %4721 = vmatpush2.bf16.msra.mxu0 0
  %4722 = vmatprep.subr.bf16.mxu0 0
  %4723 = vmatpush2.bf16.msra.mxu0 0
  %4724 = vmatprep.subr.bf16.mxu0 0
  %4725 = vmatpush2.bf16.msra.mxu0 0
  %4726 = vmatprep.subr.bf16.mxu0 0
  %4727 = vmatpush2.bf16.msra.mxu0 0
  %4728 = vmatprep.subr.bf16.mxu0 0
  %4729 = vmatpush2.bf16.msra.mxu0 0
  %4730 = vmatprep.subr.bf16.mxu0 0
  %4731 = vmatpush2.bf16.msra.mxu0 0
  %4732 = vmatprep.subr.bf16.mxu0 0
  %4733 = vmatpush2.bf16.msra.mxu0 0
  %4734 = vmatprep.mubr.bf16.mxu0 0
  %4735 = vmatmul.mubr.bf16.gmra.mxu0 %v4700
  %v4736 = vpop.f32.mrf.mxu0
  %v4737 = vadd.f32 0.0, %v4736
  %v4738 = vpop.f32.mrf.mxu0
  %v4739 = vpop.f32.mrf.mxu0
  %v4740 = vpop.f32.mrf.mxu0
  %4741 = vdwg.mxu0
  %v4742 = vpack.c.bf16 %v4737, %v4737
  %s4743 = scalar_lea.vmem %s9, 512
  %v4744 = vld [vmem:[%s4743] sm:$0xf]
  %v4745 = vld [vmem:[%s4743 + $0x4] sm:$0xf]
  %v4746 = vld [vmem:[%s4743 + $0x8] sm:$0xf]
  %v4747 = vld [vmem:[%s4743 + $0xc] sm:$0xf]
  %v4748 = vld [vmem:[%s4743 + $0x10] sm:$0xf]
  %v4749 = vld [vmem:[%s4743 + $0x14] sm:$0xf]
  %v4750 = vld [vmem:[%s4743 + $0x18] sm:$0xf]
  %v4751 = vld [vmem:[%s4743 + $0x1c] sm:$0xf]
  %v4752 = vld [vmem:[%s4743 + $0x20] sm:$0xf]
  %v4753 = vld [vmem:[%s4743 + $0x24] sm:$0xf]
  %v4754 = vld [vmem:[%s4743 + $0x28] sm:$0xf]
  %v4755 = vld [vmem:[%s4743 + $0x2c] sm:$0xf]
  %v4756 = vld [vmem:[%s4743 + $0x30] sm:$0xf]
  %v4757 = vld [vmem:[%s4743 + $0x34] sm:$0xf]
  %v4758 = vld [vmem:[%s4743 + $0x38] sm:$0xf]
  %v4759 = vld [vmem:[%s4743 + $0x3c] sm:$0xf]
  %v4776 = vunpack.c.l.b16 %v4744
  %v4777 = vunpack.c.l.b16 %v4745
  %v4778 = vunpack.c.l.b16 %v4746
  %v4779 = vunpack.c.l.b16 %v4747
  %v4780 = vunpack.c.l.b16 %v4748
  %v4781 = vunpack.c.l.b16 %v4749
  %v4782 = vunpack.c.l.b16 %v4750
  %v4783 = vunpack.c.l.b16 %v4751
  %v4784 = vunpack.c.l.b16 %v4752
  %v4785 = vunpack.c.l.b16 %v4753
  %v4786 = vunpack.c.l.b16 %v4754
  %v4787 = vunpack.c.l.b16 %v4755
  %v4788 = vunpack.c.l.b16 %v4756
  %v4789 = vunpack.c.l.b16 %v4757
  %v4790 = vunpack.c.l.b16 %v4758
  %v4791 = vunpack.c.l.b16 %v4759
  %v4792 = vpack.c.b16 %v4777, %v4776
  %v4793 = vpack.c.b16 %v4779, %v4778
  %v4794 = vpack.c.b16 %v4781, %v4780
  %v4795 = vpack.c.b16 %v4783, %v4782
  %v4796 = vpack.c.b16 %v4785, %v4784
  %v4797 = vpack.c.b16 %v4787, %v4786
  %v4798 = vpack.c.b16 %v4789, %v4788
  %v4799 = vpack.c.b16 %v4791, %v4790
  %4808 = vmatprep.subr.bf16.mxu0 0
  %4809 = vmatpush1.bf16.msra.mxu0 %v4799
  %4810 = vmatprep.subr.bf16.mxu0 0
  %4811 = vmatpush1.bf16.msra.mxu0 %v4798
  %4812 = vmatprep.subr.bf16.mxu0 0
  %4813 = vmatpush1.bf16.msra.mxu0 %v4797
  %4814 = vmatprep.subr.bf16.mxu0 0
  %4815 = vmatpush1.bf16.msra.mxu0 %v4796
  %4816 = vmatprep.subr.bf16.mxu0 0
  %4817 = vmatpush1.bf16.msra.mxu0 %v4795
  %4818 = vmatprep.subr.bf16.mxu0 0
  %4819 = vmatpush1.bf16.msra.mxu0 %v4794
  %4820 = vmatprep.subr.bf16.mxu0 0
  %4821 = vmatpush1.bf16.msra.mxu0 %v4793
  %4822 = vmatprep.subr.bf16.mxu0 0
  %4823 = vmatpush1.bf16.msra.mxu0 %v4792
  %4824 = vmatprep.subr.bf16.mxu0 0
  %4825 = vmatpush2.bf16.msra.mxu0 0
  %4826 = vmatprep.subr.bf16.mxu0 0
  %4827 = vmatpush2.bf16.msra.mxu0 0
  %4828 = vmatprep.subr.bf16.mxu0 0
  %4829 = vmatpush2.bf16.msra.mxu0 0
  %4830 = vmatprep.subr.bf16.mxu0 0
  %4831 = vmatpush2.bf16.msra.mxu0 0
  %4832 = vmatprep.subr.bf16.mxu0 0
  %4833 = vmatpush2.bf16.msra.mxu0 0
  %4834 = vmatprep.subr.bf16.mxu0 0
  %4835 = vmatpush2.bf16.msra.mxu0 0
  %4836 = vmatprep.subr.bf16.mxu0 0
  %4837 = vmatpush2.bf16.msra.mxu0 0
  %4838 = vmatprep.subr.bf16.mxu0 0
  %4839 = vmatpush2.bf16.msra.mxu0 0
  %4840 = vmatprep.mubr.bf16.mxu0 0
  %4841 = vmatmul.mubr.bf16.gmra.mxu0 %v4742
  %v4842 = vpop.f32.mrf.mxu0
  %v4843 = vadd.f32 0.0, %v4842
  %v4844 = vpop.f32.mrf.mxu0
  %v4845 = vpop.f32.mrf.mxu0
  %v4846 = vpop.f32.mrf.mxu0
  %4847 = vdwg.mxu0
  %v4848 = vadd.f32 %v4696, %v4843
  %s4849 = scalar_lea.vmem %s8, 36
  %v4850 = vld [vmem:[%s4849] sm:$0xf]
  %v4852 = vsel %vm3485, %v4850, 0
  %4854 = vmatprep.subr.bf16.mxu0 0
  %4855 = vmatpush1.bf16.msra.mxu0 0
  %4856 = vmatprep.subr.bf16.mxu0 0
  %4857 = vmatpush1.bf16.msra.mxu0 0
  %4858 = vmatprep.subr.bf16.mxu0 0
  %4859 = vmatpush1.bf16.msra.mxu0 0
  %4860 = vmatprep.subr.bf16.mxu0 0
  %4861 = vmatpush1.bf16.msra.mxu0 0
  %4862 = vmatprep.subr.bf16.mxu0 0
  %4863 = vmatpush1.bf16.msra.mxu0 0
  %4864 = vmatprep.subr.bf16.mxu0 0
  %4865 = vmatpush1.bf16.msra.mxu0 0
  %4866 = vmatprep.subr.bf16.mxu0 0
  %4867 = vmatpush1.bf16.msra.mxu0 %v3483
  %4868 = vmatprep.subr.bf16.mxu0 0
  %4869 = vmatpush1.bf16.msra.mxu0 %v3482
  %4870 = vmatprep.subr.bf16.mxu0 0
  %4871 = vmatpush2.bf16.msra.mxu0 0
  %4872 = vmatprep.subr.bf16.mxu0 0
  %4873 = vmatpush2.bf16.msra.mxu0 0
  %4874 = vmatprep.subr.bf16.mxu0 0
  %4875 = vmatpush2.bf16.msra.mxu0 0
  %4876 = vmatprep.subr.bf16.mxu0 0
  %4877 = vmatpush2.bf16.msra.mxu0 0
  %4878 = vmatprep.subr.bf16.mxu0 0
  %4879 = vmatpush2.bf16.msra.mxu0 0
  %4880 = vmatprep.subr.bf16.mxu0 0
  %4881 = vmatpush2.bf16.msra.mxu0 0
  %4882 = vmatprep.subr.bf16.mxu0 0
  %4883 = vmatpush2.bf16.msra.mxu0 0
  %4884 = vmatprep.subr.bf16.mxu0 0
  %4885 = vmatpush2.bf16.msra.mxu0 0
  %4886 = vmatprep.mubr.bf16.mxu0 0
  %4887 = vmatmul.mubr.bf16.gmra.mxu0 %v4852
  %v4888 = vpop.f32.mrf.mxu0
  %v4889 = vadd.f32 0.0, %v4888
  %v4890 = vpop.f32.mrf.mxu0
  %v4891 = vpop.f32.mrf.mxu0
  %v4892 = vpop.f32.mrf.mxu0
  %4893 = vdwg.mxu0
  %v4894 = vpack.c.bf16 %v4889, %v4889
  %s4895 = scalar_lea.vmem %s9, 576
  %v4896 = vld [vmem:[%s4895] sm:$0xf]
  %v4897 = vld [vmem:[%s4895 + $0x4] sm:$0xf]
  %v4898 = vld [vmem:[%s4895 + $0x8] sm:$0xf]
  %v4899 = vld [vmem:[%s4895 + $0xc] sm:$0xf]
  %v4900 = vld [vmem:[%s4895 + $0x10] sm:$0xf]
  %v4901 = vld [vmem:[%s4895 + $0x14] sm:$0xf]
  %v4902 = vld [vmem:[%s4895 + $0x18] sm:$0xf]
  %v4903 = vld [vmem:[%s4895 + $0x1c] sm:$0xf]
  %v4904 = vld [vmem:[%s4895 + $0x20] sm:$0xf]
  %v4905 = vld [vmem:[%s4895 + $0x24] sm:$0xf]
  %v4906 = vld [vmem:[%s4895 + $0x28] sm:$0xf]
  %v4907 = vld [vmem:[%s4895 + $0x2c] sm:$0xf]
  %v4908 = vld [vmem:[%s4895 + $0x30] sm:$0xf]
  %v4909 = vld [vmem:[%s4895 + $0x34] sm:$0xf]
  %v4910 = vld [vmem:[%s4895 + $0x38] sm:$0xf]
  %v4911 = vld [vmem:[%s4895 + $0x3c] sm:$0xf]
  %v4928 = vunpack.c.l.b16 %v4896
  %v4929 = vunpack.c.l.b16 %v4897
  %v4930 = vunpack.c.l.b16 %v4898
  %v4931 = vunpack.c.l.b16 %v4899
  %v4932 = vunpack.c.l.b16 %v4900
  %v4933 = vunpack.c.l.b16 %v4901
  %v4934 = vunpack.c.l.b16 %v4902
  %v4935 = vunpack.c.l.b16 %v4903
  %v4936 = vunpack.c.l.b16 %v4904
  %v4937 = vunpack.c.l.b16 %v4905
  %v4938 = vunpack.c.l.b16 %v4906
  %v4939 = vunpack.c.l.b16 %v4907
  %v4940 = vunpack.c.l.b16 %v4908
  %v4941 = vunpack.c.l.b16 %v4909
  %v4942 = vunpack.c.l.b16 %v4910
  %v4943 = vunpack.c.l.b16 %v4911
  %v4944 = vpack.c.b16 %v4929, %v4928
  %v4945 = vpack.c.b16 %v4931, %v4930
  %v4946 = vpack.c.b16 %v4933, %v4932
  %v4947 = vpack.c.b16 %v4935, %v4934
  %v4948 = vpack.c.b16 %v4937, %v4936
  %v4949 = vpack.c.b16 %v4939, %v4938
  %v4950 = vpack.c.b16 %v4941, %v4940
  %v4951 = vpack.c.b16 %v4943, %v4942
  %4960 = vmatprep.subr.bf16.mxu0 0
  %4961 = vmatpush1.bf16.msra.mxu0 %v4951
  %4962 = vmatprep.subr.bf16.mxu0 0
  %4963 = vmatpush1.bf16.msra.mxu0 %v4950
  %4964 = vmatprep.subr.bf16.mxu0 0
  %4965 = vmatpush1.bf16.msra.mxu0 %v4949
  %4966 = vmatprep.subr.bf16.mxu0 0
  %4967 = vmatpush1.bf16.msra.mxu0 %v4948
  %4968 = vmatprep.subr.bf16.mxu0 0
  %4969 = vmatpush1.bf16.msra.mxu0 %v4947
  %4970 = vmatprep.subr.bf16.mxu0 0
  %4971 = vmatpush1.bf16.msra.mxu0 %v4946
  %4972 = vmatprep.subr.bf16.mxu0 0
  %4973 = vmatpush1.bf16.msra.mxu0 %v4945
  %4974 = vmatprep.subr.bf16.mxu0 0
  %4975 = vmatpush1.bf16.msra.mxu0 %v4944
  %4976 = vmatprep.subr.bf16.mxu0 0
  %4977 = vmatpush2.bf16.msra.mxu0 0
  %4978 = vmatprep.subr.bf16.mxu0 0
  %4979 = vmatpush2.bf16.msra.mxu0 0
  %4980 = vmatprep.subr.bf16.mxu0 0
  %4981 = vmatpush2.bf16.msra.mxu0 0
  %4982 = vmatprep.subr.bf16.mxu0 0
  %4983 = vmatpush2.bf16.msra.mxu0 0
  %4984 = vmatprep.subr.bf16.mxu0 0
  %4985 = vmatpush2.bf16.msra.mxu0 0
  %4986 = vmatprep.subr.bf16.mxu0 0
  %4987 = vmatpush2.bf16.msra.mxu0 0
  %4988 = vmatprep.subr.bf16.mxu0 0
  %4989 = vmatpush2.bf16.msra.mxu0 0
  %4990 = vmatprep.subr.bf16.mxu0 0
  %4991 = vmatpush2.bf16.msra.mxu0 0
  %4992 = vmatprep.mubr.bf16.mxu0 0
  %4993 = vmatmul.mubr.bf16.gmra.mxu0 %v4894
  %v4994 = vpop.f32.mrf.mxu0
  %v4995 = vadd.f32 0.0, %v4994
  %v4996 = vpop.f32.mrf.mxu0
  %v4997 = vpop.f32.mrf.mxu0
  %v4998 = vpop.f32.mrf.mxu0
  %4999 = vdwg.mxu0
  %v5000 = vadd.f32 %v4848, %v4995
  %s5001 = scalar_lea.vmem %s8, 40
  %v5002 = vld [vmem:[%s5001] sm:$0xf]
  %v5004 = vsel %vm3485, %v5002, 0
  %5006 = vmatprep.subr.bf16.mxu0 0
  %5007 = vmatpush1.bf16.msra.mxu0 0
  %5008 = vmatprep.subr.bf16.mxu0 0
  %5009 = vmatpush1.bf16.msra.mxu0 0
  %5010 = vmatprep.subr.bf16.mxu0 0
  %5011 = vmatpush1.bf16.msra.mxu0 0
  %5012 = vmatprep.subr.bf16.mxu0 0
  %5013 = vmatpush1.bf16.msra.mxu0 0
  %5014 = vmatprep.subr.bf16.mxu0 0
  %5015 = vmatpush1.bf16.msra.mxu0 0
  %5016 = vmatprep.subr.bf16.mxu0 0
  %5017 = vmatpush1.bf16.msra.mxu0 0
  %5018 = vmatprep.subr.bf16.mxu0 0
  %5019 = vmatpush1.bf16.msra.mxu0 %v3483
  %5020 = vmatprep.subr.bf16.mxu0 0
  %5021 = vmatpush1.bf16.msra.mxu0 %v3482
  %5022 = vmatprep.subr.bf16.mxu0 0
  %5023 = vmatpush2.bf16.msra.mxu0 0
  %5024 = vmatprep.subr.bf16.mxu0 0
  %5025 = vmatpush2.bf16.msra.mxu0 0
  %5026 = vmatprep.subr.bf16.mxu0 0
  %5027 = vmatpush2.bf16.msra.mxu0 0
  %5028 = vmatprep.subr.bf16.mxu0 0
  %5029 = vmatpush2.bf16.msra.mxu0 0
  %5030 = vmatprep.subr.bf16.mxu0 0
  %5031 = vmatpush2.bf16.msra.mxu0 0
  %5032 = vmatprep.subr.bf16.mxu0 0
  %5033 = vmatpush2.bf16.msra.mxu0 0
  %5034 = vmatprep.subr.bf16.mxu0 0
  %5035 = vmatpush2.bf16.msra.mxu0 0
  %5036 = vmatprep.subr.bf16.mxu0 0
  %5037 = vmatpush2.bf16.msra.mxu0 0
  %5038 = vmatprep.mubr.bf16.mxu0 0
  %5039 = vmatmul.mubr.bf16.gmra.mxu0 %v5004
  %v5040 = vpop.f32.mrf.mxu0
  %v5041 = vadd.f32 0.0, %v5040
  %v5042 = vpop.f32.mrf.mxu0
  %v5043 = vpop.f32.mrf.mxu0
  %v5044 = vpop.f32.mrf.mxu0
  %5045 = vdwg.mxu0
  %v5046 = vpack.c.bf16 %v5041, %v5041
  %s5047 = scalar_lea.vmem %s9, 640
  %v5048 = vld [vmem:[%s5047] sm:$0xf]
  %v5049 = vld [vmem:[%s5047 + $0x4] sm:$0xf]
  %v5050 = vld [vmem:[%s5047 + $0x8] sm:$0xf]
  %v5051 = vld [vmem:[%s5047 + $0xc] sm:$0xf]
  %v5052 = vld [vmem:[%s5047 + $0x10] sm:$0xf]
  %v5053 = vld [vmem:[%s5047 + $0x14] sm:$0xf]
  %v5054 = vld [vmem:[%s5047 + $0x18] sm:$0xf]
  %v5055 = vld [vmem:[%s5047 + $0x1c] sm:$0xf]
  %v5056 = vld [vmem:[%s5047 + $0x20] sm:$0xf]
  %v5057 = vld [vmem:[%s5047 + $0x24] sm:$0xf]
  %v5058 = vld [vmem:[%s5047 + $0x28] sm:$0xf]
  %v5059 = vld [vmem:[%s5047 + $0x2c] sm:$0xf]
  %v5060 = vld [vmem:[%s5047 + $0x30] sm:$0xf]
  %v5061 = vld [vmem:[%s5047 + $0x34] sm:$0xf]
  %v5062 = vld [vmem:[%s5047 + $0x38] sm:$0xf]
  %v5063 = vld [vmem:[%s5047 + $0x3c] sm:$0xf]
  %v5080 = vunpack.c.l.b16 %v5048
  %v5081 = vunpack.c.l.b16 %v5049
  %v5082 = vunpack.c.l.b16 %v5050
  %v5083 = vunpack.c.l.b16 %v5051
  %v5084 = vunpack.c.l.b16 %v5052
  %v5085 = vunpack.c.l.b16 %v5053
  %v5086 = vunpack.c.l.b16 %v5054
  %v5087 = vunpack.c.l.b16 %v5055
  %v5088 = vunpack.c.l.b16 %v5056
  %v5089 = vunpack.c.l.b16 %v5057
  %v5090 = vunpack.c.l.b16 %v5058
  %v5091 = vunpack.c.l.b16 %v5059
  %v5092 = vunpack.c.l.b16 %v5060
  %v5093 = vunpack.c.l.b16 %v5061
  %v5094 = vunpack.c.l.b16 %v5062
  %v5095 = vunpack.c.l.b16 %v5063
  %v5096 = vpack.c.b16 %v5081, %v5080
  %v5097 = vpack.c.b16 %v5083, %v5082
  %v5098 = vpack.c.b16 %v5085, %v5084
  %v5099 = vpack.c.b16 %v5087, %v5086
  %v5100 = vpack.c.b16 %v5089, %v5088
  %v5101 = vpack.c.b16 %v5091, %v5090
  %v5102 = vpack.c.b16 %v5093, %v5092
  %v5103 = vpack.c.b16 %v5095, %v5094
  %5112 = vmatprep.subr.bf16.mxu0 0
  %5113 = vmatpush1.bf16.msra.mxu0 %v5103
  %5114 = vmatprep.subr.bf16.mxu0 0
  %5115 = vmatpush1.bf16.msra.mxu0 %v5102
  %5116 = vmatprep.subr.bf16.mxu0 0
  %5117 = vmatpush1.bf16.msra.mxu0 %v5101
  %5118 = vmatprep.subr.bf16.mxu0 0
  %5119 = vmatpush1.bf16.msra.mxu0 %v5100
  %5120 = vmatprep.subr.bf16.mxu0 0
  %5121 = vmatpush1.bf16.msra.mxu0 %v5099
  %5122 = vmatprep.subr.bf16.mxu0 0
  %5123 = vmatpush1.bf16.msra.mxu0 %v5098
  %5124 = vmatprep.subr.bf16.mxu0 0
  %5125 = vmatpush1.bf16.msra.mxu0 %v5097
  %5126 = vmatprep.subr.bf16.mxu0 0
  %5127 = vmatpush1.bf16.msra.mxu0 %v5096
  %5128 = vmatprep.subr.bf16.mxu0 0
  %5129 = vmatpush2.bf16.msra.mxu0 0
  %5130 = vmatprep.subr.bf16.mxu0 0
  %5131 = vmatpush2.bf16.msra.mxu0 0
  %5132 = vmatprep.subr.bf16.mxu0 0
  %5133 = vmatpush2.bf16.msra.mxu0 0
  %5134 = vmatprep.subr.bf16.mxu0 0
  %5135 = vmatpush2.bf16.msra.mxu0 0
  %5136 = vmatprep.subr.bf16.mxu0 0
  %5137 = vmatpush2.bf16.msra.mxu0 0
  %5138 = vmatprep.subr.bf16.mxu0 0
  %5139 = vmatpush2.bf16.msra.mxu0 0
  %5140 = vmatprep.subr.bf16.mxu0 0
  %5141 = vmatpush2.bf16.msra.mxu0 0
  %5142 = vmatprep.subr.bf16.mxu0 0
  %5143 = vmatpush2.bf16.msra.mxu0 0
  %5144 = vmatprep.mubr.bf16.mxu0 0
  %5145 = vmatmul.mubr.bf16.gmra.mxu0 %v5046
  %v5146 = vpop.f32.mrf.mxu0
  %v5147 = vadd.f32 0.0, %v5146
  %v5148 = vpop.f32.mrf.mxu0
  %v5149 = vpop.f32.mrf.mxu0
  %v5150 = vpop.f32.mrf.mxu0
  %5151 = vdwg.mxu0
  %v5152 = vadd.f32 %v5000, %v5147
  %s5153 = scalar_lea.vmem %s8, 44
  %v5154 = vld [vmem:[%s5153] sm:$0xf]
  %v5156 = vsel %vm3485, %v5154, 0
  %5158 = vmatprep.subr.bf16.mxu0 0
  %5159 = vmatpush1.bf16.msra.mxu0 0
  %5160 = vmatprep.subr.bf16.mxu0 0
  %5161 = vmatpush1.bf16.msra.mxu0 0
  %5162 = vmatprep.subr.bf16.mxu0 0
  %5163 = vmatpush1.bf16.msra.mxu0 0
  %5164 = vmatprep.subr.bf16.mxu0 0
  %5165 = vmatpush1.bf16.msra.mxu0 0
  %5166 = vmatprep.subr.bf16.mxu0 0
  %5167 = vmatpush1.bf16.msra.mxu0 0
  %5168 = vmatprep.subr.bf16.mxu0 0
  %5169 = vmatpush1.bf16.msra.mxu0 0
  %5170 = vmatprep.subr.bf16.mxu0 0
  %5171 = vmatpush1.bf16.msra.mxu0 %v3483
  %5172 = vmatprep.subr.bf16.mxu0 0
  %5173 = vmatpush1.bf16.msra.mxu0 %v3482
  %5174 = vmatprep.subr.bf16.mxu0 0
  %5175 = vmatpush2.bf16.msra.mxu0 0
  %5176 = vmatprep.subr.bf16.mxu0 0
  %5177 = vmatpush2.bf16.msra.mxu0 0
  %5178 = vmatprep.subr.bf16.mxu0 0
  %5179 = vmatpush2.bf16.msra.mxu0 0
  %5180 = vmatprep.subr.bf16.mxu0 0
  %5181 = vmatpush2.bf16.msra.mxu0 0
  %5182 = vmatprep.subr.bf16.mxu0 0
  %5183 = vmatpush2.bf16.msra.mxu0 0
  %5184 = vmatprep.subr.bf16.mxu0 0
  %5185 = vmatpush2.bf16.msra.mxu0 0
  %5186 = vmatprep.subr.bf16.mxu0 0
  %5187 = vmatpush2.bf16.msra.mxu0 0
  %5188 = vmatprep.subr.bf16.mxu0 0
  %5189 = vmatpush2.bf16.msra.mxu0 0
  %5190 = vmatprep.mubr.bf16.mxu0 0
  %5191 = vmatmul.mubr.bf16.gmra.mxu0 %v5156
  %v5192 = vpop.f32.mrf.mxu0
  %v5193 = vadd.f32 0.0, %v5192
  %v5194 = vpop.f32.mrf.mxu0
  %v5195 = vpop.f32.mrf.mxu0
  %v5196 = vpop.f32.mrf.mxu0
  %5197 = vdwg.mxu0
  %v5198 = vpack.c.bf16 %v5193, %v5193
  %s5199 = scalar_lea.vmem %s9, 704
  %v5200 = vld [vmem:[%s5199] sm:$0xf]
  %v5201 = vld [vmem:[%s5199 + $0x4] sm:$0xf]
  %v5202 = vld [vmem:[%s5199 + $0x8] sm:$0xf]
  %v5203 = vld [vmem:[%s5199 + $0xc] sm:$0xf]
  %v5204 = vld [vmem:[%s5199 + $0x10] sm:$0xf]
  %v5205 = vld [vmem:[%s5199 + $0x14] sm:$0xf]
  %v5206 = vld [vmem:[%s5199 + $0x18] sm:$0xf]
  %v5207 = vld [vmem:[%s5199 + $0x1c] sm:$0xf]
  %v5208 = vld [vmem:[%s5199 + $0x20] sm:$0xf]
  %v5209 = vld [vmem:[%s5199 + $0x24] sm:$0xf]
  %v5210 = vld [vmem:[%s5199 + $0x28] sm:$0xf]
  %v5211 = vld [vmem:[%s5199 + $0x2c] sm:$0xf]
  %v5212 = vld [vmem:[%s5199 + $0x30] sm:$0xf]
  %v5213 = vld [vmem:[%s5199 + $0x34] sm:$0xf]
  %v5214 = vld [vmem:[%s5199 + $0x38] sm:$0xf]
  %v5215 = vld [vmem:[%s5199 + $0x3c] sm:$0xf]
  %v5232 = vunpack.c.l.b16 %v5200
  %v5233 = vunpack.c.l.b16 %v5201
  %v5234 = vunpack.c.l.b16 %v5202
  %v5235 = vunpack.c.l.b16 %v5203
  %v5236 = vunpack.c.l.b16 %v5204
  %v5237 = vunpack.c.l.b16 %v5205
  %v5238 = vunpack.c.l.b16 %v5206
  %v5239 = vunpack.c.l.b16 %v5207
  %v5240 = vunpack.c.l.b16 %v5208
  %v5241 = vunpack.c.l.b16 %v5209
  %v5242 = vunpack.c.l.b16 %v5210
  %v5243 = vunpack.c.l.b16 %v5211
  %v5244 = vunpack.c.l.b16 %v5212
  %v5245 = vunpack.c.l.b16 %v5213
  %v5246 = vunpack.c.l.b16 %v5214
  %v5247 = vunpack.c.l.b16 %v5215
  %v5248 = vpack.c.b16 %v5233, %v5232
  %v5249 = vpack.c.b16 %v5235, %v5234
  %v5250 = vpack.c.b16 %v5237, %v5236
  %v5251 = vpack.c.b16 %v5239, %v5238
  %v5252 = vpack.c.b16 %v5241, %v5240
  %v5253 = vpack.c.b16 %v5243, %v5242
  %v5254 = vpack.c.b16 %v5245, %v5244
  %v5255 = vpack.c.b16 %v5247, %v5246
  %5264 = vmatprep.subr.bf16.mxu0 0
  %5265 = vmatpush1.bf16.msra.mxu0 %v5255
  %5266 = vmatprep.subr.bf16.mxu0 0
  %5267 = vmatpush1.bf16.msra.mxu0 %v5254
  %5268 = vmatprep.subr.bf16.mxu0 0
  %5269 = vmatpush1.bf16.msra.mxu0 %v5253
  %5270 = vmatprep.subr.bf16.mxu0 0
  %5271 = vmatpush1.bf16.msra.mxu0 %v5252
  %5272 = vmatprep.subr.bf16.mxu0 0
  %5273 = vmatpush1.bf16.msra.mxu0 %v5251
  %5274 = vmatprep.subr.bf16.mxu0 0
  %5275 = vmatpush1.bf16.msra.mxu0 %v5250
  %5276 = vmatprep.subr.bf16.mxu0 0
  %5277 = vmatpush1.bf16.msra.mxu0 %v5249
  %5278 = vmatprep.subr.bf16.mxu0 0
  %5279 = vmatpush1.bf16.msra.mxu0 %v5248
  %5280 = vmatprep.subr.bf16.mxu0 0
  %5281 = vmatpush2.bf16.msra.mxu0 0
  %5282 = vmatprep.subr.bf16.mxu0 0
  %5283 = vmatpush2.bf16.msra.mxu0 0
  %5284 = vmatprep.subr.bf16.mxu0 0
  %5285 = vmatpush2.bf16.msra.mxu0 0
  %5286 = vmatprep.subr.bf16.mxu0 0
  %5287 = vmatpush2.bf16.msra.mxu0 0
  %5288 = vmatprep.subr.bf16.mxu0 0
  %5289 = vmatpush2.bf16.msra.mxu0 0
  %5290 = vmatprep.subr.bf16.mxu0 0
  %5291 = vmatpush2.bf16.msra.mxu0 0
  %5292 = vmatprep.subr.bf16.mxu0 0
  %5293 = vmatpush2.bf16.msra.mxu0 0
  %5294 = vmatprep.subr.bf16.mxu0 0
  %5295 = vmatpush2.bf16.msra.mxu0 0
  %5296 = vmatprep.mubr.bf16.mxu0 0
  %5297 = vmatmul.mubr.bf16.gmra.mxu0 %v5198
  %v5298 = vpop.f32.mrf.mxu0
  %v5299 = vadd.f32 0.0, %v5298
  %v5300 = vpop.f32.mrf.mxu0
  %v5301 = vpop.f32.mrf.mxu0
  %v5302 = vpop.f32.mrf.mxu0
  %5303 = vdwg.mxu0
  %v5304 = vadd.f32 %v5152, %v5299
  %s5305 = scalar_lea.vmem %s8, 48
  %v5306 = vld [vmem:[%s5305] sm:$0xf]
  %v5308 = vsel %vm3485, %v5306, 0
  %5310 = vmatprep.subr.bf16.mxu0 0
  %5311 = vmatpush1.bf16.msra.mxu0 0
  %5312 = vmatprep.subr.bf16.mxu0 0
  %5313 = vmatpush1.bf16.msra.mxu0 0
  %5314 = vmatprep.subr.bf16.mxu0 0
  %5315 = vmatpush1.bf16.msra.mxu0 0
  %5316 = vmatprep.subr.bf16.mxu0 0
  %5317 = vmatpush1.bf16.msra.mxu0 0
  %5318 = vmatprep.subr.bf16.mxu0 0
  %5319 = vmatpush1.bf16.msra.mxu0 0
  %5320 = vmatprep.subr.bf16.mxu0 0
  %5321 = vmatpush1.bf16.msra.mxu0 0
  %5322 = vmatprep.subr.bf16.mxu0 0
  %5323 = vmatpush1.bf16.msra.mxu0 %v3483
  %5324 = vmatprep.subr.bf16.mxu0 0
  %5325 = vmatpush1.bf16.msra.mxu0 %v3482
  %5326 = vmatprep.subr.bf16.mxu0 0
  %5327 = vmatpush2.bf16.msra.mxu0 0
  %5328 = vmatprep.subr.bf16.mxu0 0
  %5329 = vmatpush2.bf16.msra.mxu0 0
  %5330 = vmatprep.subr.bf16.mxu0 0
  %5331 = vmatpush2.bf16.msra.mxu0 0
  %5332 = vmatprep.subr.bf16.mxu0 0
  %5333 = vmatpush2.bf16.msra.mxu0 0
  %5334 = vmatprep.subr.bf16.mxu0 0
  %5335 = vmatpush2.bf16.msra.mxu0 0
  %5336 = vmatprep.subr.bf16.mxu0 0
  %5337 = vmatpush2.bf16.msra.mxu0 0
  %5338 = vmatprep.subr.bf16.mxu0 0
  %5339 = vmatpush2.bf16.msra.mxu0 0
  %5340 = vmatprep.subr.bf16.mxu0 0
  %5341 = vmatpush2.bf16.msra.mxu0 0
  %5342 = vmatprep.mubr.bf16.mxu0 0
  %5343 = vmatmul.mubr.bf16.gmra.mxu0 %v5308
  %v5344 = vpop.f32.mrf.mxu0
  %v5345 = vadd.f32 0.0, %v5344
  %v5346 = vpop.f32.mrf.mxu0
  %v5347 = vpop.f32.mrf.mxu0
  %v5348 = vpop.f32.mrf.mxu0
  %5349 = vdwg.mxu0
  %v5350 = vpack.c.bf16 %v5345, %v5345
  %s5351 = scalar_lea.vmem %s9, 768
  %v5352 = vld [vmem:[%s5351] sm:$0xf]
  %v5353 = vld [vmem:[%s5351 + $0x4] sm:$0xf]
  %v5354 = vld [vmem:[%s5351 + $0x8] sm:$0xf]
  %v5355 = vld [vmem:[%s5351 + $0xc] sm:$0xf]
  %v5356 = vld [vmem:[%s5351 + $0x10] sm:$0xf]
  %v5357 = vld [vmem:[%s5351 + $0x14] sm:$0xf]
  %v5358 = vld [vmem:[%s5351 + $0x18] sm:$0xf]
  %v5359 = vld [vmem:[%s5351 + $0x1c] sm:$0xf]
  %v5360 = vld [vmem:[%s5351 + $0x20] sm:$0xf]
  %v5361 = vld [vmem:[%s5351 + $0x24] sm:$0xf]
  %v5362 = vld [vmem:[%s5351 + $0x28] sm:$0xf]
  %v5363 = vld [vmem:[%s5351 + $0x2c] sm:$0xf]
  %v5364 = vld [vmem:[%s5351 + $0x30] sm:$0xf]
  %v5365 = vld [vmem:[%s5351 + $0x34] sm:$0xf]
  %v5366 = vld [vmem:[%s5351 + $0x38] sm:$0xf]
  %v5367 = vld [vmem:[%s5351 + $0x3c] sm:$0xf]
  %v5384 = vunpack.c.l.b16 %v5352
  %v5385 = vunpack.c.l.b16 %v5353
  %v5386 = vunpack.c.l.b16 %v5354
  %v5387 = vunpack.c.l.b16 %v5355
  %v5388 = vunpack.c.l.b16 %v5356
  %v5389 = vunpack.c.l.b16 %v5357
  %v5390 = vunpack.c.l.b16 %v5358
  %v5391 = vunpack.c.l.b16 %v5359
  %v5392 = vunpack.c.l.b16 %v5360
  %v5393 = vunpack.c.l.b16 %v5361
  %v5394 = vunpack.c.l.b16 %v5362
  %v5395 = vunpack.c.l.b16 %v5363
  %v5396 = vunpack.c.l.b16 %v5364
  %v5397 = vunpack.c.l.b16 %v5365
  %v5398 = vunpack.c.l.b16 %v5366
  %v5399 = vunpack.c.l.b16 %v5367
  %v5400 = vpack.c.b16 %v5385, %v5384
  %v5401 = vpack.c.b16 %v5387, %v5386
  %v5402 = vpack.c.b16 %v5389, %v5388
  %v5403 = vpack.c.b16 %v5391, %v5390
  %v5404 = vpack.c.b16 %v5393, %v5392
  %v5405 = vpack.c.b16 %v5395, %v5394
  %v5406 = vpack.c.b16 %v5397, %v5396
  %v5407 = vpack.c.b16 %v5399, %v5398
  %5416 = vmatprep.subr.bf16.mxu0 0
  %5417 = vmatpush1.bf16.msra.mxu0 %v5407
  %5418 = vmatprep.subr.bf16.mxu0 0
  %5419 = vmatpush1.bf16.msra.mxu0 %v5406
  %5420 = vmatprep.subr.bf16.mxu0 0
  %5421 = vmatpush1.bf16.msra.mxu0 %v5405
  %5422 = vmatprep.subr.bf16.mxu0 0
  %5423 = vmatpush1.bf16.msra.mxu0 %v5404
  %5424 = vmatprep.subr.bf16.mxu0 0
  %5425 = vmatpush1.bf16.msra.mxu0 %v5403
  %5426 = vmatprep.subr.bf16.mxu0 0
  %5427 = vmatpush1.bf16.msra.mxu0 %v5402
  %5428 = vmatprep.subr.bf16.mxu0 0
  %5429 = vmatpush1.bf16.msra.mxu0 %v5401
  %5430 = vmatprep.subr.bf16.mxu0 0
  %5431 = vmatpush1.bf16.msra.mxu0 %v5400
  %5432 = vmatprep.subr.bf16.mxu0 0
  %5433 = vmatpush2.bf16.msra.mxu0 0
  %5434 = vmatprep.subr.bf16.mxu0 0
  %5435 = vmatpush2.bf16.msra.mxu0 0
  %5436 = vmatprep.subr.bf16.mxu0 0
  %5437 = vmatpush2.bf16.msra.mxu0 0
  %5438 = vmatprep.subr.bf16.mxu0 0
  %5439 = vmatpush2.bf16.msra.mxu0 0
  %5440 = vmatprep.subr.bf16.mxu0 0
  %5441 = vmatpush2.bf16.msra.mxu0 0
  %5442 = vmatprep.subr.bf16.mxu0 0
  %5443 = vmatpush2.bf16.msra.mxu0 0
  %5444 = vmatprep.subr.bf16.mxu0 0
  %5445 = vmatpush2.bf16.msra.mxu0 0
  %5446 = vmatprep.subr.bf16.mxu0 0
  %5447 = vmatpush2.bf16.msra.mxu0 0
  %5448 = vmatprep.mubr.bf16.mxu0 0
  %5449 = vmatmul.mubr.bf16.gmra.mxu0 %v5350
  %v5450 = vpop.f32.mrf.mxu0
  %v5451 = vadd.f32 0.0, %v5450
  %v5452 = vpop.f32.mrf.mxu0
  %v5453 = vpop.f32.mrf.mxu0
  %v5454 = vpop.f32.mrf.mxu0
  %5455 = vdwg.mxu0
  %v5456 = vadd.f32 %v5304, %v5451
  %s5457 = scalar_lea.vmem %s8, 52
  %v5458 = vld [vmem:[%s5457] sm:$0xf]
  %v5460 = vsel %vm3485, %v5458, 0
  %5462 = vmatprep.subr.bf16.mxu0 0
  %5463 = vmatpush1.bf16.msra.mxu0 0
  %5464 = vmatprep.subr.bf16.mxu0 0
  %5465 = vmatpush1.bf16.msra.mxu0 0
  %5466 = vmatprep.subr.bf16.mxu0 0
  %5467 = vmatpush1.bf16.msra.mxu0 0
  %5468 = vmatprep.subr.bf16.mxu0 0
  %5469 = vmatpush1.bf16.msra.mxu0 0
  %5470 = vmatprep.subr.bf16.mxu0 0
  %5471 = vmatpush1.bf16.msra.mxu0 0
  %5472 = vmatprep.subr.bf16.mxu0 0
  %5473 = vmatpush1.bf16.msra.mxu0 0
  %5474 = vmatprep.subr.bf16.mxu0 0
  %5475 = vmatpush1.bf16.msra.mxu0 %v3483
  %5476 = vmatprep.subr.bf16.mxu0 0
  %5477 = vmatpush1.bf16.msra.mxu0 %v3482
  %5478 = vmatprep.subr.bf16.mxu0 0
  %5479 = vmatpush2.bf16.msra.mxu0 0
  %5480 = vmatprep.subr.bf16.mxu0 0
  %5481 = vmatpush2.bf16.msra.mxu0 0
  %5482 = vmatprep.subr.bf16.mxu0 0
  %5483 = vmatpush2.bf16.msra.mxu0 0
  %5484 = vmatprep.subr.bf16.mxu0 0
  %5485 = vmatpush2.bf16.msra.mxu0 0
  %5486 = vmatprep.subr.bf16.mxu0 0
  %5487 = vmatpush2.bf16.msra.mxu0 0
  %5488 = vmatprep.subr.bf16.mxu0 0
  %5489 = vmatpush2.bf16.msra.mxu0 0
  %5490 = vmatprep.subr.bf16.mxu0 0
  %5491 = vmatpush2.bf16.msra.mxu0 0
  %5492 = vmatprep.subr.bf16.mxu0 0
  %5493 = vmatpush2.bf16.msra.mxu0 0
  %5494 = vmatprep.mubr.bf16.mxu0 0
  %5495 = vmatmul.mubr.bf16.gmra.mxu0 %v5460
  %v5496 = vpop.f32.mrf.mxu0
  %v5497 = vadd.f32 0.0, %v5496
  %v5498 = vpop.f32.mrf.mxu0
  %v5499 = vpop.f32.mrf.mxu0
  %v5500 = vpop.f32.mrf.mxu0
  %5501 = vdwg.mxu0
  %v5502 = vpack.c.bf16 %v5497, %v5497
  %s5503 = scalar_lea.vmem %s9, 832
  %v5504 = vld [vmem:[%s5503] sm:$0xf]
  %v5505 = vld [vmem:[%s5503 + $0x4] sm:$0xf]
  %v5506 = vld [vmem:[%s5503 + $0x8] sm:$0xf]
  %v5507 = vld [vmem:[%s5503 + $0xc] sm:$0xf]
  %v5508 = vld [vmem:[%s5503 + $0x10] sm:$0xf]
  %v5509 = vld [vmem:[%s5503 + $0x14] sm:$0xf]
  %v5510 = vld [vmem:[%s5503 + $0x18] sm:$0xf]
  %v5511 = vld [vmem:[%s5503 + $0x1c] sm:$0xf]
  %v5512 = vld [vmem:[%s5503 + $0x20] sm:$0xf]
  %v5513 = vld [vmem:[%s5503 + $0x24] sm:$0xf]
  %v5514 = vld [vmem:[%s5503 + $0x28] sm:$0xf]
  %v5515 = vld [vmem:[%s5503 + $0x2c] sm:$0xf]
  %v5516 = vld [vmem:[%s5503 + $0x30] sm:$0xf]
  %v5517 = vld [vmem:[%s5503 + $0x34] sm:$0xf]
  %v5518 = vld [vmem:[%s5503 + $0x38] sm:$0xf]
  %v5519 = vld [vmem:[%s5503 + $0x3c] sm:$0xf]
  %v5536 = vunpack.c.l.b16 %v5504
  %v5537 = vunpack.c.l.b16 %v5505
  %v5538 = vunpack.c.l.b16 %v5506
  %v5539 = vunpack.c.l.b16 %v5507
  %v5540 = vunpack.c.l.b16 %v5508
  %v5541 = vunpack.c.l.b16 %v5509
  %v5542 = vunpack.c.l.b16 %v5510
  %v5543 = vunpack.c.l.b16 %v5511
  %v5544 = vunpack.c.l.b16 %v5512
  %v5545 = vunpack.c.l.b16 %v5513
  %v5546 = vunpack.c.l.b16 %v5514
  %v5547 = vunpack.c.l.b16 %v5515
  %v5548 = vunpack.c.l.b16 %v5516
  %v5549 = vunpack.c.l.b16 %v5517
  %v5550 = vunpack.c.l.b16 %v5518
  %v5551 = vunpack.c.l.b16 %v5519
  %v5552 = vpack.c.b16 %v5537, %v5536
  %v5553 = vpack.c.b16 %v5539, %v5538
  %v5554 = vpack.c.b16 %v5541, %v5540
  %v5555 = vpack.c.b16 %v5543, %v5542
  %v5556 = vpack.c.b16 %v5545, %v5544
  %v5557 = vpack.c.b16 %v5547, %v5546
  %v5558 = vpack.c.b16 %v5549, %v5548
  %v5559 = vpack.c.b16 %v5551, %v5550
  %5568 = vmatprep.subr.bf16.mxu0 0
  %5569 = vmatpush1.bf16.msra.mxu0 %v5559
  %5570 = vmatprep.subr.bf16.mxu0 0
  %5571 = vmatpush1.bf16.msra.mxu0 %v5558
  %5572 = vmatprep.subr.bf16.mxu0 0
  %5573 = vmatpush1.bf16.msra.mxu0 %v5557
  %5574 = vmatprep.subr.bf16.mxu0 0
  %5575 = vmatpush1.bf16.msra.mxu0 %v5556
  %5576 = vmatprep.subr.bf16.mxu0 0
  %5577 = vmatpush1.bf16.msra.mxu0 %v5555
  %5578 = vmatprep.subr.bf16.mxu0 0
  %5579 = vmatpush1.bf16.msra.mxu0 %v5554
  %5580 = vmatprep.subr.bf16.mxu0 0
  %5581 = vmatpush1.bf16.msra.mxu0 %v5553
  %5582 = vmatprep.subr.bf16.mxu0 0
  %5583 = vmatpush1.bf16.msra.mxu0 %v5552
  %5584 = vmatprep.subr.bf16.mxu0 0
  %5585 = vmatpush2.bf16.msra.mxu0 0
  %5586 = vmatprep.subr.bf16.mxu0 0
  %5587 = vmatpush2.bf16.msra.mxu0 0
  %5588 = vmatprep.subr.bf16.mxu0 0
  %5589 = vmatpush2.bf16.msra.mxu0 0
  %5590 = vmatprep.subr.bf16.mxu0 0
  %5591 = vmatpush2.bf16.msra.mxu0 0
  %5592 = vmatprep.subr.bf16.mxu0 0
  %5593 = vmatpush2.bf16.msra.mxu0 0
  %5594 = vmatprep.subr.bf16.mxu0 0
  %5595 = vmatpush2.bf16.msra.mxu0 0
  %5596 = vmatprep.subr.bf16.mxu0 0
  %5597 = vmatpush2.bf16.msra.mxu0 0
  %5598 = vmatprep.subr.bf16.mxu0 0
  %5599 = vmatpush2.bf16.msra.mxu0 0
  %5600 = vmatprep.mubr.bf16.mxu0 0
  %5601 = vmatmul.mubr.bf16.gmra.mxu0 %v5502
  %v5602 = vpop.f32.mrf.mxu0
  %v5603 = vadd.f32 0.0, %v5602
  %v5604 = vpop.f32.mrf.mxu0
  %v5605 = vpop.f32.mrf.mxu0
  %v5606 = vpop.f32.mrf.mxu0
  %5607 = vdwg.mxu0
  %v5608 = vadd.f32 %v5456, %v5603
  %s5609 = scalar_lea.vmem %s8, 56
  %v5610 = vld [vmem:[%s5609] sm:$0xf]
  %v5612 = vsel %vm3485, %v5610, 0
  %5614 = vmatprep.subr.bf16.mxu0 0
  %5615 = vmatpush1.bf16.msra.mxu0 0
  %5616 = vmatprep.subr.bf16.mxu0 0
  %5617 = vmatpush1.bf16.msra.mxu0 0
  %5618 = vmatprep.subr.bf16.mxu0 0
  %5619 = vmatpush1.bf16.msra.mxu0 0
  %5620 = vmatprep.subr.bf16.mxu0 0
  %5621 = vmatpush1.bf16.msra.mxu0 0
  %5622 = vmatprep.subr.bf16.mxu0 0
  %5623 = vmatpush1.bf16.msra.mxu0 0
  %5624 = vmatprep.subr.bf16.mxu0 0
  %5625 = vmatpush1.bf16.msra.mxu0 0
  %5626 = vmatprep.subr.bf16.mxu0 0
  %5627 = vmatpush1.bf16.msra.mxu0 %v3483
  %5628 = vmatprep.subr.bf16.mxu0 0
  %5629 = vmatpush1.bf16.msra.mxu0 %v3482
  %5630 = vmatprep.subr.bf16.mxu0 0
  %5631 = vmatpush2.bf16.msra.mxu0 0
  %5632 = vmatprep.subr.bf16.mxu0 0
  %5633 = vmatpush2.bf16.msra.mxu0 0
  %5634 = vmatprep.subr.bf16.mxu0 0
  %5635 = vmatpush2.bf16.msra.mxu0 0
  %5636 = vmatprep.subr.bf16.mxu0 0
  %5637 = vmatpush2.bf16.msra.mxu0 0
  %5638 = vmatprep.subr.bf16.mxu0 0
  %5639 = vmatpush2.bf16.msra.mxu0 0
  %5640 = vmatprep.subr.bf16.mxu0 0
  %5641 = vmatpush2.bf16.msra.mxu0 0
  %5642 = vmatprep.subr.bf16.mxu0 0
  %5643 = vmatpush2.bf16.msra.mxu0 0
  %5644 = vmatprep.subr.bf16.mxu0 0
  %5645 = vmatpush2.bf16.msra.mxu0 0
  %5646 = vmatprep.mubr.bf16.mxu0 0
  %5647 = vmatmul.mubr.bf16.gmra.mxu0 %v5612
  %v5648 = vpop.f32.mrf.mxu0
  %v5649 = vadd.f32 0.0, %v5648
  %v5650 = vpop.f32.mrf.mxu0
  %v5651 = vpop.f32.mrf.mxu0
  %v5652 = vpop.f32.mrf.mxu0
  %5653 = vdwg.mxu0
  %v5654 = vpack.c.bf16 %v5649, %v5649
  %s5655 = scalar_lea.vmem %s9, 896
  %v5656 = vld [vmem:[%s5655] sm:$0xf]
  %v5657 = vld [vmem:[%s5655 + $0x4] sm:$0xf]
  %v5658 = vld [vmem:[%s5655 + $0x8] sm:$0xf]
  %v5659 = vld [vmem:[%s5655 + $0xc] sm:$0xf]
  %v5660 = vld [vmem:[%s5655 + $0x10] sm:$0xf]
  %v5661 = vld [vmem:[%s5655 + $0x14] sm:$0xf]
  %v5662 = vld [vmem:[%s5655 + $0x18] sm:$0xf]
  %v5663 = vld [vmem:[%s5655 + $0x1c] sm:$0xf]
  %v5664 = vld [vmem:[%s5655 + $0x20] sm:$0xf]
  %v5665 = vld [vmem:[%s5655 + $0x24] sm:$0xf]
  %v5666 = vld [vmem:[%s5655 + $0x28] sm:$0xf]
  %v5667 = vld [vmem:[%s5655 + $0x2c] sm:$0xf]
  %v5668 = vld [vmem:[%s5655 + $0x30] sm:$0xf]
  %v5669 = vld [vmem:[%s5655 + $0x34] sm:$0xf]
  %v5670 = vld [vmem:[%s5655 + $0x38] sm:$0xf]
  %v5671 = vld [vmem:[%s5655 + $0x3c] sm:$0xf]
  %v5688 = vunpack.c.l.b16 %v5656
  %v5689 = vunpack.c.l.b16 %v5657
  %v5690 = vunpack.c.l.b16 %v5658
  %v5691 = vunpack.c.l.b16 %v5659
  %v5692 = vunpack.c.l.b16 %v5660
  %v5693 = vunpack.c.l.b16 %v5661
  %v5694 = vunpack.c.l.b16 %v5662
  %v5695 = vunpack.c.l.b16 %v5663
  %v5696 = vunpack.c.l.b16 %v5664
  %v5697 = vunpack.c.l.b16 %v5665
  %v5698 = vunpack.c.l.b16 %v5666
  %v5699 = vunpack.c.l.b16 %v5667
  %v5700 = vunpack.c.l.b16 %v5668
  %v5701 = vunpack.c.l.b16 %v5669
  %v5702 = vunpack.c.l.b16 %v5670
  %v5703 = vunpack.c.l.b16 %v5671
  %v5704 = vpack.c.b16 %v5689, %v5688
  %v5705 = vpack.c.b16 %v5691, %v5690
  %v5706 = vpack.c.b16 %v5693, %v5692
  %v5707 = vpack.c.b16 %v5695, %v5694
  %v5708 = vpack.c.b16 %v5697, %v5696
  %v5709 = vpack.c.b16 %v5699, %v5698
  %v5710 = vpack.c.b16 %v5701, %v5700
  %v5711 = vpack.c.b16 %v5703, %v5702
  %5720 = vmatprep.subr.bf16.mxu0 0
  %5721 = vmatpush1.bf16.msra.mxu0 %v5711
  %5722 = vmatprep.subr.bf16.mxu0 0
  %5723 = vmatpush1.bf16.msra.mxu0 %v5710
  %5724 = vmatprep.subr.bf16.mxu0 0
  %5725 = vmatpush1.bf16.msra.mxu0 %v5709
  %5726 = vmatprep.subr.bf16.mxu0 0
  %5727 = vmatpush1.bf16.msra.mxu0 %v5708
  %5728 = vmatprep.subr.bf16.mxu0 0
  %5729 = vmatpush1.bf16.msra.mxu0 %v5707
  %5730 = vmatprep.subr.bf16.mxu0 0
  %5731 = vmatpush1.bf16.msra.mxu0 %v5706
  %5732 = vmatprep.subr.bf16.mxu0 0
  %5733 = vmatpush1.bf16.msra.mxu0 %v5705
  %5734 = vmatprep.subr.bf16.mxu0 0
  %5735 = vmatpush1.bf16.msra.mxu0 %v5704
  %5736 = vmatprep.subr.bf16.mxu0 0
  %5737 = vmatpush2.bf16.msra.mxu0 0
  %5738 = vmatprep.subr.bf16.mxu0 0
  %5739 = vmatpush2.bf16.msra.mxu0 0
  %5740 = vmatprep.subr.bf16.mxu0 0
  %5741 = vmatpush2.bf16.msra.mxu0 0
  %5742 = vmatprep.subr.bf16.mxu0 0
  %5743 = vmatpush2.bf16.msra.mxu0 0
  %5744 = vmatprep.subr.bf16.mxu0 0
  %5745 = vmatpush2.bf16.msra.mxu0 0
  %5746 = vmatprep.subr.bf16.mxu0 0
  %5747 = vmatpush2.bf16.msra.mxu0 0
  %5748 = vmatprep.subr.bf16.mxu0 0
  %5749 = vmatpush2.bf16.msra.mxu0 0
  %5750 = vmatprep.subr.bf16.mxu0 0
  %5751 = vmatpush2.bf16.msra.mxu0 0
  %5752 = vmatprep.mubr.bf16.mxu0 0
  %5753 = vmatmul.mubr.bf16.gmra.mxu0 %v5654
  %v5754 = vpop.f32.mrf.mxu0
  %v5755 = vadd.f32 0.0, %v5754
  %v5756 = vpop.f32.mrf.mxu0
  %v5757 = vpop.f32.mrf.mxu0
  %v5758 = vpop.f32.mrf.mxu0
  %5759 = vdwg.mxu0
  %v5760 = vadd.f32 %v5608, %v5755
  %s5761 = scalar_lea.vmem %s8, 60
  %v5762 = vld [vmem:[%s5761] sm:$0xf]
  %v5764 = vsel %vm3485, %v5762, 0
  %5766 = vmatprep.subr.bf16.mxu0 0
  %5767 = vmatpush1.bf16.msra.mxu0 0
  %5768 = vmatprep.subr.bf16.mxu0 0
  %5769 = vmatpush1.bf16.msra.mxu0 0
  %5770 = vmatprep.subr.bf16.mxu0 0
  %5771 = vmatpush1.bf16.msra.mxu0 0
  %5772 = vmatprep.subr.bf16.mxu0 0
  %5773 = vmatpush1.bf16.msra.mxu0 0
  %5774 = vmatprep.subr.bf16.mxu0 0
  %5775 = vmatpush1.bf16.msra.mxu0 0
  %5776 = vmatprep.subr.bf16.mxu0 0
  %5777 = vmatpush1.bf16.msra.mxu0 0
  %5778 = vmatprep.subr.bf16.mxu0 0
  %5779 = vmatpush1.bf16.msra.mxu0 %v3483
  %5780 = vmatprep.subr.bf16.mxu0 0
  %5781 = vmatpush1.bf16.msra.mxu0 %v3482
  %5782 = vmatprep.subr.bf16.mxu0 0
  %5783 = vmatpush2.bf16.msra.mxu0 0
  %5784 = vmatprep.subr.bf16.mxu0 0
  %5785 = vmatpush2.bf16.msra.mxu0 0
  %5786 = vmatprep.subr.bf16.mxu0 0
  %5787 = vmatpush2.bf16.msra.mxu0 0
  %5788 = vmatprep.subr.bf16.mxu0 0
  %5789 = vmatpush2.bf16.msra.mxu0 0
  %5790 = vmatprep.subr.bf16.mxu0 0
  %5791 = vmatpush2.bf16.msra.mxu0 0
  %5792 = vmatprep.subr.bf16.mxu0 0
  %5793 = vmatpush2.bf16.msra.mxu0 0
  %5794 = vmatprep.subr.bf16.mxu0 0
  %5795 = vmatpush2.bf16.msra.mxu0 0
  %5796 = vmatprep.subr.bf16.mxu0 0
  %5797 = vmatpush2.bf16.msra.mxu0 0
  %5798 = vmatprep.mubr.bf16.mxu0 0
  %5799 = vmatmul.mubr.bf16.gmra.mxu0 %v5764
  %v5800 = vpop.f32.mrf.mxu0
  %v5801 = vadd.f32 0.0, %v5800
  %v5802 = vpop.f32.mrf.mxu0
  %v5803 = vpop.f32.mrf.mxu0
  %v5804 = vpop.f32.mrf.mxu0
  %5805 = vdwg.mxu0
  %v5806 = vpack.c.bf16 %v5801, %v5801
  %s5807 = scalar_lea.vmem %s9, 960
  %v5808 = vld [vmem:[%s5807] sm:$0xf]
  %v5809 = vld [vmem:[%s5807 + $0x4] sm:$0xf]
  %v5810 = vld [vmem:[%s5807 + $0x8] sm:$0xf]
  %v5811 = vld [vmem:[%s5807 + $0xc] sm:$0xf]
  %v5812 = vld [vmem:[%s5807 + $0x10] sm:$0xf]
  %v5813 = vld [vmem:[%s5807 + $0x14] sm:$0xf]
  %v5814 = vld [vmem:[%s5807 + $0x18] sm:$0xf]
  %v5815 = vld [vmem:[%s5807 + $0x1c] sm:$0xf]
  %v5816 = vld [vmem:[%s5807 + $0x20] sm:$0xf]
  %v5817 = vld [vmem:[%s5807 + $0x24] sm:$0xf]
  %v5818 = vld [vmem:[%s5807 + $0x28] sm:$0xf]
  %v5819 = vld [vmem:[%s5807 + $0x2c] sm:$0xf]
  %v5820 = vld [vmem:[%s5807 + $0x30] sm:$0xf]
  %v5821 = vld [vmem:[%s5807 + $0x34] sm:$0xf]
  %v5822 = vld [vmem:[%s5807 + $0x38] sm:$0xf]
  %v5823 = vld [vmem:[%s5807 + $0x3c] sm:$0xf]
  %v5840 = vunpack.c.l.b16 %v5808
  %v5841 = vunpack.c.l.b16 %v5809
  %v5842 = vunpack.c.l.b16 %v5810
  %v5843 = vunpack.c.l.b16 %v5811
  %v5844 = vunpack.c.l.b16 %v5812
  %v5845 = vunpack.c.l.b16 %v5813
  %v5846 = vunpack.c.l.b16 %v5814
  %v5847 = vunpack.c.l.b16 %v5815
  %v5848 = vunpack.c.l.b16 %v5816
  %v5849 = vunpack.c.l.b16 %v5817
  %v5850 = vunpack.c.l.b16 %v5818
  %v5851 = vunpack.c.l.b16 %v5819
  %v5852 = vunpack.c.l.b16 %v5820
  %v5853 = vunpack.c.l.b16 %v5821
  %v5854 = vunpack.c.l.b16 %v5822
  %v5855 = vunpack.c.l.b16 %v5823
  %v5856 = vpack.c.b16 %v5841, %v5840
  %v5857 = vpack.c.b16 %v5843, %v5842
  %v5858 = vpack.c.b16 %v5845, %v5844
  %v5859 = vpack.c.b16 %v5847, %v5846
  %v5860 = vpack.c.b16 %v5849, %v5848
  %v5861 = vpack.c.b16 %v5851, %v5850
  %v5862 = vpack.c.b16 %v5853, %v5852
  %v5863 = vpack.c.b16 %v5855, %v5854
  %5872 = vmatprep.subr.bf16.mxu0 0
  %5873 = vmatpush1.bf16.msra.mxu0 %v5863
  %5874 = vmatprep.subr.bf16.mxu0 0
  %5875 = vmatpush1.bf16.msra.mxu0 %v5862
  %5876 = vmatprep.subr.bf16.mxu0 0
  %5877 = vmatpush1.bf16.msra.mxu0 %v5861
  %5878 = vmatprep.subr.bf16.mxu0 0
  %5879 = vmatpush1.bf16.msra.mxu0 %v5860
  %5880 = vmatprep.subr.bf16.mxu0 0
  %5881 = vmatpush1.bf16.msra.mxu0 %v5859
  %5882 = vmatprep.subr.bf16.mxu0 0
  %5883 = vmatpush1.bf16.msra.mxu0 %v5858
  %5884 = vmatprep.subr.bf16.mxu0 0
  %5885 = vmatpush1.bf16.msra.mxu0 %v5857
  %5886 = vmatprep.subr.bf16.mxu0 0
  %5887 = vmatpush1.bf16.msra.mxu0 %v5856
  %5888 = vmatprep.subr.bf16.mxu0 0
  %5889 = vmatpush2.bf16.msra.mxu0 0
  %5890 = vmatprep.subr.bf16.mxu0 0
  %5891 = vmatpush2.bf16.msra.mxu0 0
  %5892 = vmatprep.subr.bf16.mxu0 0
  %5893 = vmatpush2.bf16.msra.mxu0 0
  %5894 = vmatprep.subr.bf16.mxu0 0
  %5895 = vmatpush2.bf16.msra.mxu0 0
  %5896 = vmatprep.subr.bf16.mxu0 0
  %5897 = vmatpush2.bf16.msra.mxu0 0
  %5898 = vmatprep.subr.bf16.mxu0 0
  %5899 = vmatpush2.bf16.msra.mxu0 0
  %5900 = vmatprep.subr.bf16.mxu0 0
  %5901 = vmatpush2.bf16.msra.mxu0 0
  %5902 = vmatprep.subr.bf16.mxu0 0
  %5903 = vmatpush2.bf16.msra.mxu0 0
  %5904 = vmatprep.mubr.bf16.mxu0 0
  %5905 = vmatmul.mubr.bf16.gmra.mxu0 %v5806
  %v5906 = vpop.f32.mrf.mxu0
  %v5907 = vadd.f32 0.0, %v5906
  %v5908 = vpop.f32.mrf.mxu0
  %v5909 = vpop.f32.mrf.mxu0
  %v5910 = vpop.f32.mrf.mxu0
  %5911 = vdwg.mxu0
  %v5912 = vadd.f32 %v5760, %v5907
  %v5913 = vld [vmem:[%s10] sm:$0x1]
  %v5915 = vlaneseq
  %v5916 = vshrl.u32 %v5915, 7
  %v5917 = vsub.s32 0, %v5916
  %v5918 = vrot.slane %v5913, %v5917
  %v5920 = vadd.f32 %v5912, %v5918
  %v5921 = vxor.u32 %v5920, 2147483648
  %v5922 = vmul.f32 %v5921, 1.442695
  %v5923 = vpow.pop %v5922
  %v5924 = vadd.f32 %v5923, 1.0
  %v5925 = vrcp.pop %v5924
  %v5926 = vmul.f32 1.0, %v5925
  %5927 = vst [vmem:[%s11] sm:$0xff] %v5926
  // Predicated region
  $region46: #{psgan_discriminator_forward.1} parent=0 // pred_check
    _
  $region47: #{psgan_discriminator_forward.1} parent=0 // pred_check_branch
    %5929 = sbr.rel (0) target = $region49
  $region48: #{psgan_discriminator_forward.1} parent=0 // pred_region
    _
  $region49: #{psgan_discriminator_forward.1} parent=0 // pred_fallthru
    _
  // Predicated region
  $region50: #{psgan_discriminator_forward.1} parent=0 // pred_check
    _
  $region51: #{psgan_discriminator_forward.1} parent=0 // pred_check_branch
    %5931 = sbr.rel (0) target = $region53
  $region52: #{psgan_discriminator_forward.1} parent=0 // pred_region
    _
  $region53: #{psgan_discriminator_forward.1} parent=0 // pred_fallthru
    _

</llo_original>
